<compile_context>
chip_gen: v5e
topology: v5e:2x2
jax: 0.10.0
libtpu: 0.0.40
codegen_flags: <defaults>
</compile_context>

<pallas_src>
import functools
import math

import jax
import jax.numpy as jnp
from jax.experimental import pallas as pl
from jax.experimental.pallas import tpu as pltpu


def _sinusoids_kernel(x_ref, o_ref, *, n_freq, max_res, log2_div):
    # x_ref: (1, tile_n) squared distances (lane-dense)
    # o_ref: (2*n_freq, tile_n) -> rows [0, F) = sin, rows [F, 2F) = cos
    two_f = 2 * n_freq

    # Row index 0 .. 2F-1 down the sublane axis (trace-time constant shape).
    idx = jax.lax.broadcasted_iota(jnp.int32, (two_f, 1), 0)
    k = jnp.where(idx < n_freq, idx, idx - n_freq)          # frequency index, repeated twice

    # div_factor**k computed exactly as an integer shift (div_factor = 2**log2_div).
    pow_df = jnp.left_shift(jnp.ones_like(k), log2_div * k).astype(jnp.float32)
    freq = (2.0 * math.pi) * pow_df / max_res                # (2F, 1)

    # cos(t) == sin(t + pi/2): single transcendental over the full 2F extent.
    phase = jnp.where(idx < n_freq, jnp.float32(0.0), jnp.float32(math.pi / 2.0))

    x = jnp.sqrt(x_ref[...] + 1e-8)                          # (1, tile_n)
    o_ref[...] = jnp.sin(x * freq + phase)                   # (2F, tile_n), full-width store


def sinusoids_embedding(x, *, max_res=15.0, min_res=15.0 / 2000.0, div_factor=4,
                        tile_n=2048):
    """x: (N,) or (N, 1) float32 -> (N, 2*F) float32, matching the PyTorch module."""
    n_freq = int(math.log(max_res / min_res, div_factor)) + 1
    log2_div = int(round(math.log2(div_factor)))
    assert div_factor == 2 ** log2_div, "div_factor must be a power of two"
    two_f = 2 * n_freq

    x_flat = x.reshape(-1).astype(jnp.float32)
    n = x_flat.shape[0]
    n_blocks = int(pl.cdiv(n, tile_n))
    n_pad = n_blocks * tile_n
    if n_pad != n:
        x_flat = jnp.pad(x_flat, (0, n_pad - n))
    x_row = x_flat.reshape(1, n_pad)          # N on the 128-lane axis

    kernel = functools.partial(
        _sinusoids_kernel, n_freq=n_freq, max_res=float(max_res), log2_div=log2_div)

    out_fm = pl.pallas_call(
        kernel,
        out_shape=jax.ShapeDtypeStruct((two_f, n_pad), jnp.float32),
        grid_spec=pltpu.PrefetchScalarGridSpec(
            num_scalar_prefetch=0,
            grid=(n_blocks,),
            in_specs=[pl.BlockSpec((1, tile_n), lambda i: (0, i))],
            out_specs=pl.BlockSpec((two_f, tile_n), lambda i: (0, i)),
        ),
        compiler_params=pltpu.CompilerParams(
            dimension_semantics=("parallel",),
        ),
    )(x_row)

    # Back to the PyTorch (N, 2F) row-major layout; cheap XLA slice+transpose
    # outside the kernel.
    return out_fm[:, :n].T


def sinusoids_embedding_ref(x, *, max_res=15.0, min_res=15.0 / 2000.0, div_factor=4):
    n_freq = int(math.log(max_res / min_res, div_factor)) + 1
    powers = jnp.asarray([div_factor ** i for i in range(n_freq)], dtype=jnp.float32)
    freqs = 2.0 * math.pi * powers / max_res
    xs = jnp.sqrt(x.reshape(-1, 1).astype(jnp.float32) + 1e-8)
    emb = xs * freqs[None, :]
    return jnp.concatenate([jnp.sin(emb), jnp.cos(emb)], axis=-1)


if __name__ == "__main__":
    key = jax.random.PRNGKey(0)
    # N is deliberately NOT a multiple of tile_n: exercises the padded tail,
    # and n_pad/tile_n = 2 keeps >= 2 parallel grid blocks (v7x megacore).
    N = 2500
    x = jax.random.uniform(key, (N, 1), dtype=jnp.float32, minval=0.0, maxval=2.0)

    out = sinusoids_embedding(x)
    out = jax.block_until_ready(out)

    ref = sinusoids_embedding_ref(x)
    assert out.shape == ref.shape == (N, 12)
    # Tolerance note: the kernel computes cos(t) as sin(t + pi/2); for the
    # largest embedding phases (~600 rad) the extra f32 rounding of "+pi/2"
    # and sin argument-reduction differences vs XLA's cos reach ~1e-4, so
    # compare with a correspondingly loose (but still bug-catching) atol.
    assert jnp.allclose(out, ref, atol=2e-3, rtol=1e-3), "mismatch vs reference"

    print("KERNEL_OK")
</pallas_src>

<mosaic_0001>
module attributes {stable_mosaic.version = 11 : i64} {
  func.func @_sinusoids_kernel(%arg0: i32, %arg1: memref<1x2048xf32, #tpu.memory_space<vmem>>, %arg2: memref<12x2048xf32, #tpu.memory_space<vmem>>) attributes {dimension_semantics = [#tpu.dimension_semantics<parallel>], iteration_bounds = array<i64: 2>, scalar_prefetch = 0 : i64, scratch_operands = 0 : i64, tpu.core_type = #tpu.core_type<tc>, window_params = [{transform_indices = @transform_0, window_bounds = array<i64: 1, 2048>}, {transform_indices = @transform_1, window_bounds = array<i64: 12, 2048>}]} {
    %0 = tpu.iota {dimensions = array<i32: 0>} : vector<12x1xi32>
    %c6_i32 = arith.constant 6 : i32
    %1 = vector.broadcast %c6_i32 : i32 to vector<12x1xi32>
    %2 = arith.cmpi slt, %0, %1 : vector<12x1xi32>
    %c6_i32_0 = arith.constant 6 : i32
    %3 = vector.broadcast %c6_i32_0 : i32 to vector<12x1xi32>
    %4 = arith.subi %0, %3 : vector<12x1xi32>
    %5 = arith.select %2, %0, %4 : vector<12x1xi1>, vector<12x1xi32>
    %c1_i32 = arith.constant 1 : i32
    %6 = vector.broadcast %c1_i32 : i32 to vector<12x1xi32>
    %c2_i32 = arith.constant 2 : i32
    %7 = vector.broadcast %c2_i32 : i32 to vector<12x1xi32>
    %8 = arith.muli %7, %5 : vector<12x1xi32>
    %9 = arith.shli %6, %8 : vector<12x1xi32>
    %10 = arith.sitofp %9 : vector<12x1xi32> to vector<12x1xf32>
    %cst = arith.constant 6.28318548 : f32
    %11 = vector.broadcast %cst : f32 to vector<12x1xf32>
    %12 = arith.mulf %11, %10 : vector<12x1xf32>
    %cst_1 = arith.constant 1.500000e+01 : f32
    %13 = vector.broadcast %cst_1 : f32 to vector<12x1xf32>
    %14 = arith.divf %12, %13 : vector<12x1xf32>
    %c6_i32_2 = arith.constant 6 : i32
    %15 = vector.broadcast %c6_i32_2 : i32 to vector<12x1xi32>
    %16 = arith.cmpi slt, %0, %15 : vector<12x1xi32>
    %cst_3 = arith.constant 0.000000e+00 : f32
    %cst_4 = arith.constant 1.57079637 : f32
    %17 = vector.broadcast %cst_3 : f32 to vector<12x1xf32>
    %18 = vector.broadcast %cst_4 : f32 to vector<12x1xf32>
    %19 = arith.select %16, %17, %18 : vector<12x1xi1>, vector<12x1xf32>
    %c0 = arith.constant 0 : index
    %c0_5 = arith.constant 0 : index
    %20 = vector.load %arg1[%c0, %c0_5] : memref<1x2048xf32, #tpu.memory_space<vmem>>, vector<1x2048xf32>
    %cst_6 = arith.constant 9.99999993E-9 : f32
    %21 = vector.broadcast %cst_6 : f32 to vector<1x2048xf32>
    %22 = arith.addf %20, %21 : vector<1x2048xf32>
    %23 = math.sqrt %22 : vector<1x2048xf32>
    %24 = vector.broadcast %23 : vector<1x2048xf32> to vector<12x2048xf32>
    %25 = vector.broadcast %14 : vector<12x1xf32> to vector<12x2048xf32>
    %26 = arith.mulf %24, %25 : vector<12x2048xf32>
    %27 = vector.broadcast %19 : vector<12x1xf32> to vector<12x2048xf32>
    %28 = arith.addf %26, %27 : vector<12x2048xf32>
    %29 = math.sin %28 : vector<12x2048xf32>
    %c0_7 = arith.constant 0 : index
    %c0_8 = arith.constant 0 : index
    %30 = vector.load %arg2[%c0_7, %c0_8] : memref<12x2048xf32, #tpu.memory_space<vmem>>, vector<12x2048xf32>
    tpu.vector_store %arg2[%c0_7, %c0_8], %29 {strides = array<i32>} : memref<12x2048xf32, #tpu.memory_space<vmem>>, vector<12x2048xf32>,
    return
  }
  func.func @transform_0(%arg0: i32) -> (i32, i32) {
    %c0_i32 = arith.constant 0 : i32
    %c0_i32_0 = arith.constant 0 : i32
    return %c0_i32, %arg0 : i32, i32
  }
  func.func @transform_1(%arg0: i32) -> (i32, i32) {
    %c0_i32 = arith.constant 0 : i32
    %c0_i32_0 = arith.constant 0 : i32
    return %c0_i32, %arg0 : i32, i32
  }
}

</mosaic_0001>

<llo_original>
// kernel: tpu_custom_call.1
$region0: #{tpu_custom_call.1}
  #allocation0 [shape = 'u32[]', space=smem, size = 0x4, offset = 0x4, fixed_abs, tag = 'smem constant byte address 0x4 - core index']
  #allocation1 [shape = 'u32[72,128]{1,0:T(1,128)}', space=vmem, size = 0x9000, scoped, tag = 'internal scratch']
  %s0 = inlined_call_operand.hbm [shape: f32[1,4096], index: 0, kind: input, shape index: {}]
  %s1 = inlined_call_operand.hbm [shape: f32[12,4096], index: 1, kind: output, shape index: {}]
  %s2 = sld [smem:[#allocation0]]
  $region41: #{tpu_custom_call.1} parent=0
    _
  %s4 = ssub.s32 1, %s2
  %s5 = scalar_select 0, %s4, %s2
  $region1: #{tpu_custom_call.1} parent=0
    #allocation2 [shape = 'u8[16384]{0}', space=vmem, size = 0x4000, scoped, tag = 'input window, operand 0']
    #allocation3 [shape = 's32[2]{0}', space=sflag, size = 0x8, scoped, tag = 'scoped memory for tpu_custom_call.1']
    #allocation4 [shape = 's32[2]{0}', space=sflag, size = 0x8, scoped, tag = 'scoped memory for tpu_custom_call.1']
    #allocation5 [shape = 'u8[262144]{0}', space=vmem, size = 0x40000, scoped, tag = 'output window, operand 0']
    %6 = vsyncpa [#allocation3], 0
    %s7 = scalar_lea.sflag [#allocation3], 1
    %8 = vsyncpa %s7, 0
    %9 = vsyncpa [#allocation4], 0
    %s10 = scalar_lea.sflag [#allocation4], 1
    %11 = vsyncpa %s10, 0
    loop: start=0, step=1, limit=4
    $region2: #{tpu_custom_call.1} parent=1 // loop_pre_header
      _
    $region3: #{tpu_custom_call.1} parent=1 // loop_header
      %s13 = sphi 0, %s17
      %p14 = scmp.ge.s32.totalorder %s13, 4
      %s23 = sphi 0, %s25
      %s26 = sphi 0, %s23
      %s27 = sphi 0, %s26
      %s43 = sphi 0, %s27
      %s49 = sphi 0, %s51
      %s52 = sphi 0, %s49
      %s53 = sphi 0, %s52
      %s69 = sphi 0, %s53
    $region4: #{tpu_custom_call.1} parent=1 // loop_header_branch
      %16 = sbr.rel (%p14) target = $region8
    $region5: #{tpu_custom_call.1} parent=1 // loop_body
      %s18 = ssub.s32 %s13, 1
      %s19 = ssub.s32 %s13, 2
      %s20 = sadd.s32 %s13, 1
      %s21 = ssub.s32 %s13, %s20
      %p22 = scmp.eq.s32.totalorder %s21, 0
      %s24 = sadd.s32 %s23, 1
      %s25 = scalar_select %p22, %s23, %s24
      %p28 = pneg %p22
      %p29 = scmp.eq.s32.totalorder %s13, 1
      %p30 = por %p28, %p29
      %p31 = scmp.ne.s32.totalorder %s23, %s26
      %p32 = scmp.eq.s32.totalorder %s13, 0
      %p33 = por %p31, %p32
      %p34 = scmp.ne.s32.totalorder %s23, %s26
      %p35 = scmp.eq.s32.totalorder %s18, 1
      %p36 = por %p34, %p35
      %p37 = scmp.ne.s32.totalorder %s26, %s27
      %p38 = scmp.eq.s32.totalorder %s18, 0
      %p39 = por %p37, %p38
      %p40 = scmp.ne.s32.totalorder %s26, %s27
      %p41 = scmp.eq.s32.totalorder %s19, 1
      %p42 = por %p40, %p41
      %p44 = scmp.ne.s32.totalorder %s27, %s43
      %p45 = scmp.eq.s32.totalorder %s19, 0
      %p46 = por %p44, %p45
      %s47 = ssub.s32 %s13, %s20
      %p48 = scmp.eq.s32.totalorder %s47, 0
      %s50 = sadd.s32 %s49, 1
      %s51 = scalar_select %p48, %s49, %s50
      %p54 = pneg %p48
      %p55 = scmp.eq.s32.totalorder %s13, 1
      %p56 = por %p54, %p55
      %p57 = scmp.ne.s32.totalorder %s49, %s52
      %p58 = scmp.eq.s32.totalorder %s13, 0
      %p59 = por %p57, %p58
      %p60 = scmp.ne.s32.totalorder %s49, %s52
      %p61 = scmp.eq.s32.totalorder %s18, 1
      %p62 = por %p60, %p61
      %p63 = scmp.ne.s32.totalorder %s52, %s53
      %p64 = scmp.eq.s32.totalorder %s18, 0
      %p65 = por %p63, %p64
      %p66 = scmp.ne.s32.totalorder %s52, %s53
      %p67 = scmp.eq.s32.totalorder %s19, 1
      %p68 = por %p66, %p67
      %p70 = scmp.ne.s32.totalorder %s53, %s69
      %p71 = scmp.eq.s32.totalorder %s19, 0
      %p72 = por %p70, %p71
      %p73 = scmp.le.s32.totalorder 1, %s13
      %p74 = scmp.lt.s32.totalorder %s13, 3
      %p75 = pnand %p73, %p74
      %p76 = pneg %p75
      // Predicated region
      $region9: #{tpu_custom_call.1} parent=5 // pred_check
        _
      $region10: #{tpu_custom_call.1} parent=5 // pred_check_branch
        %78 = sbr.rel (%p75) target = $region12
      $region11: #{tpu_custom_call.1} parent=5 // pred_region
        %s79 = ssub.s32 %s13, 1
      $region12: #{tpu_custom_call.1} parent=5 // pred_fallthru
        _
      %p80 = scmp.lt.s32.totalorder %s13, 2
      // Predicated region
      $region13: #{tpu_custom_call.1} parent=5 // pred_check
        %p81 = pneg %p80
      $region14: #{tpu_custom_call.1} parent=5 // pred_check_branch
        %83 = sbr.rel (%p81) target = $region16
      $region15: #{tpu_custom_call.1} parent=5 // pred_region
        // Predicated region
        $region17: #{tpu_custom_call.1} parent=15 // pred_check
          %p84 = pneg %p33
        $region18: #{tpu_custom_call.1} parent=15 // pred_check_branch
          %86 = sbr.rel (%p84) target = $region20
        $region19: #{tpu_custom_call.1} parent=15 // pred_region
          %s87 = sand.u32 %s23, 1
          %s88 = scalar_lea.sflag [#allocation3], %s87
          %s89 = sand.u32 %s23, 1
          %s90 = smul.addr %s89, 16
          %s91 = scalar_lea.vmem [#allocation2], %s90
          %s92 = smul.u32 16, %s13
          %94 = vsyncadd %s88, 0
          %s95 = scalar_lea.hbm %s0, %s92
          %s97 = sshll.u32 %s95, 4
          %s98 = int_to_ptr.hbm [resolvable:$true] %s97
          %s99 = sshll.u32 %s91, 4
          %s100 = int_to_ptr.vmem [resolvable:$true] %s99
          %102 = dma.hbm_to_vmem [thread:$0]  %s98, 256, %s100, %s88
        $region20: #{tpu_custom_call.1} parent=15 // pred_fallthru
          _
      $region16: #{tpu_custom_call.1} parent=5 // pred_fallthru
        _
      %p103 = scmp.le.s32.totalorder 1, %s13
      %p104 = scmp.lt.s32.totalorder %s13, 3
      %p105 = pnand %p103, %p104
      %p106 = pneg %p105
      // Predicated region
      $region21: #{tpu_custom_call.1} parent=5 // pred_check
        _
      $region22: #{tpu_custom_call.1} parent=5 // pred_check_branch
        %108 = sbr.rel (%p105) target = $region24
      $region23: #{tpu_custom_call.1} parent=5 // pred_region
        %s109 = ssub.s32 %s13, 1
        %s110 = sand.u32 %s26, 1
        %s111 = scalar_lea.sflag [#allocation3], %s110
        %s112 = sand.u32 %s26, 1
        %s113 = smul.addr %s112, 16
        %s114 = scalar_lea.vmem [#allocation2], %s113
        // Predicated region
        $region25: #{tpu_custom_call.1} parent=23 // pred_check
          %p115 = pneg %p39
        $region26: #{tpu_custom_call.1} parent=23 // pred_check_branch
          %117 = sbr.rel (%p115) target = $region28
        $region27: #{tpu_custom_call.1} parent=23 // pred_region
          %119 = dma.done %s111, 256
        $region28: #{tpu_custom_call.1} parent=23 // pred_fallthru
          _
        %s120 = sand.u32 %s26, 1
        %s121 = scalar_lea.sflag [#allocation3], %s120
        %s122 = sand.u32 %s26, 1
        %s123 = smul.addr %s122, 16
        %s124 = scalar_lea.vmem [#allocation2], %s123
        %p125 = pneg %p39
        %p126 = pneg %p36
        %p127 = pneg %p65
        %p128 = pneg %p62
        %s129 = sand.u32 %s52, 1
        %s130 = scalar_lea.sflag [#allocation4], %s129
        %s131 = sand.u32 %s52, 1
        %s132 = smul.addr %s131, 256
        %s133 = scalar_lea.vmem [#allocation5], %s132
        %s134 = smul.u32 16, %s18
        %s135 = smul.u32 16, %s18
        %v136 = vlaneseq
        %v137 = vshrl.u32 %v136, 7
        %v138 = vadd.s32 %v137, 8
        %vm139 = vcmp.lt.s32.totalorder %v137, 6
        %vm140 = vcmp.lt.s32.totalorder %v138, 6
        %v141 = vsub.s32 %v137, 6
        %v142 = vsub.s32 %v138, 6
        %v143 = vsel %vm139, %v137, %v141
        %v144 = vsel %vm140, %v138, %v142
        %v145 = vmul.u32 %v143, 2
        %v146 = vmul.u32 %v144, 2
        %v147 = vshll.u32 1, %v145
        %v148 = vshll.u32 1, %v146
        %v149 = vcvt.s32.f32 %v147
        %v150 = vcvt.s32.f32 %v148
        %v151 = vmul.f32 %v149, 6.2831855
        %v152 = vmul.f32 %v150, 6.2831855
        %v153 = vrcp.pop 15.0
        %v154 = vmul.f32 15.0, %v153
        %v155 = vsub.f32 1.0, %v154
        %v156 = vmul.f32 %v153, %v155
        %v157 = vadd.f32 %v153, %v156
        %vm158 = vweird.f32 %v153
        %v159 = vsel %vm158, %v153, %v157
        %v160 = vmul.f32 %v151, %v159
        %v161 = vmul.f32 %v152, %v159
        %v162 = vsel %vm139, 0.0, 1.5707964
        %v163 = vsel %vm140, 0.0, 1.5707964
        %v164 = vld [vmem:[%s114] sm:$0xff]
        %v165 = vld [vmem:[%s114 + $0x8] sm:$0xff]
        %v166 = vadd.f32 %v164, 1e-08
        %v167 = vadd.f32 %v165, 1e-08
        %v168 = vrsqrt.pop %v166
        %v169 = vmul.f32 %v168, %v166
        %v170 = vmul.f32 %v169, %v168
        %v171 = vmul.f32 0.5, %v170
        %v172 = vsub.f32 1.5, %v171
        %v173 = vmul.f32 %v168, %v172
        %v174 = vmul.f32 %v166, %v173
        %vm175 = vcmp.eq.f32.partialorder %v166, inf
        %v176 = vsel %vm175, %v166, %v174
        %vm177 = vcmp.eq.f32.partialorder %v166, 0.0
        %v178 = vand.u32 %v166, 2147483648
        %v179 = vsel %vm177, %v178, %v176
        %v180 = vrsqrt.pop %v167
        %v181 = vmul.f32 %v180, %v167
        %v182 = vmul.f32 %v181, %v180
        %v183 = vmul.f32 0.5, %v182
        %v184 = vsub.f32 1.5, %v183
        %v185 = vmul.f32 %v180, %v184
        %v186 = vmul.f32 %v167, %v185
        %vm187 = vcmp.eq.f32.partialorder %v167, inf
        %v188 = vsel %vm187, %v167, %v186
        %vm189 = vcmp.eq.f32.partialorder %v167, 0.0
        %v190 = vand.u32 %v167, 2147483648
        %v191 = vsel %vm189, %v190, %v188
        %v194 = vperm.slane %v179, 0
        %v195 = vperm.slane %v179, 1
        %v196 = vperm.slane %v179, 2
        %v197 = vperm.slane %v179, 3
        %v198 = vperm.slane %v179, 4
        %v199 = vperm.slane %v179, 5
        %v200 = vperm.slane %v179, 6
        %v201 = vperm.slane %v179, 7
        %v202 = vperm.slane %v191, 0
        %v203 = vperm.slane %v191, 1
        %v204 = vperm.slane %v191, 2
        %v205 = vperm.slane %v191, 3
        %v206 = vperm.slane %v191, 4
        %v207 = vperm.slane %v191, 5
        %v208 = vperm.slane %v191, 6
        %v209 = vperm.slane %v191, 7
        %v226 = vmul.f32 %v194, %v160
        %v227 = vmul.f32 %v195, %v160
        %v228 = vmul.f32 %v196, %v160
        %v229 = vmul.f32 %v197, %v160
        %v230 = vmul.f32 %v198, %v160
        %v231 = vmul.f32 %v199, %v160
        %v232 = vmul.f32 %v200, %v160
        %v233 = vmul.f32 %v201, %v160
        %v234 = vmul.f32 %v202, %v160
        %v235 = vmul.f32 %v203, %v160
        %v236 = vmul.f32 %v204, %v160
        %v237 = vmul.f32 %v205, %v160
        %v238 = vmul.f32 %v206, %v160
        %v239 = vmul.f32 %v207, %v160
        %v240 = vmul.f32 %v208, %v160
        %v241 = vmul.f32 %v209, %v160
        %v242 = vmul.f32 %v194, %v161
        %v243 = vmul.f32 %v195, %v161
        %v244 = vmul.f32 %v196, %v161
        %v245 = vmul.f32 %v197, %v161
        %v246 = vmul.f32 %v198, %v161
        %v247 = vmul.f32 %v199, %v161
        %v248 = vmul.f32 %v200, %v161
        %v249 = vmul.f32 %v201, %v161
        %v250 = vmul.f32 %v202, %v161
        %v251 = vmul.f32 %v203, %v161
        %v252 = vmul.f32 %v204, %v161
        %v253 = vmul.f32 %v205, %v161
        %v254 = vmul.f32 %v206, %v161
        %v255 = vmul.f32 %v207, %v161
        %v256 = vmul.f32 %v208, %v161
        %v257 = vmul.f32 %v209, %v161
        %v258 = vadd.f32 %v226, %v162
        %v259 = vadd.f32 %v227, %v162
        %v260 = vadd.f32 %v228, %v162
        %v261 = vadd.f32 %v229, %v162
        %v262 = vadd.f32 %v230, %v162
        %v263 = vadd.f32 %v231, %v162
        %v264 = vadd.f32 %v232, %v162
        %v265 = vadd.f32 %v233, %v162
        %v266 = vadd.f32 %v234, %v162
        %v267 = vadd.f32 %v235, %v162
        %v268 = vadd.f32 %v236, %v162
        %v269 = vadd.f32 %v237, %v162
        %v270 = vadd.f32 %v238, %v162
        %v271 = vadd.f32 %v239, %v162
        %v272 = vadd.f32 %v240, %v162
        %v273 = vadd.f32 %v241, %v162
        %v274 = vadd.f32 %v242, %v163
        %v275 = vadd.f32 %v243, %v163
        %v276 = vadd.f32 %v244, %v163
        %v277 = vadd.f32 %v245, %v163
        %v278 = vadd.f32 %v246, %v163
        %v279 = vadd.f32 %v247, %v163
        %v280 = vadd.f32 %v248, %v163
        %v281 = vadd.f32 %v249, %v163
        %v282 = vadd.f32 %v250, %v163
        %v283 = vadd.f32 %v251, %v163
        %v284 = vadd.f32 %v252, %v163
        %v285 = vadd.f32 %v253, %v163
        %v286 = vadd.f32 %v254, %v163
        %v287 = vadd.f32 %v255, %v163
        %v288 = vadd.f32 %v256, %v163
        %v289 = vadd.f32 %v257, %v163
        %v290 = vand.u32 2147483647, %v258
        %vm291 = vcmp.le.f32.partialorder %v290, 0.7853982
        %vm292 = vcmp.lt.s32.totalorder %v258, 0
        %v293 = vand.u32 %v258, 2139095040
        %v294 = vshrl.u32 %v293, 23
        %v295 = vsub.s32 %v294, 127
        %v296 = vand.u32 2147483647, %v258
        %v297 = vand.u32 %v296, 8388607
        %v298 = vor.u32 %v297, 8388608
        %v299 = vsub.s32 0, %v298
        %v300 = vadd.s32 %v295, 1
        %vm301 = vcmp.gt.s32.totalorder %v300, 0
        %v302 = vsel %vm301, %v300, 0
        %v303 = vshrl.u32 %v302, 5
        %v304 = vand.u32 %v302, 31
        %v305 = vsub.s32 32, %v304
        %v306 = vshrl.u32 683565275, %v305
        %v307 = vshll.u32 683565275, %v304
        %v308 = vshrl.u32 2475754826, %v305
        %v309 = vor.u32 %v307, %v308
        %v310 = vshll.u32 2475754826, %v304
        %v311 = vshrl.u32 2131351028, %v305
        %v312 = vor.u32 %v310, %v311
        %v313 = vshll.u32 2131351028, %v304
        %v314 = vshrl.u32 2102212464, %v305
        %v315 = vor.u32 %v313, %v314
        %v316 = vshll.u32 2102212464, %v304
        %v317 = vshrl.u32 920167782, %v305
        %v318 = vor.u32 %v316, %v317
        %v319 = vshll.u32 920167782, %v304
        %v320 = vshrl.u32 1326507024, %v305
        %v321 = vor.u32 %v319, %v320
        %vm322 = vcmp.lt.s32.totalorder %v303, 1
        %vm323 = vcmp.lt.s32.totalorder %v303, 2
        %vm324 = vcmp.lt.s32.totalorder %v303, 3
        %vm325 = vcmp.lt.s32.totalorder %v303, 4
        %v326 = vsel %vm322, %v306, %v309
        %v327 = vsel %vm325, %v315, 2102212464
        %v328 = vsel %vm324, %v312, %v327
        %v329 = vsel %vm323, %v326, %v328
        %v330 = vsel %vm322, %v309, %v312
        %v331 = vsel %vm325, %v318, 920167782
        %v332 = vsel %vm324, %v315, %v331
        %v333 = vsel %vm323, %v330, %v332
        %v334 = vsel %vm322, %v312, %v315
        %v335 = vsel %vm325, %v321, 1326507024
        %v336 = vsel %vm324, %v318, %v335
        %v337 = vsel %vm323, %v334, %v336
        %v338 = vshll.u32 %v298, 8
        %v339 = vand.u32 %v338, 65535
        %v340 = vshrl.u32 %v338, 16
        %v341 = vand.u32 %v337, 65535
        %v342 = vshrl.u32 %v337, 16
        %v343 = vmul.u32 %v339, %v341
        %v344 = vmul.u32 %v339, %v342
        %v345 = vmul.u32 %v340, %v341
        %v346 = vmul.u32 %v340, %v342
        %v347 = vshll.u32 %v344, 16
        %v348 = vshrl.u32 %v344, 16
        %v349 = vshll.u32 %v345, 16
        %v350 = vshrl.u32 %v345, 16
        %vm351 = vc.u32 %v343, %v347
        %v352 = vsel %vm351, 1, 0
        %v353 = vadd.s32 %v343, %v347
        %v354 = vadd.s32 %v346, %v352
        %vm355 = vc.u32 %v353, %v349
        %v356 = vsel %vm355, 1, 0
        %v357 = vadd.s32 %v353, %v349
        %v358 = vadd.s32 %v354, %v356
        %v359 = vadd.s32 %v358, %v348
        %v360 = vadd.s32 %v359, %v350
        %v361 = vand.u32 %v338, 65535
        %v362 = vshrl.u32 %v338, 16
        %v363 = vand.u32 %v333, 65535
        %v364 = vshrl.u32 %v333, 16
        %v365 = vmul.u32 %v361, %v363
        %v366 = vmul.u32 %v361, %v364
        %v367 = vmul.u32 %v362, %v363
        %v368 = vmul.u32 %v362, %v364
        %v369 = vshll.u32 %v366, 16
        %v370 = vshrl.u32 %v366, 16
        %v371 = vshll.u32 %v367, 16
        %v372 = vshrl.u32 %v367, 16
        %vm373 = vc.u32 %v365, %v369
        %v374 = vsel %vm373, 1, 0
        %v375 = vadd.s32 %v365, %v369
        %v376 = vadd.s32 %v368, %v374
        %vm377 = vc.u32 %v375, %v371
        %v378 = vsel %vm377, 1, 0
        %v379 = vadd.s32 %v375, %v371
        %v380 = vadd.s32 %v376, %v378
        %v381 = vadd.s32 %v380, %v370
        %v382 = vadd.s32 %v381, %v372
        %v383 = vmul.u32 %v338, %v329
        %v384 = vadd.s32 %v360, %v379
        %vm385 = vc.u32 %v360, %v379
        %v386 = vadd.s32 %v382, 1
        %v387 = vsel %vm385, %v386, %v382
        %v388 = vadd.s32 %v383, %v387
        %v389 = vadd.s32 %v388, 536870912
        %v390 = vshrl.u32 %v389, 30
        %v391 = vshll.u32 %v390, 30
        %v392 = vsub.s32 %v388, %v391
        %vm393 = vcmp.lt.s32.totalorder %v392, 0
        %v394 = vsub.s32 0, %v392
        %v395 = vsel %vm393, %v394, %v392
        %v396 = vclz %v395
        %v397 = vsub.s32 %v396, 2
        %vm398 = vcmp.gt.s32.totalorder 0, %v397
        %v399 = vsel %vm398, 0, %v397
        %v400 = vsub.s32 32, %v399
        %v401 = vshll.u32 %v392, %v399
        %v402 = vshrl.u32 %v384, %v400
        %v403 = vor.u32 %v401, %v402
        %v404 = vsub.s32 4294967266, %v399
        %v405 = vadd.s32 %v404, 127
        %v406 = vshll.u32 %v405, 23
        %v407 = vor.u32 4788187, %v406
        %v408 = vand.u32 2147483647, %v407
        %v410 = vcvt.s32.f32 %v403
        %v411 = vmul.f32 %v410, %v408
        %v412 = vxor.u32 %v411, 2147483648
        %v413 = vsel %vm292, %v412, %v411
        %v414 = vsub.s32 4, %v390
        %v415 = vsel %vm292, %v414, %v390
        %v416 = vsel %vm291, %v258, %v413
        %v417 = vsel %vm291, 0, %v415
        %v418 = vmul.f32 %v416, %v416
        %v419 = vmul.f32 %v418, -0.001358992
        %v420 = vadd.f32 %v419, 0.041655596
        %v421 = vmul.f32 %v418, %v420
        %v422 = vadd.f32 %v421, -0.4999988
        %v423 = vmul.f32 %v418, %v422
        %v424 = vadd.f32 1.0, %v423
        %v425 = vmul.f32 %v416, %v416
        %v426 = vmul.f32 %v425, -0.00019511016
        %v427 = vadd.f32 %v426, 0.008332121
        %v428 = vmul.f32 %v425, %v427
        %v429 = vadd.f32 %v428, -0.16666654
        %v430 = vmul.f32 %v425, %v429
        %v431 = vadd.f32 %v430, 1.0
        %v432 = vmul.f32 %v431, %v416
        %vm433 = vweird.f32 %v258
        %v434 = vadd.s32 %v417, 3
        %v435 = vand.u32 %v434, 3
        %vm436 = vcmp.lt.s32.totalorder %v435, 2
        %vm437 = vcmp.eq.s32.totalorder %v435, 0
        %v438 = vxor.u32 %v432, 2147483648
        %v439 = vsel %vm437, %v424, %v438
        %vm440 = vcmp.eq.s32.totalorder %v435, 2
        %v441 = vxor.u32 %v424, 2147483648
        %v442 = vsel %vm440, %v441, %v432
        %v443 = vsel %vm436, %v439, %v442
        %v444 = vsel %vm433, nan, %v443
        %v445 = vand.u32 2147483647, %v259
        %vm446 = vcmp.le.f32.partialorder %v445, 0.7853982
        %vm447 = vcmp.lt.s32.totalorder %v259, 0
        %v448 = vand.u32 %v259, 2139095040
        %v449 = vshrl.u32 %v448, 23
        %v450 = vsub.s32 %v449, 127
        %v451 = vand.u32 2147483647, %v259
        %v452 = vand.u32 %v451, 8388607
        %v453 = vor.u32 %v452, 8388608
        %v454 = vsub.s32 0, %v453
        %v455 = vadd.s32 %v450, 1
        %vm456 = vcmp.gt.s32.totalorder %v455, 0
        %v457 = vsel %vm456, %v455, 0
        %v458 = vshrl.u32 %v457, 5
        %v459 = vand.u32 %v457, 31
        %v460 = vsub.s32 32, %v459
        %v461 = vshrl.u32 683565275, %v460
        %v462 = vshll.u32 683565275, %v459
        %v463 = vshrl.u32 2475754826, %v460
        %v464 = vor.u32 %v462, %v463
        %v465 = vshll.u32 2475754826, %v459
        %v466 = vshrl.u32 2131351028, %v460
        %v467 = vor.u32 %v465, %v466
        %v468 = vshll.u32 2131351028, %v459
        %v469 = vshrl.u32 2102212464, %v460
        %v470 = vor.u32 %v468, %v469
        %v471 = vshll.u32 2102212464, %v459
        %v472 = vshrl.u32 920167782, %v460
        %v473 = vor.u32 %v471, %v472
        %v474 = vshll.u32 920167782, %v459
        %v475 = vshrl.u32 1326507024, %v460
        %v476 = vor.u32 %v474, %v475
        %vm477 = vcmp.lt.s32.totalorder %v458, 1
        %vm478 = vcmp.lt.s32.totalorder %v458, 2
        %vm479 = vcmp.lt.s32.totalorder %v458, 3
        %vm480 = vcmp.lt.s32.totalorder %v458, 4
        %v481 = vsel %vm477, %v461, %v464
        %v482 = vsel %vm480, %v470, 2102212464
        %v483 = vsel %vm479, %v467, %v482
        %v484 = vsel %vm478, %v481, %v483
        %v485 = vsel %vm477, %v464, %v467
        %v486 = vsel %vm480, %v473, 920167782
        %v487 = vsel %vm479, %v470, %v486
        %v488 = vsel %vm478, %v485, %v487
        %v489 = vsel %vm477, %v467, %v470
        %v490 = vsel %vm480, %v476, 1326507024
        %v491 = vsel %vm479, %v473, %v490
        %v492 = vsel %vm478, %v489, %v491
        %v493 = vshll.u32 %v453, 8
        %v494 = vand.u32 %v493, 65535
        %v495 = vshrl.u32 %v493, 16
        %v496 = vand.u32 %v492, 65535
        %v497 = vshrl.u32 %v492, 16
        %v498 = vmul.u32 %v494, %v496
        %v499 = vmul.u32 %v494, %v497
        %v500 = vmul.u32 %v495, %v496
        %v501 = vmul.u32 %v495, %v497
        %v502 = vshll.u32 %v499, 16
        %v503 = vshrl.u32 %v499, 16
        %v504 = vshll.u32 %v500, 16
        %v505 = vshrl.u32 %v500, 16
        %vm506 = vc.u32 %v498, %v502
        %v507 = vsel %vm506, 1, 0
        %v508 = vadd.s32 %v498, %v502
        %v509 = vadd.s32 %v501, %v507
        %vm510 = vc.u32 %v508, %v504
        %v511 = vsel %vm510, 1, 0
        %v512 = vadd.s32 %v508, %v504
        %v513 = vadd.s32 %v509, %v511
        %v514 = vadd.s32 %v513, %v503
        %v515 = vadd.s32 %v514, %v505
        %v516 = vand.u32 %v493, 65535
        %v517 = vshrl.u32 %v493, 16
        %v518 = vand.u32 %v488, 65535
        %v519 = vshrl.u32 %v488, 16
        %v520 = vmul.u32 %v516, %v518
        %v521 = vmul.u32 %v516, %v519
        %v522 = vmul.u32 %v517, %v518
        %v523 = vmul.u32 %v517, %v519
        %v524 = vshll.u32 %v521, 16
        %v525 = vshrl.u32 %v521, 16
        %v526 = vshll.u32 %v522, 16
        %v527 = vshrl.u32 %v522, 16
        %vm528 = vc.u32 %v520, %v524
        %v529 = vsel %vm528, 1, 0
        %v530 = vadd.s32 %v520, %v524
        %v531 = vadd.s32 %v523, %v529
        %vm532 = vc.u32 %v530, %v526
        %v533 = vsel %vm532, 1, 0
        %v534 = vadd.s32 %v530, %v526
        %v535 = vadd.s32 %v531, %v533
        %v536 = vadd.s32 %v535, %v525
        %v537 = vadd.s32 %v536, %v527
        %v538 = vmul.u32 %v493, %v484
        %v539 = vadd.s32 %v515, %v534
        %vm540 = vc.u32 %v515, %v534
        %v541 = vadd.s32 %v537, 1
        %v542 = vsel %vm540, %v541, %v537
        %v543 = vadd.s32 %v538, %v542
        %v544 = vadd.s32 %v543, 536870912
        %v545 = vshrl.u32 %v544, 30
        %v546 = vshll.u32 %v545, 30
        %v547 = vsub.s32 %v543, %v546
        %vm548 = vcmp.lt.s32.totalorder %v547, 0
        %v549 = vsub.s32 0, %v547
        %v550 = vsel %vm548, %v549, %v547
        %v551 = vclz %v550
        %v552 = vsub.s32 %v551, 2
        %vm553 = vcmp.gt.s32.totalorder 0, %v552
        %v554 = vsel %vm553, 0, %v552
        %v555 = vsub.s32 32, %v554
        %v556 = vshll.u32 %v547, %v554
        %v557 = vshrl.u32 %v539, %v555
        %v558 = vor.u32 %v556, %v557
        %v559 = vsub.s32 4294967266, %v554
        %v560 = vadd.s32 %v559, 127
        %v561 = vshll.u32 %v560, 23
        %v562 = vor.u32 4788187, %v561
        %v563 = vand.u32 2147483647, %v562
        %v565 = vcvt.s32.f32 %v558
        %v566 = vmul.f32 %v565, %v563
        %v567 = vxor.u32 %v566, 2147483648
        %v568 = vsel %vm447, %v567, %v566
        %v569 = vsub.s32 4, %v545
        %v570 = vsel %vm447, %v569, %v545
        %v571 = vsel %vm446, %v259, %v568
        %v572 = vsel %vm446, 0, %v570
        %v573 = vmul.f32 %v571, %v571
        %v574 = vmul.f32 %v573, -0.001358992
        %v575 = vadd.f32 %v574, 0.041655596
        %v576 = vmul.f32 %v573, %v575
        %v577 = vadd.f32 %v576, -0.4999988
        %v578 = vmul.f32 %v573, %v577
        %v579 = vadd.f32 1.0, %v578
        %v580 = vmul.f32 %v571, %v571
        %v581 = vmul.f32 %v580, -0.00019511016
        %v582 = vadd.f32 %v581, 0.008332121
        %v583 = vmul.f32 %v580, %v582
        %v584 = vadd.f32 %v583, -0.16666654
        %v585 = vmul.f32 %v580, %v584
        %v586 = vadd.f32 %v585, 1.0
        %v587 = vmul.f32 %v586, %v571
        %vm588 = vweird.f32 %v259
        %v589 = vadd.s32 %v572, 3
        %v590 = vand.u32 %v589, 3
        %vm591 = vcmp.lt.s32.totalorder %v590, 2
        %vm592 = vcmp.eq.s32.totalorder %v590, 0
        %v593 = vxor.u32 %v587, 2147483648
        %v594 = vsel %vm592, %v579, %v593
        %vm595 = vcmp.eq.s32.totalorder %v590, 2
        %v596 = vxor.u32 %v579, 2147483648
        %v597 = vsel %vm595, %v596, %v587
        %v598 = vsel %vm591, %v594, %v597
        %v599 = vsel %vm588, nan, %v598
        %v600 = vand.u32 2147483647, %v260
        %vm601 = vcmp.le.f32.partialorder %v600, 0.7853982
        %vm602 = vcmp.lt.s32.totalorder %v260, 0
        %v603 = vand.u32 %v260, 2139095040
        %v604 = vshrl.u32 %v603, 23
        %v605 = vsub.s32 %v604, 127
        %v606 = vand.u32 2147483647, %v260
        %v607 = vand.u32 %v606, 8388607
        %v608 = vor.u32 %v607, 8388608
        %v609 = vsub.s32 0, %v608
        %v610 = vadd.s32 %v605, 1
        %vm611 = vcmp.gt.s32.totalorder %v610, 0
        %v612 = vsel %vm611, %v610, 0
        %v613 = vshrl.u32 %v612, 5
        %v614 = vand.u32 %v612, 31
        %v615 = vsub.s32 32, %v614
        %v616 = vshrl.u32 683565275, %v615
        %v617 = vshll.u32 683565275, %v614
        %v618 = vshrl.u32 2475754826, %v615
        %v619 = vor.u32 %v617, %v618
        %v620 = vshll.u32 2475754826, %v614
        %v621 = vshrl.u32 2131351028, %v615
        %v622 = vor.u32 %v620, %v621
        %v623 = vshll.u32 2131351028, %v614
        %v624 = vshrl.u32 2102212464, %v615
        %v625 = vor.u32 %v623, %v624
        %v626 = vshll.u32 2102212464, %v614
        %v627 = vshrl.u32 920167782, %v615
        %v628 = vor.u32 %v626, %v627
        %v629 = vshll.u32 920167782, %v614
        %v630 = vshrl.u32 1326507024, %v615
        %v631 = vor.u32 %v629, %v630
        %vm632 = vcmp.lt.s32.totalorder %v613, 1
        %vm633 = vcmp.lt.s32.totalorder %v613, 2
        %vm634 = vcmp.lt.s32.totalorder %v613, 3
        %vm635 = vcmp.lt.s32.totalorder %v613, 4
        %v636 = vsel %vm632, %v616, %v619
        %v637 = vsel %vm635, %v625, 2102212464
        %v638 = vsel %vm634, %v622, %v637
        %v639 = vsel %vm633, %v636, %v638
        %v640 = vsel %vm632, %v619, %v622
        %v641 = vsel %vm635, %v628, 920167782
        %v642 = vsel %vm634, %v625, %v641
        %v643 = vsel %vm633, %v640, %v642
        %v644 = vsel %vm632, %v622, %v625
        %v645 = vsel %vm635, %v631, 1326507024
        %v646 = vsel %vm634, %v628, %v645
        %v647 = vsel %vm633, %v644, %v646
        %v648 = vshll.u32 %v608, 8
        %v649 = vand.u32 %v648, 65535
        %v650 = vshrl.u32 %v648, 16
        %v651 = vand.u32 %v647, 65535
        %v652 = vshrl.u32 %v647, 16
        %v653 = vmul.u32 %v649, %v651
        %v654 = vmul.u32 %v649, %v652
        %v655 = vmul.u32 %v650, %v651
        %v656 = vmul.u32 %v650, %v652
        %v657 = vshll.u32 %v654, 16
        %v658 = vshrl.u32 %v654, 16
        %v659 = vshll.u32 %v655, 16
        %v660 = vshrl.u32 %v655, 16
        %vm661 = vc.u32 %v653, %v657
        %v662 = vsel %vm661, 1, 0
        %v663 = vadd.s32 %v653, %v657
        %v664 = vadd.s32 %v656, %v662
        %vm665 = vc.u32 %v663, %v659
        %v666 = vsel %vm665, 1, 0
        %v667 = vadd.s32 %v663, %v659
        %v668 = vadd.s32 %v664, %v666
        %v669 = vadd.s32 %v668, %v658
        %v670 = vadd.s32 %v669, %v660
        %v671 = vand.u32 %v648, 65535
        %v672 = vshrl.u32 %v648, 16
        %v673 = vand.u32 %v643, 65535
        %v674 = vshrl.u32 %v643, 16
        %v675 = vmul.u32 %v671, %v673
        %v676 = vmul.u32 %v671, %v674
        %v677 = vmul.u32 %v672, %v673
        %v678 = vmul.u32 %v672, %v674
        %v679 = vshll.u32 %v676, 16
        %v680 = vshrl.u32 %v676, 16
        %v681 = vshll.u32 %v677, 16
        %v682 = vshrl.u32 %v677, 16
        %vm683 = vc.u32 %v675, %v679
        %v684 = vsel %vm683, 1, 0
        %v685 = vadd.s32 %v675, %v679
        %v686 = vadd.s32 %v678, %v684
        %vm687 = vc.u32 %v685, %v681
        %v688 = vsel %vm687, 1, 0
        %v689 = vadd.s32 %v685, %v681
        %v690 = vadd.s32 %v686, %v688
        %v691 = vadd.s32 %v690, %v680
        %v692 = vadd.s32 %v691, %v682
        %v693 = vmul.u32 %v648, %v639
        %v694 = vadd.s32 %v670, %v689
        %vm695 = vc.u32 %v670, %v689
        %v696 = vadd.s32 %v692, 1
        %v697 = vsel %vm695, %v696, %v692
        %v698 = vadd.s32 %v693, %v697
        %v699 = vadd.s32 %v698, 536870912
        %v700 = vshrl.u32 %v699, 30
        %v701 = vshll.u32 %v700, 30
        %v702 = vsub.s32 %v698, %v701
        %vm703 = vcmp.lt.s32.totalorder %v702, 0
        %v704 = vsub.s32 0, %v702
        %v705 = vsel %vm703, %v704, %v702
        %v706 = vclz %v705
        %v707 = vsub.s32 %v706, 2
        %vm708 = vcmp.gt.s32.totalorder 0, %v707
        %v709 = vsel %vm708, 0, %v707
        %v710 = vsub.s32 32, %v709
        %v711 = vshll.u32 %v702, %v709
        %v712 = vshrl.u32 %v694, %v710
        %v713 = vor.u32 %v711, %v712
        %v714 = vsub.s32 4294967266, %v709
        %v715 = vadd.s32 %v714, 127
        %v716 = vshll.u32 %v715, 23
        %v717 = vor.u32 4788187, %v716
        %v718 = vand.u32 2147483647, %v717
        %v720 = vcvt.s32.f32 %v713
        %v721 = vmul.f32 %v720, %v718
        %v722 = vxor.u32 %v721, 2147483648
        %v723 = vsel %vm602, %v722, %v721
        %v724 = vsub.s32 4, %v700
        %v725 = vsel %vm602, %v724, %v700
        %v726 = vsel %vm601, %v260, %v723
        %v727 = vsel %vm601, 0, %v725
        %v728 = vmul.f32 %v726, %v726
        %v729 = vmul.f32 %v728, -0.001358992
        %v730 = vadd.f32 %v729, 0.041655596
        %v731 = vmul.f32 %v728, %v730
        %v732 = vadd.f32 %v731, -0.4999988
        %v733 = vmul.f32 %v728, %v732
        %v734 = vadd.f32 1.0, %v733
        %v735 = vmul.f32 %v726, %v726
        %v736 = vmul.f32 %v735, -0.00019511016
        %v737 = vadd.f32 %v736, 0.008332121
        %v738 = vmul.f32 %v735, %v737
        %v739 = vadd.f32 %v738, -0.16666654
        %v740 = vmul.f32 %v735, %v739
        %v741 = vadd.f32 %v740, 1.0
        %v742 = vmul.f32 %v741, %v726
        %vm743 = vweird.f32 %v260
        %v744 = vadd.s32 %v727, 3
        %v745 = vand.u32 %v744, 3
        %vm746 = vcmp.lt.s32.totalorder %v745, 2
        %vm747 = vcmp.eq.s32.totalorder %v745, 0
        %v748 = vxor.u32 %v742, 2147483648
        %v749 = vsel %vm747, %v734, %v748
        %vm750 = vcmp.eq.s32.totalorder %v745, 2
        %v751 = vxor.u32 %v734, 2147483648
        %v752 = vsel %vm750, %v751, %v742
        %v753 = vsel %vm746, %v749, %v752
        %v754 = vsel %vm743, nan, %v753
        %v755 = vand.u32 2147483647, %v261
        %vm756 = vcmp.le.f32.partialorder %v755, 0.7853982
        %vm757 = vcmp.lt.s32.totalorder %v261, 0
        %v758 = vand.u32 %v261, 2139095040
        %v759 = vshrl.u32 %v758, 23
        %v760 = vsub.s32 %v759, 127
        %v761 = vand.u32 2147483647, %v261
        %v762 = vand.u32 %v761, 8388607
        %v763 = vor.u32 %v762, 8388608
        %v764 = vsub.s32 0, %v763
        %v765 = vadd.s32 %v760, 1
        %vm766 = vcmp.gt.s32.totalorder %v765, 0
        %v767 = vsel %vm766, %v765, 0
        %v768 = vshrl.u32 %v767, 5
        %v769 = vand.u32 %v767, 31
        %v770 = vsub.s32 32, %v769
        %v771 = vshrl.u32 683565275, %v770
        %v772 = vshll.u32 683565275, %v769
        %v773 = vshrl.u32 2475754826, %v770
        %v774 = vor.u32 %v772, %v773
        %v775 = vshll.u32 2475754826, %v769
        %v776 = vshrl.u32 2131351028, %v770
        %v777 = vor.u32 %v775, %v776
        %v778 = vshll.u32 2131351028, %v769
        %v779 = vshrl.u32 2102212464, %v770
        %v780 = vor.u32 %v778, %v779
        %v781 = vshll.u32 2102212464, %v769
        %v782 = vshrl.u32 920167782, %v770
        %v783 = vor.u32 %v781, %v782
        %v784 = vshll.u32 920167782, %v769
        %v785 = vshrl.u32 1326507024, %v770
        %v786 = vor.u32 %v784, %v785
        %vm787 = vcmp.lt.s32.totalorder %v768, 1
        %vm788 = vcmp.lt.s32.totalorder %v768, 2
        %vm789 = vcmp.lt.s32.totalorder %v768, 3
        %vm790 = vcmp.lt.s32.totalorder %v768, 4
        %v791 = vsel %vm787, %v771, %v774
        %v792 = vsel %vm790, %v780, 2102212464
        %v793 = vsel %vm789, %v777, %v792
        %v794 = vsel %vm788, %v791, %v793
        %v795 = vsel %vm787, %v774, %v777
        %v796 = vsel %vm790, %v783, 920167782
        %v797 = vsel %vm789, %v780, %v796
        %v798 = vsel %vm788, %v795, %v797
        %v799 = vsel %vm787, %v777, %v780
        %v800 = vsel %vm790, %v786, 1326507024
        %v801 = vsel %vm789, %v783, %v800
        %v802 = vsel %vm788, %v799, %v801
        %v803 = vshll.u32 %v763, 8
        %v804 = vand.u32 %v803, 65535
        %v805 = vshrl.u32 %v803, 16
        %v806 = vand.u32 %v802, 65535
        %v807 = vshrl.u32 %v802, 16
        %v808 = vmul.u32 %v804, %v806
        %v809 = vmul.u32 %v804, %v807
        %v810 = vmul.u32 %v805, %v806
        %v811 = vmul.u32 %v805, %v807
        %v812 = vshll.u32 %v809, 16
        %v813 = vshrl.u32 %v809, 16
        %v814 = vshll.u32 %v810, 16
        %v815 = vshrl.u32 %v810, 16
        %vm816 = vc.u32 %v808, %v812
        %v817 = vsel %vm816, 1, 0
        %v818 = vadd.s32 %v808, %v812
        %v819 = vadd.s32 %v811, %v817
        %vm820 = vc.u32 %v818, %v814
        %v821 = vsel %vm820, 1, 0
        %v822 = vadd.s32 %v818, %v814
        %v823 = vadd.s32 %v819, %v821
        %v824 = vadd.s32 %v823, %v813
        %v825 = vadd.s32 %v824, %v815
        %v826 = vand.u32 %v803, 65535
        %v827 = vshrl.u32 %v803, 16
        %v828 = vand.u32 %v798, 65535
        %v829 = vshrl.u32 %v798, 16
        %v830 = vmul.u32 %v826, %v828
        %v831 = vmul.u32 %v826, %v829
        %v832 = vmul.u32 %v827, %v828
        %v833 = vmul.u32 %v827, %v829
        %v834 = vshll.u32 %v831, 16
        %v835 = vshrl.u32 %v831, 16
        %v836 = vshll.u32 %v832, 16
        %v837 = vshrl.u32 %v832, 16
        %vm838 = vc.u32 %v830, %v834
        %v839 = vsel %vm838, 1, 0
        %v840 = vadd.s32 %v830, %v834
        %v841 = vadd.s32 %v833, %v839
        %vm842 = vc.u32 %v840, %v836
        %v843 = vsel %vm842, 1, 0
        %v844 = vadd.s32 %v840, %v836
        %v845 = vadd.s32 %v841, %v843
        %v846 = vadd.s32 %v845, %v835
        %v847 = vadd.s32 %v846, %v837
        %v848 = vmul.u32 %v803, %v794
        %v849 = vadd.s32 %v825, %v844
        %vm850 = vc.u32 %v825, %v844
        %v851 = vadd.s32 %v847, 1
        %v852 = vsel %vm850, %v851, %v847
        %v853 = vadd.s32 %v848, %v852
        %v854 = vadd.s32 %v853, 536870912
        %v855 = vshrl.u32 %v854, 30
        %v856 = vshll.u32 %v855, 30
        %v857 = vsub.s32 %v853, %v856
        %vm858 = vcmp.lt.s32.totalorder %v857, 0
        %v859 = vsub.s32 0, %v857
        %v860 = vsel %vm858, %v859, %v857
        %v861 = vclz %v860
        %v862 = vsub.s32 %v861, 2
        %vm863 = vcmp.gt.s32.totalorder 0, %v862
        %v864 = vsel %vm863, 0, %v862
        %v865 = vsub.s32 32, %v864
        %v866 = vshll.u32 %v857, %v864
        %v867 = vshrl.u32 %v849, %v865
        %v868 = vor.u32 %v866, %v867
        %v869 = vsub.s32 4294967266, %v864
        %v870 = vadd.s32 %v869, 127
        %v871 = vshll.u32 %v870, 23
        %v872 = vor.u32 4788187, %v871
        %v873 = vand.u32 2147483647, %v872
        %v875 = vcvt.s32.f32 %v868
        %v876 = vmul.f32 %v875, %v873
        %v877 = vxor.u32 %v876, 2147483648
        %v878 = vsel %vm757, %v877, %v876
        %v879 = vsub.s32 4, %v855
        %v880 = vsel %vm757, %v879, %v855
        %v881 = vsel %vm756, %v261, %v878
        %v882 = vsel %vm756, 0, %v880
        %v883 = vmul.f32 %v881, %v881
        %v884 = vmul.f32 %v883, -0.001358992
        %v885 = vadd.f32 %v884, 0.041655596
        %v886 = vmul.f32 %v883, %v885
        %v887 = vadd.f32 %v886, -0.4999988
        %v888 = vmul.f32 %v883, %v887
        %v889 = vadd.f32 1.0, %v888
        %v890 = vmul.f32 %v881, %v881
        %v891 = vmul.f32 %v890, -0.00019511016
        %v892 = vadd.f32 %v891, 0.008332121
        %v893 = vmul.f32 %v890, %v892
        %v894 = vadd.f32 %v893, -0.16666654
        %v895 = vmul.f32 %v890, %v894
        %v896 = vadd.f32 %v895, 1.0
        %v897 = vmul.f32 %v896, %v881
        %vm898 = vweird.f32 %v261
        %v899 = vadd.s32 %v882, 3
        %v900 = vand.u32 %v899, 3
        %vm901 = vcmp.lt.s32.totalorder %v900, 2
        %vm902 = vcmp.eq.s32.totalorder %v900, 0
        %v903 = vxor.u32 %v897, 2147483648
        %v904 = vsel %vm902, %v889, %v903
        %vm905 = vcmp.eq.s32.totalorder %v900, 2
        %v906 = vxor.u32 %v889, 2147483648
        %v907 = vsel %vm905, %v906, %v897
        %v908 = vsel %vm901, %v904, %v907
        %v909 = vsel %vm898, nan, %v908
        %v910 = vand.u32 2147483647, %v262
        %vm911 = vcmp.le.f32.partialorder %v910, 0.7853982
        %vm912 = vcmp.lt.s32.totalorder %v262, 0
        %v913 = vand.u32 %v262, 2139095040
        %v914 = vshrl.u32 %v913, 23
        %v915 = vsub.s32 %v914, 127
        %v916 = vand.u32 2147483647, %v262
        %v917 = vand.u32 %v916, 8388607
        %v918 = vor.u32 %v917, 8388608
        %v919 = vsub.s32 0, %v918
        %v920 = vadd.s32 %v915, 1
        %vm921 = vcmp.gt.s32.totalorder %v920, 0
        %v922 = vsel %vm921, %v920, 0
        %v923 = vshrl.u32 %v922, 5
        %v924 = vand.u32 %v922, 31
        %v925 = vsub.s32 32, %v924
        %v926 = vshrl.u32 683565275, %v925
        %v927 = vshll.u32 683565275, %v924
        %v928 = vshrl.u32 2475754826, %v925
        %v929 = vor.u32 %v927, %v928
        %v930 = vshll.u32 2475754826, %v924
        %v931 = vshrl.u32 2131351028, %v925
        %v932 = vor.u32 %v930, %v931
        %v933 = vshll.u32 2131351028, %v924
        %v934 = vshrl.u32 2102212464, %v925
        %v935 = vor.u32 %v933, %v934
        %v936 = vshll.u32 2102212464, %v924
        %v937 = vshrl.u32 920167782, %v925
        %v938 = vor.u32 %v936, %v937
        %v939 = vshll.u32 920167782, %v924
        %v940 = vshrl.u32 1326507024, %v925
        %v941 = vor.u32 %v939, %v940
        %vm942 = vcmp.lt.s32.totalorder %v923, 1
        %vm943 = vcmp.lt.s32.totalorder %v923, 2
        %vm944 = vcmp.lt.s32.totalorder %v923, 3
        %vm945 = vcmp.lt.s32.totalorder %v923, 4
        %v946 = vsel %vm942, %v926, %v929
        %v947 = vsel %vm945, %v935, 2102212464
        %v948 = vsel %vm944, %v932, %v947
        %v949 = vsel %vm943, %v946, %v948
        %v950 = vsel %vm942, %v929, %v932
        %v951 = vsel %vm945, %v938, 920167782
        %v952 = vsel %vm944, %v935, %v951
        %v953 = vsel %vm943, %v950, %v952
        %v954 = vsel %vm942, %v932, %v935
        %v955 = vsel %vm945, %v941, 1326507024
        %v956 = vsel %vm944, %v938, %v955
        %v957 = vsel %vm943, %v954, %v956
        %v958 = vshll.u32 %v918, 8
        %v959 = vand.u32 %v958, 65535
        %v960 = vshrl.u32 %v958, 16
        %v961 = vand.u32 %v957, 65535
        %v962 = vshrl.u32 %v957, 16
        %v963 = vmul.u32 %v959, %v961
        %v964 = vmul.u32 %v959, %v962
        %v965 = vmul.u32 %v960, %v961
        %v966 = vmul.u32 %v960, %v962
        %v967 = vshll.u32 %v964, 16
        %v968 = vshrl.u32 %v964, 16
        %v969 = vshll.u32 %v965, 16
        %v970 = vshrl.u32 %v965, 16
        %vm971 = vc.u32 %v963, %v967
        %v972 = vsel %vm971, 1, 0
        %v973 = vadd.s32 %v963, %v967
        %v974 = vadd.s32 %v966, %v972
        %vm975 = vc.u32 %v973, %v969
        %v976 = vsel %vm975, 1, 0
        %v977 = vadd.s32 %v973, %v969
        %v978 = vadd.s32 %v974, %v976
        %v979 = vadd.s32 %v978, %v968
        %v980 = vadd.s32 %v979, %v970
        %v981 = vand.u32 %v958, 65535
        %v982 = vshrl.u32 %v958, 16
        %v983 = vand.u32 %v953, 65535
        %v984 = vshrl.u32 %v953, 16
        %v985 = vmul.u32 %v981, %v983
        %v986 = vmul.u32 %v981, %v984
        %v987 = vmul.u32 %v982, %v983
        %v988 = vmul.u32 %v982, %v984
        %v989 = vshll.u32 %v986, 16
        %v990 = vshrl.u32 %v986, 16
        %v991 = vshll.u32 %v987, 16
        %v992 = vshrl.u32 %v987, 16
        %vm993 = vc.u32 %v985, %v989
        %v994 = vsel %vm993, 1, 0
        %v995 = vadd.s32 %v985, %v989
        %v996 = vadd.s32 %v988, %v994
        %vm997 = vc.u32 %v995, %v991
        %v998 = vsel %vm997, 1, 0
        %v999 = vadd.s32 %v995, %v991
        %v1000 = vadd.s32 %v996, %v998
        %v1001 = vadd.s32 %v1000, %v990
        %v1002 = vadd.s32 %v1001, %v992
        %v1003 = vmul.u32 %v958, %v949
        %v1004 = vadd.s32 %v980, %v999
        %vm1005 = vc.u32 %v980, %v999
        %v1006 = vadd.s32 %v1002, 1
        %v1007 = vsel %vm1005, %v1006, %v1002
        %v1008 = vadd.s32 %v1003, %v1007
        %v1009 = vadd.s32 %v1008, 536870912
        %v1010 = vshrl.u32 %v1009, 30
        %v1011 = vshll.u32 %v1010, 30
        %v1012 = vsub.s32 %v1008, %v1011
        %vm1013 = vcmp.lt.s32.totalorder %v1012, 0
        %v1014 = vsub.s32 0, %v1012
        %v1015 = vsel %vm1013, %v1014, %v1012
        %v1016 = vclz %v1015
        %v1017 = vsub.s32 %v1016, 2
        %vm1018 = vcmp.gt.s32.totalorder 0, %v1017
        %v1019 = vsel %vm1018, 0, %v1017
        %v1020 = vsub.s32 32, %v1019
        %v1021 = vshll.u32 %v1012, %v1019
        %v1022 = vshrl.u32 %v1004, %v1020
        %v1023 = vor.u32 %v1021, %v1022
        %v1024 = vsub.s32 4294967266, %v1019
        %v1025 = vadd.s32 %v1024, 127
        %v1026 = vshll.u32 %v1025, 23
        %v1027 = vor.u32 4788187, %v1026
        %v1028 = vand.u32 2147483647, %v1027
        %v1030 = vcvt.s32.f32 %v1023
        %v1031 = vmul.f32 %v1030, %v1028
        %v1032 = vxor.u32 %v1031, 2147483648
        %v1033 = vsel %vm912, %v1032, %v1031
        %v1034 = vsub.s32 4, %v1010
        %v1035 = vsel %vm912, %v1034, %v1010
        %v1036 = vsel %vm911, %v262, %v1033
        %v1037 = vsel %vm911, 0, %v1035
        %v1038 = vmul.f32 %v1036, %v1036
        %v1039 = vmul.f32 %v1038, -0.001358992
        %v1040 = vadd.f32 %v1039, 0.041655596
        %v1041 = vmul.f32 %v1038, %v1040
        %v1042 = vadd.f32 %v1041, -0.4999988
        %v1043 = vmul.f32 %v1038, %v1042
        %v1044 = vadd.f32 1.0, %v1043
        %v1045 = vmul.f32 %v1036, %v1036
        %v1046 = vmul.f32 %v1045, -0.00019511016
        %v1047 = vadd.f32 %v1046, 0.008332121
        %v1048 = vmul.f32 %v1045, %v1047
        %v1049 = vadd.f32 %v1048, -0.16666654
        %v1050 = vmul.f32 %v1045, %v1049
        %v1051 = vadd.f32 %v1050, 1.0
        %v1052 = vmul.f32 %v1051, %v1036
        %vm1053 = vweird.f32 %v262
        %v1054 = vadd.s32 %v1037, 3
        %v1055 = vand.u32 %v1054, 3
        %vm1056 = vcmp.lt.s32.totalorder %v1055, 2
        %vm1057 = vcmp.eq.s32.totalorder %v1055, 0
        %v1058 = vxor.u32 %v1052, 2147483648
        %v1059 = vsel %vm1057, %v1044, %v1058
        %vm1060 = vcmp.eq.s32.totalorder %v1055, 2
        %v1061 = vxor.u32 %v1044, 2147483648
        %v1062 = vsel %vm1060, %v1061, %v1052
        %v1063 = vsel %vm1056, %v1059, %v1062
        %v1064 = vsel %vm1053, nan, %v1063
        %v1065 = vand.u32 2147483647, %v263
        %vm1066 = vcmp.le.f32.partialorder %v1065, 0.7853982
        %vm1067 = vcmp.lt.s32.totalorder %v263, 0
        %v1068 = vand.u32 %v263, 2139095040
        %v1069 = vshrl.u32 %v1068, 23
        %v1070 = vsub.s32 %v1069, 127
        %v1071 = vand.u32 2147483647, %v263
        %v1072 = vand.u32 %v1071, 8388607
        %v1073 = vor.u32 %v1072, 8388608
        %v1074 = vsub.s32 0, %v1073
        %v1075 = vadd.s32 %v1070, 1
        %vm1076 = vcmp.gt.s32.totalorder %v1075, 0
        %v1077 = vsel %vm1076, %v1075, 0
        %v1078 = vshrl.u32 %v1077, 5
        %v1079 = vand.u32 %v1077, 31
        %v1080 = vsub.s32 32, %v1079
        %v1081 = vshrl.u32 683565275, %v1080
        %v1082 = vshll.u32 683565275, %v1079
        %v1083 = vshrl.u32 2475754826, %v1080
        %v1084 = vor.u32 %v1082, %v1083
        %v1085 = vshll.u32 2475754826, %v1079
        %v1086 = vshrl.u32 2131351028, %v1080
        %v1087 = vor.u32 %v1085, %v1086
        %v1088 = vshll.u32 2131351028, %v1079
        %v1089 = vshrl.u32 2102212464, %v1080
        %v1090 = vor.u32 %v1088, %v1089
        %v1091 = vshll.u32 2102212464, %v1079
        %v1092 = vshrl.u32 920167782, %v1080
        %v1093 = vor.u32 %v1091, %v1092
        %v1094 = vshll.u32 920167782, %v1079
        %v1095 = vshrl.u32 1326507024, %v1080
        %v1096 = vor.u32 %v1094, %v1095
        %vm1097 = vcmp.lt.s32.totalorder %v1078, 1
        %vm1098 = vcmp.lt.s32.totalorder %v1078, 2
        %vm1099 = vcmp.lt.s32.totalorder %v1078, 3
        %vm1100 = vcmp.lt.s32.totalorder %v1078, 4
        %v1101 = vsel %vm1097, %v1081, %v1084
        %v1102 = vsel %vm1100, %v1090, 2102212464
        %v1103 = vsel %vm1099, %v1087, %v1102
        %v1104 = vsel %vm1098, %v1101, %v1103
        %v1105 = vsel %vm1097, %v1084, %v1087
        %v1106 = vsel %vm1100, %v1093, 920167782
        %v1107 = vsel %vm1099, %v1090, %v1106
        %v1108 = vsel %vm1098, %v1105, %v1107
        %v1109 = vsel %vm1097, %v1087, %v1090
        %v1110 = vsel %vm1100, %v1096, 1326507024
        %v1111 = vsel %vm1099, %v1093, %v1110
        %v1112 = vsel %vm1098, %v1109, %v1111
        %v1113 = vshll.u32 %v1073, 8
        %v1114 = vand.u32 %v1113, 65535
        %v1115 = vshrl.u32 %v1113, 16
        %v1116 = vand.u32 %v1112, 65535
        %v1117 = vshrl.u32 %v1112, 16
        %v1118 = vmul.u32 %v1114, %v1116
        %v1119 = vmul.u32 %v1114, %v1117
        %v1120 = vmul.u32 %v1115, %v1116
        %v1121 = vmul.u32 %v1115, %v1117
        %v1122 = vshll.u32 %v1119, 16
        %v1123 = vshrl.u32 %v1119, 16
        %v1124 = vshll.u32 %v1120, 16
        %v1125 = vshrl.u32 %v1120, 16
        %vm1126 = vc.u32 %v1118, %v1122
        %v1127 = vsel %vm1126, 1, 0
        %v1128 = vadd.s32 %v1118, %v1122
        %v1129 = vadd.s32 %v1121, %v1127
        %vm1130 = vc.u32 %v1128, %v1124
        %v1131 = vsel %vm1130, 1, 0
        %v1132 = vadd.s32 %v1128, %v1124
        %v1133 = vadd.s32 %v1129, %v1131
        %v1134 = vadd.s32 %v1133, %v1123
        %v1135 = vadd.s32 %v1134, %v1125
        %v1136 = vand.u32 %v1113, 65535
        %v1137 = vshrl.u32 %v1113, 16
        %v1138 = vand.u32 %v1108, 65535
        %v1139 = vshrl.u32 %v1108, 16
        %v1140 = vmul.u32 %v1136, %v1138
        %v1141 = vmul.u32 %v1136, %v1139
        %v1142 = vmul.u32 %v1137, %v1138
        %v1143 = vmul.u32 %v1137, %v1139
        %v1144 = vshll.u32 %v1141, 16
        %v1145 = vshrl.u32 %v1141, 16
        %v1146 = vshll.u32 %v1142, 16
        %v1147 = vshrl.u32 %v1142, 16
        %vm1148 = vc.u32 %v1140, %v1144
        %v1149 = vsel %vm1148, 1, 0
        %v1150 = vadd.s32 %v1140, %v1144
        %v1151 = vadd.s32 %v1143, %v1149
        %vm1152 = vc.u32 %v1150, %v1146
        %v1153 = vsel %vm1152, 1, 0
        %v1154 = vadd.s32 %v1150, %v1146
        %v1155 = vadd.s32 %v1151, %v1153
        %v1156 = vadd.s32 %v1155, %v1145
        %v1157 = vadd.s32 %v1156, %v1147
        %v1158 = vmul.u32 %v1113, %v1104
        %v1159 = vadd.s32 %v1135, %v1154
        %vm1160 = vc.u32 %v1135, %v1154
        %v1161 = vadd.s32 %v1157, 1
        %v1162 = vsel %vm1160, %v1161, %v1157
        %v1163 = vadd.s32 %v1158, %v1162
        %v1164 = vadd.s32 %v1163, 536870912
        %v1165 = vshrl.u32 %v1164, 30
        %v1166 = vshll.u32 %v1165, 30
        %v1167 = vsub.s32 %v1163, %v1166
        %vm1168 = vcmp.lt.s32.totalorder %v1167, 0
        %v1169 = vsub.s32 0, %v1167
        %v1170 = vsel %vm1168, %v1169, %v1167
        %v1171 = vclz %v1170
        %v1172 = vsub.s32 %v1171, 2
        %vm1173 = vcmp.gt.s32.totalorder 0, %v1172
        %v1174 = vsel %vm1173, 0, %v1172
        %v1175 = vsub.s32 32, %v1174
        %v1176 = vshll.u32 %v1167, %v1174
        %v1177 = vshrl.u32 %v1159, %v1175
        %v1178 = vor.u32 %v1176, %v1177
        %v1179 = vsub.s32 4294967266, %v1174
        %v1180 = vadd.s32 %v1179, 127
        %v1181 = vshll.u32 %v1180, 23
        %v1182 = vor.u32 4788187, %v1181
        %v1183 = vand.u32 2147483647, %v1182
        %v1185 = vcvt.s32.f32 %v1178
        %v1186 = vmul.f32 %v1185, %v1183
        %v1187 = vxor.u32 %v1186, 2147483648
        %v1188 = vsel %vm1067, %v1187, %v1186
        %v1189 = vsub.s32 4, %v1165
        %v1190 = vsel %vm1067, %v1189, %v1165
        %v1191 = vsel %vm1066, %v263, %v1188
        %v1192 = vsel %vm1066, 0, %v1190
        %v1193 = vmul.f32 %v1191, %v1191
        %v1194 = vmul.f32 %v1193, -0.001358992
        %v1195 = vadd.f32 %v1194, 0.041655596
        %v1196 = vmul.f32 %v1193, %v1195
        %v1197 = vadd.f32 %v1196, -0.4999988
        %v1198 = vmul.f32 %v1193, %v1197
        %v1199 = vadd.f32 1.0, %v1198
        %v1200 = vmul.f32 %v1191, %v1191
        %v1201 = vmul.f32 %v1200, -0.00019511016
        %v1202 = vadd.f32 %v1201, 0.008332121
        %v1203 = vmul.f32 %v1200, %v1202
        %v1204 = vadd.f32 %v1203, -0.16666654
        %v1205 = vmul.f32 %v1200, %v1204
        %v1206 = vadd.f32 %v1205, 1.0
        %v1207 = vmul.f32 %v1206, %v1191
        %vm1208 = vweird.f32 %v263
        %v1209 = vadd.s32 %v1192, 3
        %v1210 = vand.u32 %v1209, 3
        %vm1211 = vcmp.lt.s32.totalorder %v1210, 2
        %vm1212 = vcmp.eq.s32.totalorder %v1210, 0
        %v1213 = vxor.u32 %v1207, 2147483648
        %v1214 = vsel %vm1212, %v1199, %v1213
        %vm1215 = vcmp.eq.s32.totalorder %v1210, 2
        %v1216 = vxor.u32 %v1199, 2147483648
        %v1217 = vsel %vm1215, %v1216, %v1207
        %v1218 = vsel %vm1211, %v1214, %v1217
        %v1219 = vsel %vm1208, nan, %v1218
        %v1220 = vand.u32 2147483647, %v264
        %vm1221 = vcmp.le.f32.partialorder %v1220, 0.7853982
        %vm1222 = vcmp.lt.s32.totalorder %v264, 0
        %v1223 = vand.u32 %v264, 2139095040
        %v1224 = vshrl.u32 %v1223, 23
        %v1225 = vsub.s32 %v1224, 127
        %v1226 = vand.u32 2147483647, %v264
        %v1227 = vand.u32 %v1226, 8388607
        %v1228 = vor.u32 %v1227, 8388608
        %v1229 = vsub.s32 0, %v1228
        %v1230 = vadd.s32 %v1225, 1
        %vm1231 = vcmp.gt.s32.totalorder %v1230, 0
        %v1232 = vsel %vm1231, %v1230, 0
        %v1233 = vshrl.u32 %v1232, 5
        %v1234 = vand.u32 %v1232, 31
        %v1235 = vsub.s32 32, %v1234
        %v1236 = vshrl.u32 683565275, %v1235
        %v1237 = vshll.u32 683565275, %v1234
        %v1238 = vshrl.u32 2475754826, %v1235
        %v1239 = vor.u32 %v1237, %v1238
        %v1240 = vshll.u32 2475754826, %v1234
        %v1241 = vshrl.u32 2131351028, %v1235
        %v1242 = vor.u32 %v1240, %v1241
        %v1243 = vshll.u32 2131351028, %v1234
        %v1244 = vshrl.u32 2102212464, %v1235
        %v1245 = vor.u32 %v1243, %v1244
        %v1246 = vshll.u32 2102212464, %v1234
        %v1247 = vshrl.u32 920167782, %v1235
        %v1248 = vor.u32 %v1246, %v1247
        %v1249 = vshll.u32 920167782, %v1234
        %v1250 = vshrl.u32 1326507024, %v1235
        %v1251 = vor.u32 %v1249, %v1250
        %vm1252 = vcmp.lt.s32.totalorder %v1233, 1
        %vm1253 = vcmp.lt.s32.totalorder %v1233, 2
        %vm1254 = vcmp.lt.s32.totalorder %v1233, 3
        %vm1255 = vcmp.lt.s32.totalorder %v1233, 4
        %v1256 = vsel %vm1252, %v1236, %v1239
        %v1257 = vsel %vm1255, %v1245, 2102212464
        %v1258 = vsel %vm1254, %v1242, %v1257
        %v1259 = vsel %vm1253, %v1256, %v1258
        %v1260 = vsel %vm1252, %v1239, %v1242
        %v1261 = vsel %vm1255, %v1248, 920167782
        %v1262 = vsel %vm1254, %v1245, %v1261
        %v1263 = vsel %vm1253, %v1260, %v1262
        %v1264 = vsel %vm1252, %v1242, %v1245
        %v1265 = vsel %vm1255, %v1251, 1326507024
        %v1266 = vsel %vm1254, %v1248, %v1265
        %v1267 = vsel %vm1253, %v1264, %v1266
        %v1268 = vshll.u32 %v1228, 8
        %v1269 = vand.u32 %v1268, 65535
        %v1270 = vshrl.u32 %v1268, 16
        %v1271 = vand.u32 %v1267, 65535
        %v1272 = vshrl.u32 %v1267, 16
        %v1273 = vmul.u32 %v1269, %v1271
        %v1274 = vmul.u32 %v1269, %v1272
        %v1275 = vmul.u32 %v1270, %v1271
        %v1276 = vmul.u32 %v1270, %v1272
        %v1277 = vshll.u32 %v1274, 16
        %v1278 = vshrl.u32 %v1274, 16
        %v1279 = vshll.u32 %v1275, 16
        %v1280 = vshrl.u32 %v1275, 16
        %vm1281 = vc.u32 %v1273, %v1277
        %v1282 = vsel %vm1281, 1, 0
        %v1283 = vadd.s32 %v1273, %v1277
        %v1284 = vadd.s32 %v1276, %v1282
        %vm1285 = vc.u32 %v1283, %v1279
        %v1286 = vsel %vm1285, 1, 0
        %v1287 = vadd.s32 %v1283, %v1279
        %v1288 = vadd.s32 %v1284, %v1286
        %v1289 = vadd.s32 %v1288, %v1278
        %v1290 = vadd.s32 %v1289, %v1280
        %v1291 = vand.u32 %v1268, 65535
        %v1292 = vshrl.u32 %v1268, 16
        %v1293 = vand.u32 %v1263, 65535
        %v1294 = vshrl.u32 %v1263, 16
        %v1295 = vmul.u32 %v1291, %v1293
        %v1296 = vmul.u32 %v1291, %v1294
        %v1297 = vmul.u32 %v1292, %v1293
        %v1298 = vmul.u32 %v1292, %v1294
        %v1299 = vshll.u32 %v1296, 16
        %v1300 = vshrl.u32 %v1296, 16
        %v1301 = vshll.u32 %v1297, 16
        %v1302 = vshrl.u32 %v1297, 16
        %vm1303 = vc.u32 %v1295, %v1299
        %v1304 = vsel %vm1303, 1, 0
        %v1305 = vadd.s32 %v1295, %v1299
        %v1306 = vadd.s32 %v1298, %v1304
        %vm1307 = vc.u32 %v1305, %v1301
        %v1308 = vsel %vm1307, 1, 0
        %v1309 = vadd.s32 %v1305, %v1301
        %v1310 = vadd.s32 %v1306, %v1308
        %v1311 = vadd.s32 %v1310, %v1300
        %v1312 = vadd.s32 %v1311, %v1302
        %v1313 = vmul.u32 %v1268, %v1259
        %v1314 = vadd.s32 %v1290, %v1309
        %vm1315 = vc.u32 %v1290, %v1309
        %v1316 = vadd.s32 %v1312, 1
        %v1317 = vsel %vm1315, %v1316, %v1312
        %v1318 = vadd.s32 %v1313, %v1317
        %v1319 = vadd.s32 %v1318, 536870912
        %v1320 = vshrl.u32 %v1319, 30
        %v1321 = vshll.u32 %v1320, 30
        %v1322 = vsub.s32 %v1318, %v1321
        %vm1323 = vcmp.lt.s32.totalorder %v1322, 0
        %v1324 = vsub.s32 0, %v1322
        %v1325 = vsel %vm1323, %v1324, %v1322
        %v1326 = vclz %v1325
        %v1327 = vsub.s32 %v1326, 2
        %vm1328 = vcmp.gt.s32.totalorder 0, %v1327
        %v1329 = vsel %vm1328, 0, %v1327
        %v1330 = vsub.s32 32, %v1329
        %v1331 = vshll.u32 %v1322, %v1329
        %v1332 = vshrl.u32 %v1314, %v1330
        %v1333 = vor.u32 %v1331, %v1332
        %v1334 = vsub.s32 4294967266, %v1329
        %v1335 = vadd.s32 %v1334, 127
        %v1336 = vshll.u32 %v1335, 23
        %v1337 = vor.u32 4788187, %v1336
        %v1338 = vand.u32 2147483647, %v1337
        %v1340 = vcvt.s32.f32 %v1333
        %v1341 = vmul.f32 %v1340, %v1338
        %v1342 = vxor.u32 %v1341, 2147483648
        %v1343 = vsel %vm1222, %v1342, %v1341
        %v1344 = vsub.s32 4, %v1320
        %v1345 = vsel %vm1222, %v1344, %v1320
        %v1346 = vsel %vm1221, %v264, %v1343
        %v1347 = vsel %vm1221, 0, %v1345
        %v1348 = vmul.f32 %v1346, %v1346
        %v1349 = vmul.f32 %v1348, -0.001358992
        %v1350 = vadd.f32 %v1349, 0.041655596
        %v1351 = vmul.f32 %v1348, %v1350
        %v1352 = vadd.f32 %v1351, -0.4999988
        %v1353 = vmul.f32 %v1348, %v1352
        %v1354 = vadd.f32 1.0, %v1353
        %v1355 = vmul.f32 %v1346, %v1346
        %v1356 = vmul.f32 %v1355, -0.00019511016
        %v1357 = vadd.f32 %v1356, 0.008332121
        %v1358 = vmul.f32 %v1355, %v1357
        %v1359 = vadd.f32 %v1358, -0.16666654
        %v1360 = vmul.f32 %v1355, %v1359
        %v1361 = vadd.f32 %v1360, 1.0
        %v1362 = vmul.f32 %v1361, %v1346
        %vm1363 = vweird.f32 %v264
        %v1364 = vadd.s32 %v1347, 3
        %v1365 = vand.u32 %v1364, 3
        %vm1366 = vcmp.lt.s32.totalorder %v1365, 2
        %vm1367 = vcmp.eq.s32.totalorder %v1365, 0
        %v1368 = vxor.u32 %v1362, 2147483648
        %v1369 = vsel %vm1367, %v1354, %v1368
        %vm1370 = vcmp.eq.s32.totalorder %v1365, 2
        %v1371 = vxor.u32 %v1354, 2147483648
        %v1372 = vsel %vm1370, %v1371, %v1362
        %v1373 = vsel %vm1366, %v1369, %v1372
        %v1374 = vsel %vm1363, nan, %v1373
        %v1375 = vand.u32 2147483647, %v265
        %vm1376 = vcmp.le.f32.partialorder %v1375, 0.7853982
        %vm1377 = vcmp.lt.s32.totalorder %v265, 0
        %v1378 = vand.u32 %v265, 2139095040
        %v1379 = vshrl.u32 %v1378, 23
        %v1380 = vsub.s32 %v1379, 127
        %v1381 = vand.u32 2147483647, %v265
        %v1382 = vand.u32 %v1381, 8388607
        %v1383 = vor.u32 %v1382, 8388608
        %v1384 = vsub.s32 0, %v1383
        %v1385 = vadd.s32 %v1380, 1
        %vm1386 = vcmp.gt.s32.totalorder %v1385, 0
        %v1387 = vsel %vm1386, %v1385, 0
        %v1388 = vshrl.u32 %v1387, 5
        %v1389 = vand.u32 %v1387, 31
        %v1390 = vsub.s32 32, %v1389
        %v1391 = vshrl.u32 683565275, %v1390
        %v1392 = vshll.u32 683565275, %v1389
        %v1393 = vshrl.u32 2475754826, %v1390
        %v1394 = vor.u32 %v1392, %v1393
        %v1395 = vshll.u32 2475754826, %v1389
        %v1396 = vshrl.u32 2131351028, %v1390
        %v1397 = vor.u32 %v1395, %v1396
        %v1398 = vshll.u32 2131351028, %v1389
        %v1399 = vshrl.u32 2102212464, %v1390
        %v1400 = vor.u32 %v1398, %v1399
        %v1401 = vshll.u32 2102212464, %v1389
        %v1402 = vshrl.u32 920167782, %v1390
        %v1403 = vor.u32 %v1401, %v1402
        %v1404 = vshll.u32 920167782, %v1389
        %v1405 = vshrl.u32 1326507024, %v1390
        %v1406 = vor.u32 %v1404, %v1405
        %vm1407 = vcmp.lt.s32.totalorder %v1388, 1
        %vm1408 = vcmp.lt.s32.totalorder %v1388, 2
        %vm1409 = vcmp.lt.s32.totalorder %v1388, 3
        %vm1410 = vcmp.lt.s32.totalorder %v1388, 4
        %v1411 = vsel %vm1407, %v1391, %v1394
        %v1412 = vsel %vm1410, %v1400, 2102212464
        %v1413 = vsel %vm1409, %v1397, %v1412
        %v1414 = vsel %vm1408, %v1411, %v1413
        %v1415 = vsel %vm1407, %v1394, %v1397
        %v1416 = vsel %vm1410, %v1403, 920167782
        %v1417 = vsel %vm1409, %v1400, %v1416
        %v1418 = vsel %vm1408, %v1415, %v1417
        %v1419 = vsel %vm1407, %v1397, %v1400
        %v1420 = vsel %vm1410, %v1406, 1326507024
        %v1421 = vsel %vm1409, %v1403, %v1420
        %v1422 = vsel %vm1408, %v1419, %v1421
        %v1423 = vshll.u32 %v1383, 8
        %v1424 = vand.u32 %v1423, 65535
        %v1425 = vshrl.u32 %v1423, 16
        %v1426 = vand.u32 %v1422, 65535
        %v1427 = vshrl.u32 %v1422, 16
        %v1428 = vmul.u32 %v1424, %v1426
        %v1429 = vmul.u32 %v1424, %v1427
        %v1430 = vmul.u32 %v1425, %v1426
        %v1431 = vmul.u32 %v1425, %v1427
        %v1432 = vshll.u32 %v1429, 16
        %v1433 = vshrl.u32 %v1429, 16
        %v1434 = vshll.u32 %v1430, 16
        %v1435 = vshrl.u32 %v1430, 16
        %vm1436 = vc.u32 %v1428, %v1432
        %v1437 = vsel %vm1436, 1, 0
        %v1438 = vadd.s32 %v1428, %v1432
        %v1439 = vadd.s32 %v1431, %v1437
        %vm1440 = vc.u32 %v1438, %v1434
        %v1441 = vsel %vm1440, 1, 0
        %v1442 = vadd.s32 %v1438, %v1434
        %v1443 = vadd.s32 %v1439, %v1441
        %v1444 = vadd.s32 %v1443, %v1433
        %v1445 = vadd.s32 %v1444, %v1435
        %v1446 = vand.u32 %v1423, 65535
        %v1447 = vshrl.u32 %v1423, 16
        %v1448 = vand.u32 %v1418, 65535
        %v1449 = vshrl.u32 %v1418, 16
        %v1450 = vmul.u32 %v1446, %v1448
        %v1451 = vmul.u32 %v1446, %v1449
        %v1452 = vmul.u32 %v1447, %v1448
        %v1453 = vmul.u32 %v1447, %v1449
        %v1454 = vshll.u32 %v1451, 16
        %v1455 = vshrl.u32 %v1451, 16
        %v1456 = vshll.u32 %v1452, 16
        %v1457 = vshrl.u32 %v1452, 16
        %vm1458 = vc.u32 %v1450, %v1454
        %v1459 = vsel %vm1458, 1, 0
        %v1460 = vadd.s32 %v1450, %v1454
        %v1461 = vadd.s32 %v1453, %v1459
        %vm1462 = vc.u32 %v1460, %v1456
        %v1463 = vsel %vm1462, 1, 0
        %v1464 = vadd.s32 %v1460, %v1456
        %v1465 = vadd.s32 %v1461, %v1463
        %v1466 = vadd.s32 %v1465, %v1455
        %v1467 = vadd.s32 %v1466, %v1457
        %v1468 = vmul.u32 %v1423, %v1414
        %v1469 = vadd.s32 %v1445, %v1464
        %vm1470 = vc.u32 %v1445, %v1464
        %v1471 = vadd.s32 %v1467, 1
        %v1472 = vsel %vm1470, %v1471, %v1467
        %v1473 = vadd.s32 %v1468, %v1472
        %v1474 = vadd.s32 %v1473, 536870912
        %v1475 = vshrl.u32 %v1474, 30
        %v1476 = vshll.u32 %v1475, 30
        %v1477 = vsub.s32 %v1473, %v1476
        %vm1478 = vcmp.lt.s32.totalorder %v1477, 0
        %v1479 = vsub.s32 0, %v1477
        %v1480 = vsel %vm1478, %v1479, %v1477
        %v1481 = vclz %v1480
        %v1482 = vsub.s32 %v1481, 2
        %vm1483 = vcmp.gt.s32.totalorder 0, %v1482
        %v1484 = vsel %vm1483, 0, %v1482
        %v1485 = vsub.s32 32, %v1484
        %v1486 = vshll.u32 %v1477, %v1484
        %v1487 = vshrl.u32 %v1469, %v1485
        %v1488 = vor.u32 %v1486, %v1487
        %v1489 = vsub.s32 4294967266, %v1484
        %v1490 = vadd.s32 %v1489, 127
        %v1491 = vshll.u32 %v1490, 23
        %v1492 = vor.u32 4788187, %v1491
        %v1493 = vand.u32 2147483647, %v1492
        %v1495 = vcvt.s32.f32 %v1488
        %v1496 = vmul.f32 %v1495, %v1493
        %v1497 = vxor.u32 %v1496, 2147483648
        %v1498 = vsel %vm1377, %v1497, %v1496
        %v1499 = vsub.s32 4, %v1475
        %v1500 = vsel %vm1377, %v1499, %v1475
        %v1501 = vsel %vm1376, %v265, %v1498
        %v1502 = vsel %vm1376, 0, %v1500
        %v1503 = vmul.f32 %v1501, %v1501
        %v1504 = vmul.f32 %v1503, -0.001358992
        %v1505 = vadd.f32 %v1504, 0.041655596
        %v1506 = vmul.f32 %v1503, %v1505
        %v1507 = vadd.f32 %v1506, -0.4999988
        %v1508 = vmul.f32 %v1503, %v1507
        %v1509 = vadd.f32 1.0, %v1508
        %v1510 = vmul.f32 %v1501, %v1501
        %v1511 = vmul.f32 %v1510, -0.00019511016
        %v1512 = vadd.f32 %v1511, 0.008332121
        %v1513 = vmul.f32 %v1510, %v1512
        %v1514 = vadd.f32 %v1513, -0.16666654
        %v1515 = vmul.f32 %v1510, %v1514
        %v1516 = vadd.f32 %v1515, 1.0
        %v1517 = vmul.f32 %v1516, %v1501
        %vm1518 = vweird.f32 %v265
        %v1519 = vadd.s32 %v1502, 3
        %v1520 = vand.u32 %v1519, 3
        %vm1521 = vcmp.lt.s32.totalorder %v1520, 2
        %vm1522 = vcmp.eq.s32.totalorder %v1520, 0
        %v1523 = vxor.u32 %v1517, 2147483648
        %v1524 = vsel %vm1522, %v1509, %v1523
        %vm1525 = vcmp.eq.s32.totalorder %v1520, 2
        %v1526 = vxor.u32 %v1509, 2147483648
        %v1527 = vsel %vm1525, %v1526, %v1517
        %v1528 = vsel %vm1521, %v1524, %v1527
        %v1529 = vsel %vm1518, nan, %v1528
        %v1530 = vand.u32 2147483647, %v266
        %vm1531 = vcmp.le.f32.partialorder %v1530, 0.7853982
        %vm1532 = vcmp.lt.s32.totalorder %v266, 0
        %v1533 = vand.u32 %v266, 2139095040
        %v1534 = vshrl.u32 %v1533, 23
        %v1535 = vsub.s32 %v1534, 127
        %v1536 = vand.u32 2147483647, %v266
        %v1537 = vand.u32 %v1536, 8388607
        %v1538 = vor.u32 %v1537, 8388608
        %v1539 = vsub.s32 0, %v1538
        %v1540 = vadd.s32 %v1535, 1
        %vm1541 = vcmp.gt.s32.totalorder %v1540, 0
        %v1542 = vsel %vm1541, %v1540, 0
        %v1543 = vshrl.u32 %v1542, 5
        %v1544 = vand.u32 %v1542, 31
        %v1545 = vsub.s32 32, %v1544
        %v1546 = vshrl.u32 683565275, %v1545
        %v1547 = vshll.u32 683565275, %v1544
        %v1548 = vshrl.u32 2475754826, %v1545
        %v1549 = vor.u32 %v1547, %v1548
        %v1550 = vshll.u32 2475754826, %v1544
        %v1551 = vshrl.u32 2131351028, %v1545
        %v1552 = vor.u32 %v1550, %v1551
        %v1553 = vshll.u32 2131351028, %v1544
        %v1554 = vshrl.u32 2102212464, %v1545
        %v1555 = vor.u32 %v1553, %v1554
        %v1556 = vshll.u32 2102212464, %v1544
        %v1557 = vshrl.u32 920167782, %v1545
        %v1558 = vor.u32 %v1556, %v1557
        %v1559 = vshll.u32 920167782, %v1544
        %v1560 = vshrl.u32 1326507024, %v1545
        %v1561 = vor.u32 %v1559, %v1560
        %vm1562 = vcmp.lt.s32.totalorder %v1543, 1
        %vm1563 = vcmp.lt.s32.totalorder %v1543, 2
        %vm1564 = vcmp.lt.s32.totalorder %v1543, 3
        %vm1565 = vcmp.lt.s32.totalorder %v1543, 4
        %v1566 = vsel %vm1562, %v1546, %v1549
        %v1567 = vsel %vm1565, %v1555, 2102212464
        %v1568 = vsel %vm1564, %v1552, %v1567
        %v1569 = vsel %vm1563, %v1566, %v1568
        %v1570 = vsel %vm1562, %v1549, %v1552
        %v1571 = vsel %vm1565, %v1558, 920167782
        %v1572 = vsel %vm1564, %v1555, %v1571
        %v1573 = vsel %vm1563, %v1570, %v1572
        %v1574 = vsel %vm1562, %v1552, %v1555
        %v1575 = vsel %vm1565, %v1561, 1326507024
        %v1576 = vsel %vm1564, %v1558, %v1575
        %v1577 = vsel %vm1563, %v1574, %v1576
        %v1578 = vshll.u32 %v1538, 8
        %v1579 = vand.u32 %v1578, 65535
        %v1580 = vshrl.u32 %v1578, 16
        %v1581 = vand.u32 %v1577, 65535
        %v1582 = vshrl.u32 %v1577, 16
        %v1583 = vmul.u32 %v1579, %v1581
        %v1584 = vmul.u32 %v1579, %v1582
        %v1585 = vmul.u32 %v1580, %v1581
        %v1586 = vmul.u32 %v1580, %v1582
        %v1587 = vshll.u32 %v1584, 16
        %v1588 = vshrl.u32 %v1584, 16
        %v1589 = vshll.u32 %v1585, 16
        %v1590 = vshrl.u32 %v1585, 16
        %vm1591 = vc.u32 %v1583, %v1587
        %v1592 = vsel %vm1591, 1, 0
        %v1593 = vadd.s32 %v1583, %v1587
        %v1594 = vadd.s32 %v1586, %v1592
        %vm1595 = vc.u32 %v1593, %v1589
        %v1596 = vsel %vm1595, 1, 0
        %v1597 = vadd.s32 %v1593, %v1589
        %v1598 = vadd.s32 %v1594, %v1596
        %v1599 = vadd.s32 %v1598, %v1588
        %v1600 = vadd.s32 %v1599, %v1590
        %v1601 = vand.u32 %v1578, 65535
        %v1602 = vshrl.u32 %v1578, 16
        %v1603 = vand.u32 %v1573, 65535
        %v1604 = vshrl.u32 %v1573, 16
        %v1605 = vmul.u32 %v1601, %v1603
        %v1606 = vmul.u32 %v1601, %v1604
        %v1607 = vmul.u32 %v1602, %v1603
        %v1608 = vmul.u32 %v1602, %v1604
        %v1609 = vshll.u32 %v1606, 16
        %v1610 = vshrl.u32 %v1606, 16
        %v1611 = vshll.u32 %v1607, 16
        %v1612 = vshrl.u32 %v1607, 16
        %vm1613 = vc.u32 %v1605, %v1609
        %v1614 = vsel %vm1613, 1, 0
        %v1615 = vadd.s32 %v1605, %v1609
        %v1616 = vadd.s32 %v1608, %v1614
        %vm1617 = vc.u32 %v1615, %v1611
        %v1618 = vsel %vm1617, 1, 0
        %v1619 = vadd.s32 %v1615, %v1611
        %v1620 = vadd.s32 %v1616, %v1618
        %v1621 = vadd.s32 %v1620, %v1610
        %v1622 = vadd.s32 %v1621, %v1612
        %v1623 = vmul.u32 %v1578, %v1569
        %v1624 = vadd.s32 %v1600, %v1619
        %vm1625 = vc.u32 %v1600, %v1619
        %v1626 = vadd.s32 %v1622, 1
        %v1627 = vsel %vm1625, %v1626, %v1622
        %v1628 = vadd.s32 %v1623, %v1627
        %v1629 = vadd.s32 %v1628, 536870912
        %v1630 = vshrl.u32 %v1629, 30
        %v1631 = vshll.u32 %v1630, 30
        %v1632 = vsub.s32 %v1628, %v1631
        %vm1633 = vcmp.lt.s32.totalorder %v1632, 0
        %v1634 = vsub.s32 0, %v1632
        %v1635 = vsel %vm1633, %v1634, %v1632
        %v1636 = vclz %v1635
        %v1637 = vsub.s32 %v1636, 2
        %vm1638 = vcmp.gt.s32.totalorder 0, %v1637
        %v1639 = vsel %vm1638, 0, %v1637
        %v1640 = vsub.s32 32, %v1639
        %v1641 = vshll.u32 %v1632, %v1639
        %v1642 = vshrl.u32 %v1624, %v1640
        %v1643 = vor.u32 %v1641, %v1642
        %v1644 = vsub.s32 4294967266, %v1639
        %v1645 = vadd.s32 %v1644, 127
        %v1646 = vshll.u32 %v1645, 23
        %v1647 = vor.u32 4788187, %v1646
        %v1648 = vand.u32 2147483647, %v1647
        %v1650 = vcvt.s32.f32 %v1643
        %v1651 = vmul.f32 %v1650, %v1648
        %v1652 = vxor.u32 %v1651, 2147483648
        %v1653 = vsel %vm1532, %v1652, %v1651
        %v1654 = vsub.s32 4, %v1630
        %v1655 = vsel %vm1532, %v1654, %v1630
        %v1656 = vsel %vm1531, %v266, %v1653
        %v1657 = vsel %vm1531, 0, %v1655
        %v1658 = vmul.f32 %v1656, %v1656
        %v1659 = vmul.f32 %v1658, -0.001358992
        %v1660 = vadd.f32 %v1659, 0.041655596
        %v1661 = vmul.f32 %v1658, %v1660
        %v1662 = vadd.f32 %v1661, -0.4999988
        %v1663 = vmul.f32 %v1658, %v1662
        %v1664 = vadd.f32 1.0, %v1663
        %v1665 = vmul.f32 %v1656, %v1656
        %v1666 = vmul.f32 %v1665, -0.00019511016
        %v1667 = vadd.f32 %v1666, 0.008332121
        %v1668 = vmul.f32 %v1665, %v1667
        %v1669 = vadd.f32 %v1668, -0.16666654
        %v1670 = vmul.f32 %v1665, %v1669
        %v1671 = vadd.f32 %v1670, 1.0
        %v1672 = vmul.f32 %v1671, %v1656
        %vm1673 = vweird.f32 %v266
        %v1674 = vadd.s32 %v1657, 3
        %v1675 = vand.u32 %v1674, 3
        %vm1676 = vcmp.lt.s32.totalorder %v1675, 2
        %vm1677 = vcmp.eq.s32.totalorder %v1675, 0
        %v1678 = vxor.u32 %v1672, 2147483648
        %v1679 = vsel %vm1677, %v1664, %v1678
        %vm1680 = vcmp.eq.s32.totalorder %v1675, 2
        %v1681 = vxor.u32 %v1664, 2147483648
        %v1682 = vsel %vm1680, %v1681, %v1672
        %v1683 = vsel %vm1676, %v1679, %v1682
        %v1684 = vsel %vm1673, nan, %v1683
        %v1685 = vand.u32 2147483647, %v267
        %vm1686 = vcmp.le.f32.partialorder %v1685, 0.7853982
        %vm1687 = vcmp.lt.s32.totalorder %v267, 0
        %v1688 = vand.u32 %v267, 2139095040
        %v1689 = vshrl.u32 %v1688, 23
        %v1690 = vsub.s32 %v1689, 127
        %v1691 = vand.u32 2147483647, %v267
        %v1692 = vand.u32 %v1691, 8388607
        %v1693 = vor.u32 %v1692, 8388608
        %v1694 = vsub.s32 0, %v1693
        %v1695 = vadd.s32 %v1690, 1
        %vm1696 = vcmp.gt.s32.totalorder %v1695, 0
        %v1697 = vsel %vm1696, %v1695, 0
        %v1698 = vshrl.u32 %v1697, 5
        %v1699 = vand.u32 %v1697, 31
        %v1700 = vsub.s32 32, %v1699
        %v1701 = vshrl.u32 683565275, %v1700
        %v1702 = vshll.u32 683565275, %v1699
        %v1703 = vshrl.u32 2475754826, %v1700
        %v1704 = vor.u32 %v1702, %v1703
        %v1705 = vshll.u32 2475754826, %v1699
        %v1706 = vshrl.u32 2131351028, %v1700
        %v1707 = vor.u32 %v1705, %v1706
        %v1708 = vshll.u32 2131351028, %v1699
        %v1709 = vshrl.u32 2102212464, %v1700
        %v1710 = vor.u32 %v1708, %v1709
        %v1711 = vshll.u32 2102212464, %v1699
        %v1712 = vshrl.u32 920167782, %v1700
        %v1713 = vor.u32 %v1711, %v1712
        %v1714 = vshll.u32 920167782, %v1699
        %v1715 = vshrl.u32 1326507024, %v1700
        %v1716 = vor.u32 %v1714, %v1715
        %vm1717 = vcmp.lt.s32.totalorder %v1698, 1
        %vm1718 = vcmp.lt.s32.totalorder %v1698, 2
        %vm1719 = vcmp.lt.s32.totalorder %v1698, 3
        %vm1720 = vcmp.lt.s32.totalorder %v1698, 4
        %v1721 = vsel %vm1717, %v1701, %v1704
        %v1722 = vsel %vm1720, %v1710, 2102212464
        %v1723 = vsel %vm1719, %v1707, %v1722
        %v1724 = vsel %vm1718, %v1721, %v1723
        %v1725 = vsel %vm1717, %v1704, %v1707
        %v1726 = vsel %vm1720, %v1713, 920167782
        %v1727 = vsel %vm1719, %v1710, %v1726
        %v1728 = vsel %vm1718, %v1725, %v1727
        %v1729 = vsel %vm1717, %v1707, %v1710
        %v1730 = vsel %vm1720, %v1716, 1326507024
        %v1731 = vsel %vm1719, %v1713, %v1730
        %v1732 = vsel %vm1718, %v1729, %v1731
        %v1733 = vshll.u32 %v1693, 8
        %v1734 = vand.u32 %v1733, 65535
        %v1735 = vshrl.u32 %v1733, 16
        %v1736 = vand.u32 %v1732, 65535
        %v1737 = vshrl.u32 %v1732, 16
        %v1738 = vmul.u32 %v1734, %v1736
        %v1739 = vmul.u32 %v1734, %v1737
        %v1740 = vmul.u32 %v1735, %v1736
        %v1741 = vmul.u32 %v1735, %v1737
        %v1742 = vshll.u32 %v1739, 16
        %v1743 = vshrl.u32 %v1739, 16
        %v1744 = vshll.u32 %v1740, 16
        %v1745 = vshrl.u32 %v1740, 16
        %vm1746 = vc.u32 %v1738, %v1742
        %v1747 = vsel %vm1746, 1, 0
        %v1748 = vadd.s32 %v1738, %v1742
        %v1749 = vadd.s32 %v1741, %v1747
        %vm1750 = vc.u32 %v1748, %v1744
        %v1751 = vsel %vm1750, 1, 0
        %v1752 = vadd.s32 %v1748, %v1744
        %v1753 = vadd.s32 %v1749, %v1751
        %v1754 = vadd.s32 %v1753, %v1743
        %v1755 = vadd.s32 %v1754, %v1745
        %v1756 = vand.u32 %v1733, 65535
        %v1757 = vshrl.u32 %v1733, 16
        %v1758 = vand.u32 %v1728, 65535
        %v1759 = vshrl.u32 %v1728, 16
        %v1760 = vmul.u32 %v1756, %v1758
        %v1761 = vmul.u32 %v1756, %v1759
        %v1762 = vmul.u32 %v1757, %v1758
        %v1763 = vmul.u32 %v1757, %v1759
        %v1764 = vshll.u32 %v1761, 16
        %v1765 = vshrl.u32 %v1761, 16
        %v1766 = vshll.u32 %v1762, 16
        %v1767 = vshrl.u32 %v1762, 16
        %vm1768 = vc.u32 %v1760, %v1764
        %v1769 = vsel %vm1768, 1, 0
        %v1770 = vadd.s32 %v1760, %v1764
        %v1771 = vadd.s32 %v1763, %v1769
        %vm1772 = vc.u32 %v1770, %v1766
        %v1773 = vsel %vm1772, 1, 0
        %v1774 = vadd.s32 %v1770, %v1766
        %v1775 = vadd.s32 %v1771, %v1773
        %v1776 = vadd.s32 %v1775, %v1765
        %v1777 = vadd.s32 %v1776, %v1767
        %v1778 = vmul.u32 %v1733, %v1724
        %v1779 = vadd.s32 %v1755, %v1774
        %vm1780 = vc.u32 %v1755, %v1774
        %v1781 = vadd.s32 %v1777, 1
        %v1782 = vsel %vm1780, %v1781, %v1777
        %v1783 = vadd.s32 %v1778, %v1782
        %v1784 = vadd.s32 %v1783, 536870912
        %v1785 = vshrl.u32 %v1784, 30
        %v1786 = vshll.u32 %v1785, 30
        %v1787 = vsub.s32 %v1783, %v1786
        %vm1788 = vcmp.lt.s32.totalorder %v1787, 0
        %v1789 = vsub.s32 0, %v1787
        %v1790 = vsel %vm1788, %v1789, %v1787
        %v1791 = vclz %v1790
        %v1792 = vsub.s32 %v1791, 2
        %vm1793 = vcmp.gt.s32.totalorder 0, %v1792
        %v1794 = vsel %vm1793, 0, %v1792
        %v1795 = vsub.s32 32, %v1794
        %v1796 = vshll.u32 %v1787, %v1794
        %v1797 = vshrl.u32 %v1779, %v1795
        %v1798 = vor.u32 %v1796, %v1797
        %v1799 = vsub.s32 4294967266, %v1794
        %v1800 = vadd.s32 %v1799, 127
        %v1801 = vshll.u32 %v1800, 23
        %v1802 = vor.u32 4788187, %v1801
        %v1803 = vand.u32 2147483647, %v1802
        %v1805 = vcvt.s32.f32 %v1798
        %v1806 = vmul.f32 %v1805, %v1803
        %v1807 = vxor.u32 %v1806, 2147483648
        %v1808 = vsel %vm1687, %v1807, %v1806
        %v1809 = vsub.s32 4, %v1785
        %v1810 = vsel %vm1687, %v1809, %v1785
        %v1811 = vsel %vm1686, %v267, %v1808
        %v1812 = vsel %vm1686, 0, %v1810
        %v1813 = vmul.f32 %v1811, %v1811
        %v1814 = vmul.f32 %v1813, -0.001358992
        %v1815 = vadd.f32 %v1814, 0.041655596
        %v1816 = vmul.f32 %v1813, %v1815
        %v1817 = vadd.f32 %v1816, -0.4999988
        %v1818 = vmul.f32 %v1813, %v1817
        %v1819 = vadd.f32 1.0, %v1818
        %v1820 = vmul.f32 %v1811, %v1811
        %v1821 = vmul.f32 %v1820, -0.00019511016
        %v1822 = vadd.f32 %v1821, 0.008332121
        %v1823 = vmul.f32 %v1820, %v1822
        %v1824 = vadd.f32 %v1823, -0.16666654
        %v1825 = vmul.f32 %v1820, %v1824
        %v1826 = vadd.f32 %v1825, 1.0
        %v1827 = vmul.f32 %v1826, %v1811
        %vm1828 = vweird.f32 %v267
        %v1829 = vadd.s32 %v1812, 3
        %v1830 = vand.u32 %v1829, 3
        %vm1831 = vcmp.lt.s32.totalorder %v1830, 2
        %vm1832 = vcmp.eq.s32.totalorder %v1830, 0
        %v1833 = vxor.u32 %v1827, 2147483648
        %v1834 = vsel %vm1832, %v1819, %v1833
        %vm1835 = vcmp.eq.s32.totalorder %v1830, 2
        %v1836 = vxor.u32 %v1819, 2147483648
        %v1837 = vsel %vm1835, %v1836, %v1827
        %v1838 = vsel %vm1831, %v1834, %v1837
        %v1839 = vsel %vm1828, nan, %v1838
        %v1840 = vand.u32 2147483647, %v268
        %vm1841 = vcmp.le.f32.partialorder %v1840, 0.7853982
        %vm1842 = vcmp.lt.s32.totalorder %v268, 0
        %v1843 = vand.u32 %v268, 2139095040
        %v1844 = vshrl.u32 %v1843, 23
        %v1845 = vsub.s32 %v1844, 127
        %v1846 = vand.u32 2147483647, %v268
        %v1847 = vand.u32 %v1846, 8388607
        %v1848 = vor.u32 %v1847, 8388608
        %v1849 = vsub.s32 0, %v1848
        %v1850 = vadd.s32 %v1845, 1
        %vm1851 = vcmp.gt.s32.totalorder %v1850, 0
        %v1852 = vsel %vm1851, %v1850, 0
        %v1853 = vshrl.u32 %v1852, 5
        %v1854 = vand.u32 %v1852, 31
        %v1855 = vsub.s32 32, %v1854
        %v1856 = vshrl.u32 683565275, %v1855
        %v1857 = vshll.u32 683565275, %v1854
        %v1858 = vshrl.u32 2475754826, %v1855
        %v1859 = vor.u32 %v1857, %v1858
        %v1860 = vshll.u32 2475754826, %v1854
        %v1861 = vshrl.u32 2131351028, %v1855
        %v1862 = vor.u32 %v1860, %v1861
        %v1863 = vshll.u32 2131351028, %v1854
        %v1864 = vshrl.u32 2102212464, %v1855
        %v1865 = vor.u32 %v1863, %v1864
        %v1866 = vshll.u32 2102212464, %v1854
        %v1867 = vshrl.u32 920167782, %v1855
        %v1868 = vor.u32 %v1866, %v1867
        %v1869 = vshll.u32 920167782, %v1854
        %v1870 = vshrl.u32 1326507024, %v1855
        %v1871 = vor.u32 %v1869, %v1870
        %vm1872 = vcmp.lt.s32.totalorder %v1853, 1
        %vm1873 = vcmp.lt.s32.totalorder %v1853, 2
        %vm1874 = vcmp.lt.s32.totalorder %v1853, 3
        %vm1875 = vcmp.lt.s32.totalorder %v1853, 4
        %v1876 = vsel %vm1872, %v1856, %v1859
        %v1877 = vsel %vm1875, %v1865, 2102212464
        %v1878 = vsel %vm1874, %v1862, %v1877
        %v1879 = vsel %vm1873, %v1876, %v1878
        %v1880 = vsel %vm1872, %v1859, %v1862
        %v1881 = vsel %vm1875, %v1868, 920167782
        %v1882 = vsel %vm1874, %v1865, %v1881
        %v1883 = vsel %vm1873, %v1880, %v1882
        %v1884 = vsel %vm1872, %v1862, %v1865
        %v1885 = vsel %vm1875, %v1871, 1326507024
        %v1886 = vsel %vm1874, %v1868, %v1885
        %v1887 = vsel %vm1873, %v1884, %v1886
        %v1888 = vshll.u32 %v1848, 8
        %v1889 = vand.u32 %v1888, 65535
        %v1890 = vshrl.u32 %v1888, 16
        %v1891 = vand.u32 %v1887, 65535
        %v1892 = vshrl.u32 %v1887, 16
        %v1893 = vmul.u32 %v1889, %v1891
        %v1894 = vmul.u32 %v1889, %v1892
        %v1895 = vmul.u32 %v1890, %v1891
        %v1896 = vmul.u32 %v1890, %v1892
        %v1897 = vshll.u32 %v1894, 16
        %v1898 = vshrl.u32 %v1894, 16
        %v1899 = vshll.u32 %v1895, 16
        %v1900 = vshrl.u32 %v1895, 16
        %vm1901 = vc.u32 %v1893, %v1897
        %v1902 = vsel %vm1901, 1, 0
        %v1903 = vadd.s32 %v1893, %v1897
        %v1904 = vadd.s32 %v1896, %v1902
        %vm1905 = vc.u32 %v1903, %v1899
        %v1906 = vsel %vm1905, 1, 0
        %v1907 = vadd.s32 %v1903, %v1899
        %v1908 = vadd.s32 %v1904, %v1906
        %v1909 = vadd.s32 %v1908, %v1898
        %v1910 = vadd.s32 %v1909, %v1900
        %v1911 = vand.u32 %v1888, 65535
        %v1912 = vshrl.u32 %v1888, 16
        %v1913 = vand.u32 %v1883, 65535
        %v1914 = vshrl.u32 %v1883, 16
        %v1915 = vmul.u32 %v1911, %v1913
        %v1916 = vmul.u32 %v1911, %v1914
        %v1917 = vmul.u32 %v1912, %v1913
        %v1918 = vmul.u32 %v1912, %v1914
        %v1919 = vshll.u32 %v1916, 16
        %v1920 = vshrl.u32 %v1916, 16
        %v1921 = vshll.u32 %v1917, 16
        %v1922 = vshrl.u32 %v1917, 16
        %vm1923 = vc.u32 %v1915, %v1919
        %v1924 = vsel %vm1923, 1, 0
        %v1925 = vadd.s32 %v1915, %v1919
        %v1926 = vadd.s32 %v1918, %v1924
        %vm1927 = vc.u32 %v1925, %v1921
        %v1928 = vsel %vm1927, 1, 0
        %v1929 = vadd.s32 %v1925, %v1921
        %v1930 = vadd.s32 %v1926, %v1928
        %v1931 = vadd.s32 %v1930, %v1920
        %v1932 = vadd.s32 %v1931, %v1922
        %v1933 = vmul.u32 %v1888, %v1879
        %v1934 = vadd.s32 %v1910, %v1929
        %vm1935 = vc.u32 %v1910, %v1929
        %v1936 = vadd.s32 %v1932, 1
        %v1937 = vsel %vm1935, %v1936, %v1932
        %v1938 = vadd.s32 %v1933, %v1937
        %v1939 = vadd.s32 %v1938, 536870912
        %v1940 = vshrl.u32 %v1939, 30
        %v1941 = vshll.u32 %v1940, 30
        %v1942 = vsub.s32 %v1938, %v1941
        %vm1943 = vcmp.lt.s32.totalorder %v1942, 0
        %v1944 = vsub.s32 0, %v1942
        %v1945 = vsel %vm1943, %v1944, %v1942
        %v1946 = vclz %v1945
        %v1947 = vsub.s32 %v1946, 2
        %vm1948 = vcmp.gt.s32.totalorder 0, %v1947
        %v1949 = vsel %vm1948, 0, %v1947
        %v1950 = vsub.s32 32, %v1949
        %v1951 = vshll.u32 %v1942, %v1949
        %v1952 = vshrl.u32 %v1934, %v1950
        %v1953 = vor.u32 %v1951, %v1952
        %v1954 = vsub.s32 4294967266, %v1949
        %v1955 = vadd.s32 %v1954, 127
        %v1956 = vshll.u32 %v1955, 23
        %v1957 = vor.u32 4788187, %v1956
        %v1958 = vand.u32 2147483647, %v1957
        %v1960 = vcvt.s32.f32 %v1953
        %v1961 = vmul.f32 %v1960, %v1958
        %v1962 = vxor.u32 %v1961, 2147483648
        %v1963 = vsel %vm1842, %v1962, %v1961
        %v1964 = vsub.s32 4, %v1940
        %v1965 = vsel %vm1842, %v1964, %v1940
        %v1966 = vsel %vm1841, %v268, %v1963
        %v1967 = vsel %vm1841, 0, %v1965
        %v1968 = vmul.f32 %v1966, %v1966
        %v1969 = vmul.f32 %v1968, -0.001358992
        %v1970 = vadd.f32 %v1969, 0.041655596
        %v1971 = vmul.f32 %v1968, %v1970
        %v1972 = vadd.f32 %v1971, -0.4999988
        %v1973 = vmul.f32 %v1968, %v1972
        %v1974 = vadd.f32 1.0, %v1973
        %v1975 = vmul.f32 %v1966, %v1966
        %v1976 = vmul.f32 %v1975, -0.00019511016
        %v1977 = vadd.f32 %v1976, 0.008332121
        %v1978 = vmul.f32 %v1975, %v1977
        %v1979 = vadd.f32 %v1978, -0.16666654
        %v1980 = vmul.f32 %v1975, %v1979
        %v1981 = vadd.f32 %v1980, 1.0
        %v1982 = vmul.f32 %v1981, %v1966
        %vm1983 = vweird.f32 %v268
        %v1984 = vadd.s32 %v1967, 3
        %v1985 = vand.u32 %v1984, 3
        %vm1986 = vcmp.lt.s32.totalorder %v1985, 2
        %vm1987 = vcmp.eq.s32.totalorder %v1985, 0
        %v1988 = vxor.u32 %v1982, 2147483648
        %v1989 = vsel %vm1987, %v1974, %v1988
        %vm1990 = vcmp.eq.s32.totalorder %v1985, 2
        %v1991 = vxor.u32 %v1974, 2147483648
        %v1992 = vsel %vm1990, %v1991, %v1982
        %v1993 = vsel %vm1986, %v1989, %v1992
        %v1994 = vsel %vm1983, nan, %v1993
        %v1995 = vand.u32 2147483647, %v269
        %vm1996 = vcmp.le.f32.partialorder %v1995, 0.7853982
        %vm1997 = vcmp.lt.s32.totalorder %v269, 0
        %v1998 = vand.u32 %v269, 2139095040
        %v1999 = vshrl.u32 %v1998, 23
        %v2000 = vsub.s32 %v1999, 127
        %v2001 = vand.u32 2147483647, %v269
        %v2002 = vand.u32 %v2001, 8388607
        %v2003 = vor.u32 %v2002, 8388608
        %v2004 = vsub.s32 0, %v2003
        %v2005 = vadd.s32 %v2000, 1
        %vm2006 = vcmp.gt.s32.totalorder %v2005, 0
        %v2007 = vsel %vm2006, %v2005, 0
        %v2008 = vshrl.u32 %v2007, 5
        %v2009 = vand.u32 %v2007, 31
        %v2010 = vsub.s32 32, %v2009
        %v2011 = vshrl.u32 683565275, %v2010
        %v2012 = vshll.u32 683565275, %v2009
        %v2013 = vshrl.u32 2475754826, %v2010
        %v2014 = vor.u32 %v2012, %v2013
        %v2015 = vshll.u32 2475754826, %v2009
        %v2016 = vshrl.u32 2131351028, %v2010
        %v2017 = vor.u32 %v2015, %v2016
        %v2018 = vshll.u32 2131351028, %v2009
        %v2019 = vshrl.u32 2102212464, %v2010
        %v2020 = vor.u32 %v2018, %v2019
        %v2021 = vshll.u32 2102212464, %v2009
        %v2022 = vshrl.u32 920167782, %v2010
        %v2023 = vor.u32 %v2021, %v2022
        %v2024 = vshll.u32 920167782, %v2009
        %v2025 = vshrl.u32 1326507024, %v2010
        %v2026 = vor.u32 %v2024, %v2025
        %vm2027 = vcmp.lt.s32.totalorder %v2008, 1
        %vm2028 = vcmp.lt.s32.totalorder %v2008, 2
        %vm2029 = vcmp.lt.s32.totalorder %v2008, 3
        %vm2030 = vcmp.lt.s32.totalorder %v2008, 4
        %v2031 = vsel %vm2027, %v2011, %v2014
        %v2032 = vsel %vm2030, %v2020, 2102212464
        %v2033 = vsel %vm2029, %v2017, %v2032
        %v2034 = vsel %vm2028, %v2031, %v2033
        %v2035 = vsel %vm2027, %v2014, %v2017
        %v2036 = vsel %vm2030, %v2023, 920167782
        %v2037 = vsel %vm2029, %v2020, %v2036
        %v2038 = vsel %vm2028, %v2035, %v2037
        %v2039 = vsel %vm2027, %v2017, %v2020
        %v2040 = vsel %vm2030, %v2026, 1326507024
        %v2041 = vsel %vm2029, %v2023, %v2040
        %v2042 = vsel %vm2028, %v2039, %v2041
        %v2043 = vshll.u32 %v2003, 8
        %v2044 = vand.u32 %v2043, 65535
        %v2045 = vshrl.u32 %v2043, 16
        %v2046 = vand.u32 %v2042, 65535
        %v2047 = vshrl.u32 %v2042, 16
        %v2048 = vmul.u32 %v2044, %v2046
        %v2049 = vmul.u32 %v2044, %v2047
        %v2050 = vmul.u32 %v2045, %v2046
        %v2051 = vmul.u32 %v2045, %v2047
        %v2052 = vshll.u32 %v2049, 16
        %v2053 = vshrl.u32 %v2049, 16
        %v2054 = vshll.u32 %v2050, 16
        %v2055 = vshrl.u32 %v2050, 16
        %vm2056 = vc.u32 %v2048, %v2052
        %v2057 = vsel %vm2056, 1, 0
        %v2058 = vadd.s32 %v2048, %v2052
        %v2059 = vadd.s32 %v2051, %v2057
        %vm2060 = vc.u32 %v2058, %v2054
        %v2061 = vsel %vm2060, 1, 0
        %v2062 = vadd.s32 %v2058, %v2054
        %v2063 = vadd.s32 %v2059, %v2061
        %v2064 = vadd.s32 %v2063, %v2053
        %v2065 = vadd.s32 %v2064, %v2055
        %v2066 = vand.u32 %v2043, 65535
        %v2067 = vshrl.u32 %v2043, 16
        %v2068 = vand.u32 %v2038, 65535
        %v2069 = vshrl.u32 %v2038, 16
        %v2070 = vmul.u32 %v2066, %v2068
        %v2071 = vmul.u32 %v2066, %v2069
        %v2072 = vmul.u32 %v2067, %v2068
        %v2073 = vmul.u32 %v2067, %v2069
        %v2074 = vshll.u32 %v2071, 16
        %v2075 = vshrl.u32 %v2071, 16
        %v2076 = vshll.u32 %v2072, 16
        %v2077 = vshrl.u32 %v2072, 16
        %vm2078 = vc.u32 %v2070, %v2074
        %v2079 = vsel %vm2078, 1, 0
        %v2080 = vadd.s32 %v2070, %v2074
        %v2081 = vadd.s32 %v2073, %v2079
        %vm2082 = vc.u32 %v2080, %v2076
        %v2083 = vsel %vm2082, 1, 0
        %v2084 = vadd.s32 %v2080, %v2076
        %v2085 = vadd.s32 %v2081, %v2083
        %v2086 = vadd.s32 %v2085, %v2075
        %v2087 = vadd.s32 %v2086, %v2077
        %v2088 = vmul.u32 %v2043, %v2034
        %v2089 = vadd.s32 %v2065, %v2084
        %vm2090 = vc.u32 %v2065, %v2084
        %v2091 = vadd.s32 %v2087, 1
        %v2092 = vsel %vm2090, %v2091, %v2087
        %v2093 = vadd.s32 %v2088, %v2092
        %v2094 = vadd.s32 %v2093, 536870912
        %v2095 = vshrl.u32 %v2094, 30
        %v2096 = vshll.u32 %v2095, 30
        %v2097 = vsub.s32 %v2093, %v2096
        %vm2098 = vcmp.lt.s32.totalorder %v2097, 0
        %v2099 = vsub.s32 0, %v2097
        %v2100 = vsel %vm2098, %v2099, %v2097
        %v2101 = vclz %v2100
        %v2102 = vsub.s32 %v2101, 2
        %vm2103 = vcmp.gt.s32.totalorder 0, %v2102
        %v2104 = vsel %vm2103, 0, %v2102
        %v2105 = vsub.s32 32, %v2104
        %v2106 = vshll.u32 %v2097, %v2104
        %v2107 = vshrl.u32 %v2089, %v2105
        %v2108 = vor.u32 %v2106, %v2107
        %v2109 = vsub.s32 4294967266, %v2104
        %v2110 = vadd.s32 %v2109, 127
        %v2111 = vshll.u32 %v2110, 23
        %v2112 = vor.u32 4788187, %v2111
        %v2113 = vand.u32 2147483647, %v2112
        %v2115 = vcvt.s32.f32 %v2108
        %v2116 = vmul.f32 %v2115, %v2113
        %v2117 = vxor.u32 %v2116, 2147483648
        %v2118 = vsel %vm1997, %v2117, %v2116
        %v2119 = vsub.s32 4, %v2095
        %v2120 = vsel %vm1997, %v2119, %v2095
        %v2121 = vsel %vm1996, %v269, %v2118
        %v2122 = vsel %vm1996, 0, %v2120
        %v2123 = vmul.f32 %v2121, %v2121
        %v2124 = vmul.f32 %v2123, -0.001358992
        %v2125 = vadd.f32 %v2124, 0.041655596
        %v2126 = vmul.f32 %v2123, %v2125
        %v2127 = vadd.f32 %v2126, -0.4999988
        %v2128 = vmul.f32 %v2123, %v2127
        %v2129 = vadd.f32 1.0, %v2128
        %v2130 = vmul.f32 %v2121, %v2121
        %v2131 = vmul.f32 %v2130, -0.00019511016
        %v2132 = vadd.f32 %v2131, 0.008332121
        %v2133 = vmul.f32 %v2130, %v2132
        %v2134 = vadd.f32 %v2133, -0.16666654
        %v2135 = vmul.f32 %v2130, %v2134
        %v2136 = vadd.f32 %v2135, 1.0
        %v2137 = vmul.f32 %v2136, %v2121
        %vm2138 = vweird.f32 %v269
        %v2139 = vadd.s32 %v2122, 3
        %v2140 = vand.u32 %v2139, 3
        %vm2141 = vcmp.lt.s32.totalorder %v2140, 2
        %vm2142 = vcmp.eq.s32.totalorder %v2140, 0
        %v2143 = vxor.u32 %v2137, 2147483648
        %v2144 = vsel %vm2142, %v2129, %v2143
        %vm2145 = vcmp.eq.s32.totalorder %v2140, 2
        %v2146 = vxor.u32 %v2129, 2147483648
        %v2147 = vsel %vm2145, %v2146, %v2137
        %v2148 = vsel %vm2141, %v2144, %v2147
        %v2149 = vsel %vm2138, nan, %v2148
        %v2150 = vand.u32 2147483647, %v270
        %vm2151 = vcmp.le.f32.partialorder %v2150, 0.7853982
        %vm2152 = vcmp.lt.s32.totalorder %v270, 0
        %v2153 = vand.u32 %v270, 2139095040
        %v2154 = vshrl.u32 %v2153, 23
        %v2155 = vsub.s32 %v2154, 127
        %v2156 = vand.u32 2147483647, %v270
        %v2157 = vand.u32 %v2156, 8388607
        %v2158 = vor.u32 %v2157, 8388608
        %v2159 = vsub.s32 0, %v2158
        %v2160 = vadd.s32 %v2155, 1
        %vm2161 = vcmp.gt.s32.totalorder %v2160, 0
        %v2162 = vsel %vm2161, %v2160, 0
        %v2163 = vshrl.u32 %v2162, 5
        %v2164 = vand.u32 %v2162, 31
        %v2165 = vsub.s32 32, %v2164
        %v2166 = vshrl.u32 683565275, %v2165
        %v2167 = vshll.u32 683565275, %v2164
        %v2168 = vshrl.u32 2475754826, %v2165
        %v2169 = vor.u32 %v2167, %v2168
        %v2170 = vshll.u32 2475754826, %v2164
        %v2171 = vshrl.u32 2131351028, %v2165
        %v2172 = vor.u32 %v2170, %v2171
        %v2173 = vshll.u32 2131351028, %v2164
        %v2174 = vshrl.u32 2102212464, %v2165
        %v2175 = vor.u32 %v2173, %v2174
        %v2176 = vshll.u32 2102212464, %v2164
        %v2177 = vshrl.u32 920167782, %v2165
        %v2178 = vor.u32 %v2176, %v2177
        %v2179 = vshll.u32 920167782, %v2164
        %v2180 = vshrl.u32 1326507024, %v2165
        %v2181 = vor.u32 %v2179, %v2180
        %vm2182 = vcmp.lt.s32.totalorder %v2163, 1
        %vm2183 = vcmp.lt.s32.totalorder %v2163, 2
        %vm2184 = vcmp.lt.s32.totalorder %v2163, 3
        %vm2185 = vcmp.lt.s32.totalorder %v2163, 4
        %v2186 = vsel %vm2182, %v2166, %v2169
        %v2187 = vsel %vm2185, %v2175, 2102212464
        %v2188 = vsel %vm2184, %v2172, %v2187
        %v2189 = vsel %vm2183, %v2186, %v2188
        %v2190 = vsel %vm2182, %v2169, %v2172
        %v2191 = vsel %vm2185, %v2178, 920167782
        %v2192 = vsel %vm2184, %v2175, %v2191
        %v2193 = vsel %vm2183, %v2190, %v2192
        %v2194 = vsel %vm2182, %v2172, %v2175
        %v2195 = vsel %vm2185, %v2181, 1326507024
        %v2196 = vsel %vm2184, %v2178, %v2195
        %v2197 = vsel %vm2183, %v2194, %v2196
        %v2198 = vshll.u32 %v2158, 8
        %v2199 = vand.u32 %v2198, 65535
        %v2200 = vshrl.u32 %v2198, 16
        %v2201 = vand.u32 %v2197, 65535
        %v2202 = vshrl.u32 %v2197, 16
        %v2203 = vmul.u32 %v2199, %v2201
        %v2204 = vmul.u32 %v2199, %v2202
        %v2205 = vmul.u32 %v2200, %v2201
        %v2206 = vmul.u32 %v2200, %v2202
        %v2207 = vshll.u32 %v2204, 16
        %v2208 = vshrl.u32 %v2204, 16
        %v2209 = vshll.u32 %v2205, 16
        %v2210 = vshrl.u32 %v2205, 16
        %vm2211 = vc.u32 %v2203, %v2207
        %v2212 = vsel %vm2211, 1, 0
        %v2213 = vadd.s32 %v2203, %v2207
        %v2214 = vadd.s32 %v2206, %v2212
        %vm2215 = vc.u32 %v2213, %v2209
        %v2216 = vsel %vm2215, 1, 0
        %v2217 = vadd.s32 %v2213, %v2209
        %v2218 = vadd.s32 %v2214, %v2216
        %v2219 = vadd.s32 %v2218, %v2208
        %v2220 = vadd.s32 %v2219, %v2210
        %v2221 = vand.u32 %v2198, 65535
        %v2222 = vshrl.u32 %v2198, 16
        %v2223 = vand.u32 %v2193, 65535
        %v2224 = vshrl.u32 %v2193, 16
        %v2225 = vmul.u32 %v2221, %v2223
        %v2226 = vmul.u32 %v2221, %v2224
        %v2227 = vmul.u32 %v2222, %v2223
        %v2228 = vmul.u32 %v2222, %v2224
        %v2229 = vshll.u32 %v2226, 16
        %v2230 = vshrl.u32 %v2226, 16
        %v2231 = vshll.u32 %v2227, 16
        %v2232 = vshrl.u32 %v2227, 16
        %vm2233 = vc.u32 %v2225, %v2229
        %v2234 = vsel %vm2233, 1, 0
        %v2235 = vadd.s32 %v2225, %v2229
        %v2236 = vadd.s32 %v2228, %v2234
        %vm2237 = vc.u32 %v2235, %v2231
        %v2238 = vsel %vm2237, 1, 0
        %v2239 = vadd.s32 %v2235, %v2231
        %v2240 = vadd.s32 %v2236, %v2238
        %v2241 = vadd.s32 %v2240, %v2230
        %v2242 = vadd.s32 %v2241, %v2232
        %v2243 = vmul.u32 %v2198, %v2189
        %v2244 = vadd.s32 %v2220, %v2239
        %vm2245 = vc.u32 %v2220, %v2239
        %v2246 = vadd.s32 %v2242, 1
        %v2247 = vsel %vm2245, %v2246, %v2242
        %v2248 = vadd.s32 %v2243, %v2247
        %v2249 = vadd.s32 %v2248, 536870912
        %v2250 = vshrl.u32 %v2249, 30
        %v2251 = vshll.u32 %v2250, 30
        %v2252 = vsub.s32 %v2248, %v2251
        %vm2253 = vcmp.lt.s32.totalorder %v2252, 0
        %v2254 = vsub.s32 0, %v2252
        %v2255 = vsel %vm2253, %v2254, %v2252
        %v2256 = vclz %v2255
        %v2257 = vsub.s32 %v2256, 2
        %vm2258 = vcmp.gt.s32.totalorder 0, %v2257
        %v2259 = vsel %vm2258, 0, %v2257
        %v2260 = vsub.s32 32, %v2259
        %v2261 = vshll.u32 %v2252, %v2259
        %v2262 = vshrl.u32 %v2244, %v2260
        %v2263 = vor.u32 %v2261, %v2262
        %v2264 = vsub.s32 4294967266, %v2259
        %v2265 = vadd.s32 %v2264, 127
        %v2266 = vshll.u32 %v2265, 23
        %v2267 = vor.u32 4788187, %v2266
        %v2268 = vand.u32 2147483647, %v2267
        %v2270 = vcvt.s32.f32 %v2263
        %v2271 = vmul.f32 %v2270, %v2268
        %v2272 = vxor.u32 %v2271, 2147483648
        %v2273 = vsel %vm2152, %v2272, %v2271
        %v2274 = vsub.s32 4, %v2250
        %v2275 = vsel %vm2152, %v2274, %v2250
        %v2276 = vsel %vm2151, %v270, %v2273
        %v2277 = vsel %vm2151, 0, %v2275
        %v2278 = vmul.f32 %v2276, %v2276
        %v2279 = vmul.f32 %v2278, -0.001358992
        %v2280 = vadd.f32 %v2279, 0.041655596
        %v2281 = vmul.f32 %v2278, %v2280
        %v2282 = vadd.f32 %v2281, -0.4999988
        %v2283 = vmul.f32 %v2278, %v2282
        %v2284 = vadd.f32 1.0, %v2283
        %v2285 = vmul.f32 %v2276, %v2276
        %v2286 = vmul.f32 %v2285, -0.00019511016
        %v2287 = vadd.f32 %v2286, 0.008332121
        %v2288 = vmul.f32 %v2285, %v2287
        %v2289 = vadd.f32 %v2288, -0.16666654
        %v2290 = vmul.f32 %v2285, %v2289
        %v2291 = vadd.f32 %v2290, 1.0
        %v2292 = vmul.f32 %v2291, %v2276
        %vm2293 = vweird.f32 %v270
        %v2294 = vadd.s32 %v2277, 3
        %v2295 = vand.u32 %v2294, 3
        %vm2296 = vcmp.lt.s32.totalorder %v2295, 2
        %vm2297 = vcmp.eq.s32.totalorder %v2295, 0
        %v2298 = vxor.u32 %v2292, 2147483648
        %v2299 = vsel %vm2297, %v2284, %v2298
        %vm2300 = vcmp.eq.s32.totalorder %v2295, 2
        %v2301 = vxor.u32 %v2284, 2147483648
        %v2302 = vsel %vm2300, %v2301, %v2292
        %v2303 = vsel %vm2296, %v2299, %v2302
        %v2304 = vsel %vm2293, nan, %v2303
        %v2305 = vand.u32 2147483647, %v271
        %vm2306 = vcmp.le.f32.partialorder %v2305, 0.7853982
        %vm2307 = vcmp.lt.s32.totalorder %v271, 0
        %v2308 = vand.u32 %v271, 2139095040
        %v2309 = vshrl.u32 %v2308, 23
        %v2310 = vsub.s32 %v2309, 127
        %v2311 = vand.u32 2147483647, %v271
        %v2312 = vand.u32 %v2311, 8388607
        %v2313 = vor.u32 %v2312, 8388608
        %v2314 = vsub.s32 0, %v2313
        %v2315 = vadd.s32 %v2310, 1
        %vm2316 = vcmp.gt.s32.totalorder %v2315, 0
        %v2317 = vsel %vm2316, %v2315, 0
        %v2318 = vshrl.u32 %v2317, 5
        %v2319 = vand.u32 %v2317, 31
        %v2320 = vsub.s32 32, %v2319
        %v2321 = vshrl.u32 683565275, %v2320
        %v2322 = vshll.u32 683565275, %v2319
        %v2323 = vshrl.u32 2475754826, %v2320
        %v2324 = vor.u32 %v2322, %v2323
        %v2325 = vshll.u32 2475754826, %v2319
        %v2326 = vshrl.u32 2131351028, %v2320
        %v2327 = vor.u32 %v2325, %v2326
        %v2328 = vshll.u32 2131351028, %v2319
        %v2329 = vshrl.u32 2102212464, %v2320
        %v2330 = vor.u32 %v2328, %v2329
        %v2331 = vshll.u32 2102212464, %v2319
        %v2332 = vshrl.u32 920167782, %v2320
        %v2333 = vor.u32 %v2331, %v2332
        %v2334 = vshll.u32 920167782, %v2319
        %v2335 = vshrl.u32 1326507024, %v2320
        %v2336 = vor.u32 %v2334, %v2335
        %vm2337 = vcmp.lt.s32.totalorder %v2318, 1
        %vm2338 = vcmp.lt.s32.totalorder %v2318, 2
        %vm2339 = vcmp.lt.s32.totalorder %v2318, 3
        %vm2340 = vcmp.lt.s32.totalorder %v2318, 4
        %v2341 = vsel %vm2337, %v2321, %v2324
        %v2342 = vsel %vm2340, %v2330, 2102212464
        %v2343 = vsel %vm2339, %v2327, %v2342
        %v2344 = vsel %vm2338, %v2341, %v2343
        %v2345 = vsel %vm2337, %v2324, %v2327
        %v2346 = vsel %vm2340, %v2333, 920167782
        %v2347 = vsel %vm2339, %v2330, %v2346
        %v2348 = vsel %vm2338, %v2345, %v2347
        %v2349 = vsel %vm2337, %v2327, %v2330
        %v2350 = vsel %vm2340, %v2336, 1326507024
        %v2351 = vsel %vm2339, %v2333, %v2350
        %v2352 = vsel %vm2338, %v2349, %v2351
        %v2353 = vshll.u32 %v2313, 8
        %v2354 = vand.u32 %v2353, 65535
        %v2355 = vshrl.u32 %v2353, 16
        %v2356 = vand.u32 %v2352, 65535
        %v2357 = vshrl.u32 %v2352, 16
        %v2358 = vmul.u32 %v2354, %v2356
        %v2359 = vmul.u32 %v2354, %v2357
        %v2360 = vmul.u32 %v2355, %v2356
        %v2361 = vmul.u32 %v2355, %v2357
        %v2362 = vshll.u32 %v2359, 16
        %v2363 = vshrl.u32 %v2359, 16
        %v2364 = vshll.u32 %v2360, 16
        %v2365 = vshrl.u32 %v2360, 16
        %vm2366 = vc.u32 %v2358, %v2362
        %v2367 = vsel %vm2366, 1, 0
        %v2368 = vadd.s32 %v2358, %v2362
        %v2369 = vadd.s32 %v2361, %v2367
        %vm2370 = vc.u32 %v2368, %v2364
        %v2371 = vsel %vm2370, 1, 0
        %v2372 = vadd.s32 %v2368, %v2364
        %v2373 = vadd.s32 %v2369, %v2371
        %v2374 = vadd.s32 %v2373, %v2363
        %v2375 = vadd.s32 %v2374, %v2365
        %v2376 = vand.u32 %v2353, 65535
        %v2377 = vshrl.u32 %v2353, 16
        %v2378 = vand.u32 %v2348, 65535
        %v2379 = vshrl.u32 %v2348, 16
        %v2380 = vmul.u32 %v2376, %v2378
        %v2381 = vmul.u32 %v2376, %v2379
        %v2382 = vmul.u32 %v2377, %v2378
        %v2383 = vmul.u32 %v2377, %v2379
        %v2384 = vshll.u32 %v2381, 16
        %v2385 = vshrl.u32 %v2381, 16
        %v2386 = vshll.u32 %v2382, 16
        %v2387 = vshrl.u32 %v2382, 16
        %vm2388 = vc.u32 %v2380, %v2384
        %v2389 = vsel %vm2388, 1, 0
        %v2390 = vadd.s32 %v2380, %v2384
        %v2391 = vadd.s32 %v2383, %v2389
        %vm2392 = vc.u32 %v2390, %v2386
        %v2393 = vsel %vm2392, 1, 0
        %v2394 = vadd.s32 %v2390, %v2386
        %v2395 = vadd.s32 %v2391, %v2393
        %v2396 = vadd.s32 %v2395, %v2385
        %v2397 = vadd.s32 %v2396, %v2387
        %v2398 = vmul.u32 %v2353, %v2344
        %v2399 = vadd.s32 %v2375, %v2394
        %vm2400 = vc.u32 %v2375, %v2394
        %v2401 = vadd.s32 %v2397, 1
        %v2402 = vsel %vm2400, %v2401, %v2397
        %v2403 = vadd.s32 %v2398, %v2402
        %v2404 = vadd.s32 %v2403, 536870912
        %v2405 = vshrl.u32 %v2404, 30
        %v2406 = vshll.u32 %v2405, 30
        %v2407 = vsub.s32 %v2403, %v2406
        %vm2408 = vcmp.lt.s32.totalorder %v2407, 0
        %v2409 = vsub.s32 0, %v2407
        %v2410 = vsel %vm2408, %v2409, %v2407
        %v2411 = vclz %v2410
        %v2412 = vsub.s32 %v2411, 2
        %vm2413 = vcmp.gt.s32.totalorder 0, %v2412
        %v2414 = vsel %vm2413, 0, %v2412
        %v2415 = vsub.s32 32, %v2414
        %v2416 = vshll.u32 %v2407, %v2414
        %v2417 = vshrl.u32 %v2399, %v2415
        %v2418 = vor.u32 %v2416, %v2417
        %v2419 = vsub.s32 4294967266, %v2414
        %v2420 = vadd.s32 %v2419, 127
        %v2421 = vshll.u32 %v2420, 23
        %v2422 = vor.u32 4788187, %v2421
        %v2423 = vand.u32 2147483647, %v2422
        %v2425 = vcvt.s32.f32 %v2418
        %v2426 = vmul.f32 %v2425, %v2423
        %v2427 = vxor.u32 %v2426, 2147483648
        %v2428 = vsel %vm2307, %v2427, %v2426
        %v2429 = vsub.s32 4, %v2405
        %v2430 = vsel %vm2307, %v2429, %v2405
        %v2431 = vsel %vm2306, %v271, %v2428
        %v2432 = vsel %vm2306, 0, %v2430
        %v2433 = vmul.f32 %v2431, %v2431
        %v2434 = vmul.f32 %v2433, -0.001358992
        %v2435 = vadd.f32 %v2434, 0.041655596
        %v2436 = vmul.f32 %v2433, %v2435
        %v2437 = vadd.f32 %v2436, -0.4999988
        %v2438 = vmul.f32 %v2433, %v2437
        %v2439 = vadd.f32 1.0, %v2438
        %v2440 = vmul.f32 %v2431, %v2431
        %v2441 = vmul.f32 %v2440, -0.00019511016
        %v2442 = vadd.f32 %v2441, 0.008332121
        %v2443 = vmul.f32 %v2440, %v2442
        %v2444 = vadd.f32 %v2443, -0.16666654
        %v2445 = vmul.f32 %v2440, %v2444
        %v2446 = vadd.f32 %v2445, 1.0
        %v2447 = vmul.f32 %v2446, %v2431
        %vm2448 = vweird.f32 %v271
        %v2449 = vadd.s32 %v2432, 3
        %v2450 = vand.u32 %v2449, 3
        %vm2451 = vcmp.lt.s32.totalorder %v2450, 2
        %vm2452 = vcmp.eq.s32.totalorder %v2450, 0
        %v2453 = vxor.u32 %v2447, 2147483648
        %v2454 = vsel %vm2452, %v2439, %v2453
        %vm2455 = vcmp.eq.s32.totalorder %v2450, 2
        %v2456 = vxor.u32 %v2439, 2147483648
        %v2457 = vsel %vm2455, %v2456, %v2447
        %v2458 = vsel %vm2451, %v2454, %v2457
        %v2459 = vsel %vm2448, nan, %v2458
        %v2460 = vand.u32 2147483647, %v272
        %vm2461 = vcmp.le.f32.partialorder %v2460, 0.7853982
        %vm2462 = vcmp.lt.s32.totalorder %v272, 0
        %v2463 = vand.u32 %v272, 2139095040
        %v2464 = vshrl.u32 %v2463, 23
        %v2465 = vsub.s32 %v2464, 127
        %v2466 = vand.u32 2147483647, %v272
        %v2467 = vand.u32 %v2466, 8388607
        %v2468 = vor.u32 %v2467, 8388608
        %v2469 = vsub.s32 0, %v2468
        %v2470 = vadd.s32 %v2465, 1
        %vm2471 = vcmp.gt.s32.totalorder %v2470, 0
        %v2472 = vsel %vm2471, %v2470, 0
        %v2473 = vshrl.u32 %v2472, 5
        %v2474 = vand.u32 %v2472, 31
        %v2475 = vsub.s32 32, %v2474
        %v2476 = vshrl.u32 683565275, %v2475
        %v2477 = vshll.u32 683565275, %v2474
        %v2478 = vshrl.u32 2475754826, %v2475
        %v2479 = vor.u32 %v2477, %v2478
        %v2480 = vshll.u32 2475754826, %v2474
        %v2481 = vshrl.u32 2131351028, %v2475
        %v2482 = vor.u32 %v2480, %v2481
        %v2483 = vshll.u32 2131351028, %v2474
        %v2484 = vshrl.u32 2102212464, %v2475
        %v2485 = vor.u32 %v2483, %v2484
        %v2486 = vshll.u32 2102212464, %v2474
        %v2487 = vshrl.u32 920167782, %v2475
        %v2488 = vor.u32 %v2486, %v2487
        %v2489 = vshll.u32 920167782, %v2474
        %v2490 = vshrl.u32 1326507024, %v2475
        %v2491 = vor.u32 %v2489, %v2490
        %vm2492 = vcmp.lt.s32.totalorder %v2473, 1
        %vm2493 = vcmp.lt.s32.totalorder %v2473, 2
        %vm2494 = vcmp.lt.s32.totalorder %v2473, 3
        %vm2495 = vcmp.lt.s32.totalorder %v2473, 4
        %v2496 = vsel %vm2492, %v2476, %v2479
        %v2497 = vsel %vm2495, %v2485, 2102212464
        %v2498 = vsel %vm2494, %v2482, %v2497
        %v2499 = vsel %vm2493, %v2496, %v2498
        %v2500 = vsel %vm2492, %v2479, %v2482
        %v2501 = vsel %vm2495, %v2488, 920167782
        %v2502 = vsel %vm2494, %v2485, %v2501
        %v2503 = vsel %vm2493, %v2500, %v2502
        %v2504 = vsel %vm2492, %v2482, %v2485
        %v2505 = vsel %vm2495, %v2491, 1326507024
        %v2506 = vsel %vm2494, %v2488, %v2505
        %v2507 = vsel %vm2493, %v2504, %v2506
        %v2508 = vshll.u32 %v2468, 8
        %v2509 = vand.u32 %v2508, 65535
        %v2510 = vshrl.u32 %v2508, 16
        %v2511 = vand.u32 %v2507, 65535
        %v2512 = vshrl.u32 %v2507, 16
        %v2513 = vmul.u32 %v2509, %v2511
        %v2514 = vmul.u32 %v2509, %v2512
        %v2515 = vmul.u32 %v2510, %v2511
        %v2516 = vmul.u32 %v2510, %v2512
        %v2517 = vshll.u32 %v2514, 16
        %v2518 = vshrl.u32 %v2514, 16
        %v2519 = vshll.u32 %v2515, 16
        %v2520 = vshrl.u32 %v2515, 16
        %vm2521 = vc.u32 %v2513, %v2517
        %v2522 = vsel %vm2521, 1, 0
        %v2523 = vadd.s32 %v2513, %v2517
        %v2524 = vadd.s32 %v2516, %v2522
        %vm2525 = vc.u32 %v2523, %v2519
        %v2526 = vsel %vm2525, 1, 0
        %v2527 = vadd.s32 %v2523, %v2519
        %v2528 = vadd.s32 %v2524, %v2526
        %v2529 = vadd.s32 %v2528, %v2518
        %v2530 = vadd.s32 %v2529, %v2520
        %v2531 = vand.u32 %v2508, 65535
        %v2532 = vshrl.u32 %v2508, 16
        %v2533 = vand.u32 %v2503, 65535
        %v2534 = vshrl.u32 %v2503, 16
        %v2535 = vmul.u32 %v2531, %v2533
        %v2536 = vmul.u32 %v2531, %v2534
        %v2537 = vmul.u32 %v2532, %v2533
        %v2538 = vmul.u32 %v2532, %v2534
        %v2539 = vshll.u32 %v2536, 16
        %v2540 = vshrl.u32 %v2536, 16
        %v2541 = vshll.u32 %v2537, 16
        %v2542 = vshrl.u32 %v2537, 16
        %vm2543 = vc.u32 %v2535, %v2539
        %v2544 = vsel %vm2543, 1, 0
        %v2545 = vadd.s32 %v2535, %v2539
        %v2546 = vadd.s32 %v2538, %v2544
        %vm2547 = vc.u32 %v2545, %v2541
        %v2548 = vsel %vm2547, 1, 0
        %v2549 = vadd.s32 %v2545, %v2541
        %v2550 = vadd.s32 %v2546, %v2548
        %v2551 = vadd.s32 %v2550, %v2540
        %v2552 = vadd.s32 %v2551, %v2542
        %v2553 = vmul.u32 %v2508, %v2499
        %v2554 = vadd.s32 %v2530, %v2549
        %vm2555 = vc.u32 %v2530, %v2549
        %v2556 = vadd.s32 %v2552, 1
        %v2557 = vsel %vm2555, %v2556, %v2552
        %v2558 = vadd.s32 %v2553, %v2557
        %v2559 = vadd.s32 %v2558, 536870912
        %v2560 = vshrl.u32 %v2559, 30
        %v2561 = vshll.u32 %v2560, 30
        %v2562 = vsub.s32 %v2558, %v2561
        %vm2563 = vcmp.lt.s32.totalorder %v2562, 0
        %v2564 = vsub.s32 0, %v2562
        %v2565 = vsel %vm2563, %v2564, %v2562
        %v2566 = vclz %v2565
        %v2567 = vsub.s32 %v2566, 2
        %vm2568 = vcmp.gt.s32.totalorder 0, %v2567
        %v2569 = vsel %vm2568, 0, %v2567
        %v2570 = vsub.s32 32, %v2569
        %v2571 = vshll.u32 %v2562, %v2569
        %v2572 = vshrl.u32 %v2554, %v2570
        %v2573 = vor.u32 %v2571, %v2572
        %v2574 = vsub.s32 4294967266, %v2569
        %v2575 = vadd.s32 %v2574, 127
        %v2576 = vshll.u32 %v2575, 23
        %v2577 = vor.u32 4788187, %v2576
        %v2578 = vand.u32 2147483647, %v2577
        %v2580 = vcvt.s32.f32 %v2573
        %v2581 = vmul.f32 %v2580, %v2578
        %v2582 = vxor.u32 %v2581, 2147483648
        %v2583 = vsel %vm2462, %v2582, %v2581
        %v2584 = vsub.s32 4, %v2560
        %v2585 = vsel %vm2462, %v2584, %v2560
        %v2586 = vsel %vm2461, %v272, %v2583
        %v2587 = vsel %vm2461, 0, %v2585
        %v2588 = vmul.f32 %v2586, %v2586
        %v2589 = vmul.f32 %v2588, -0.001358992
        %v2590 = vadd.f32 %v2589, 0.041655596
        %v2591 = vmul.f32 %v2588, %v2590
        %v2592 = vadd.f32 %v2591, -0.4999988
        %v2593 = vmul.f32 %v2588, %v2592
        %v2594 = vadd.f32 1.0, %v2593
        %v2595 = vmul.f32 %v2586, %v2586
        %v2596 = vmul.f32 %v2595, -0.00019511016
        %v2597 = vadd.f32 %v2596, 0.008332121
        %v2598 = vmul.f32 %v2595, %v2597
        %v2599 = vadd.f32 %v2598, -0.16666654
        %v2600 = vmul.f32 %v2595, %v2599
        %v2601 = vadd.f32 %v2600, 1.0
        %v2602 = vmul.f32 %v2601, %v2586
        %vm2603 = vweird.f32 %v272
        %v2604 = vadd.s32 %v2587, 3
        %v2605 = vand.u32 %v2604, 3
        %vm2606 = vcmp.lt.s32.totalorder %v2605, 2
        %vm2607 = vcmp.eq.s32.totalorder %v2605, 0
        %v2608 = vxor.u32 %v2602, 2147483648
        %v2609 = vsel %vm2607, %v2594, %v2608
        %vm2610 = vcmp.eq.s32.totalorder %v2605, 2
        %v2611 = vxor.u32 %v2594, 2147483648
        %v2612 = vsel %vm2610, %v2611, %v2602
        %v2613 = vsel %vm2606, %v2609, %v2612
        %v2614 = vsel %vm2603, nan, %v2613
        %v2615 = vand.u32 2147483647, %v273
        %vm2616 = vcmp.le.f32.partialorder %v2615, 0.7853982
        %vm2617 = vcmp.lt.s32.totalorder %v273, 0
        %v2618 = vand.u32 %v273, 2139095040
        %v2619 = vshrl.u32 %v2618, 23
        %v2620 = vsub.s32 %v2619, 127
        %v2621 = vand.u32 2147483647, %v273
        %v2622 = vand.u32 %v2621, 8388607
        %v2623 = vor.u32 %v2622, 8388608
        %v2624 = vsub.s32 0, %v2623
        %v2625 = vadd.s32 %v2620, 1
        %vm2626 = vcmp.gt.s32.totalorder %v2625, 0
        %v2627 = vsel %vm2626, %v2625, 0
        %v2628 = vshrl.u32 %v2627, 5
        %v2629 = vand.u32 %v2627, 31
        %v2630 = vsub.s32 32, %v2629
        %v2631 = vshrl.u32 683565275, %v2630
        %v2632 = vshll.u32 683565275, %v2629
        %v2633 = vshrl.u32 2475754826, %v2630
        %v2634 = vor.u32 %v2632, %v2633
        %v2635 = vshll.u32 2475754826, %v2629
        %v2636 = vshrl.u32 2131351028, %v2630
        %v2637 = vor.u32 %v2635, %v2636
        %v2638 = vshll.u32 2131351028, %v2629
        %v2639 = vshrl.u32 2102212464, %v2630
        %v2640 = vor.u32 %v2638, %v2639
        %v2641 = vshll.u32 2102212464, %v2629
        %v2642 = vshrl.u32 920167782, %v2630
        %v2643 = vor.u32 %v2641, %v2642
        %v2644 = vshll.u32 920167782, %v2629
        %v2645 = vshrl.u32 1326507024, %v2630
        %v2646 = vor.u32 %v2644, %v2645
        %vm2647 = vcmp.lt.s32.totalorder %v2628, 1
        %vm2648 = vcmp.lt.s32.totalorder %v2628, 2
        %vm2649 = vcmp.lt.s32.totalorder %v2628, 3
        %vm2650 = vcmp.lt.s32.totalorder %v2628, 4
        %v2651 = vsel %vm2647, %v2631, %v2634
        %v2652 = vsel %vm2650, %v2640, 2102212464
        %v2653 = vsel %vm2649, %v2637, %v2652
        %v2654 = vsel %vm2648, %v2651, %v2653
        %v2655 = vsel %vm2647, %v2634, %v2637
        %v2656 = vsel %vm2650, %v2643, 920167782
        %v2657 = vsel %vm2649, %v2640, %v2656
        %v2658 = vsel %vm2648, %v2655, %v2657
        %v2659 = vsel %vm2647, %v2637, %v2640
        %v2660 = vsel %vm2650, %v2646, 1326507024
        %v2661 = vsel %vm2649, %v2643, %v2660
        %v2662 = vsel %vm2648, %v2659, %v2661
        %v2663 = vshll.u32 %v2623, 8
        %v2664 = vand.u32 %v2663, 65535
        %v2665 = vshrl.u32 %v2663, 16
        %v2666 = vand.u32 %v2662, 65535
        %v2667 = vshrl.u32 %v2662, 16
        %v2668 = vmul.u32 %v2664, %v2666
        %v2669 = vmul.u32 %v2664, %v2667
        %v2670 = vmul.u32 %v2665, %v2666
        %v2671 = vmul.u32 %v2665, %v2667
        %v2672 = vshll.u32 %v2669, 16
        %v2673 = vshrl.u32 %v2669, 16
        %v2674 = vshll.u32 %v2670, 16
        %v2675 = vshrl.u32 %v2670, 16
        %vm2676 = vc.u32 %v2668, %v2672
        %v2677 = vsel %vm2676, 1, 0
        %v2678 = vadd.s32 %v2668, %v2672
        %v2679 = vadd.s32 %v2671, %v2677
        %vm2680 = vc.u32 %v2678, %v2674
        %v2681 = vsel %vm2680, 1, 0
        %v2682 = vadd.s32 %v2678, %v2674
        %v2683 = vadd.s32 %v2679, %v2681
        %v2684 = vadd.s32 %v2683, %v2673
        %v2685 = vadd.s32 %v2684, %v2675
        %v2686 = vand.u32 %v2663, 65535
        %v2687 = vshrl.u32 %v2663, 16
        %v2688 = vand.u32 %v2658, 65535
        %v2689 = vshrl.u32 %v2658, 16
        %v2690 = vmul.u32 %v2686, %v2688
        %v2691 = vmul.u32 %v2686, %v2689
        %v2692 = vmul.u32 %v2687, %v2688
        %v2693 = vmul.u32 %v2687, %v2689
        %v2694 = vshll.u32 %v2691, 16
        %v2695 = vshrl.u32 %v2691, 16
        %v2696 = vshll.u32 %v2692, 16
        %v2697 = vshrl.u32 %v2692, 16
        %vm2698 = vc.u32 %v2690, %v2694
        %v2699 = vsel %vm2698, 1, 0
        %v2700 = vadd.s32 %v2690, %v2694
        %v2701 = vadd.s32 %v2693, %v2699
        %vm2702 = vc.u32 %v2700, %v2696
        %v2703 = vsel %vm2702, 1, 0
        %v2704 = vadd.s32 %v2700, %v2696
        %v2705 = vadd.s32 %v2701, %v2703
        %v2706 = vadd.s32 %v2705, %v2695
        %v2707 = vadd.s32 %v2706, %v2697
        %v2708 = vmul.u32 %v2663, %v2654
        %v2709 = vadd.s32 %v2685, %v2704
        %vm2710 = vc.u32 %v2685, %v2704
        %v2711 = vadd.s32 %v2707, 1
        %v2712 = vsel %vm2710, %v2711, %v2707
        %v2713 = vadd.s32 %v2708, %v2712
        %v2714 = vadd.s32 %v2713, 536870912
        %v2715 = vshrl.u32 %v2714, 30
        %v2716 = vshll.u32 %v2715, 30
        %v2717 = vsub.s32 %v2713, %v2716
        %vm2718 = vcmp.lt.s32.totalorder %v2717, 0
        %v2719 = vsub.s32 0, %v2717
        %v2720 = vsel %vm2718, %v2719, %v2717
        %v2721 = vclz %v2720
        %v2722 = vsub.s32 %v2721, 2
        %vm2723 = vcmp.gt.s32.totalorder 0, %v2722
        %v2724 = vsel %vm2723, 0, %v2722
        %v2725 = vsub.s32 32, %v2724
        %v2726 = vshll.u32 %v2717, %v2724
        %v2727 = vshrl.u32 %v2709, %v2725
        %v2728 = vor.u32 %v2726, %v2727
        %v2729 = vsub.s32 4294967266, %v2724
        %v2730 = vadd.s32 %v2729, 127
        %v2731 = vshll.u32 %v2730, 23
        %v2732 = vor.u32 4788187, %v2731
        %v2733 = vand.u32 2147483647, %v2732
        %v2735 = vcvt.s32.f32 %v2728
        %v2736 = vmul.f32 %v2735, %v2733
        %v2737 = vxor.u32 %v2736, 2147483648
        %v2738 = vsel %vm2617, %v2737, %v2736
        %v2739 = vsub.s32 4, %v2715
        %v2740 = vsel %vm2617, %v2739, %v2715
        %v2741 = vsel %vm2616, %v273, %v2738
        %v2742 = vsel %vm2616, 0, %v2740
        %v2743 = vmul.f32 %v2741, %v2741
        %v2744 = vmul.f32 %v2743, -0.001358992
        %v2745 = vadd.f32 %v2744, 0.041655596
        %v2746 = vmul.f32 %v2743, %v2745
        %v2747 = vadd.f32 %v2746, -0.4999988
        %v2748 = vmul.f32 %v2743, %v2747
        %v2749 = vadd.f32 1.0, %v2748
        %v2750 = vmul.f32 %v2741, %v2741
        %v2751 = vmul.f32 %v2750, -0.00019511016
        %v2752 = vadd.f32 %v2751, 0.008332121
        %v2753 = vmul.f32 %v2750, %v2752
        %v2754 = vadd.f32 %v2753, -0.16666654
        %v2755 = vmul.f32 %v2750, %v2754
        %v2756 = vadd.f32 %v2755, 1.0
        %v2757 = vmul.f32 %v2756, %v2741
        %vm2758 = vweird.f32 %v273
        %v2759 = vadd.s32 %v2742, 3
        %v2760 = vand.u32 %v2759, 3
        %vm2761 = vcmp.lt.s32.totalorder %v2760, 2
        %vm2762 = vcmp.eq.s32.totalorder %v2760, 0
        %v2763 = vxor.u32 %v2757, 2147483648
        %v2764 = vsel %vm2762, %v2749, %v2763
        %vm2765 = vcmp.eq.s32.totalorder %v2760, 2
        %v2766 = vxor.u32 %v2749, 2147483648
        %v2767 = vsel %vm2765, %v2766, %v2757
        %v2768 = vsel %vm2761, %v2764, %v2767
        %v2769 = vsel %vm2758, nan, %v2768
        %v2770 = vand.u32 2147483647, %v274
        %vm2771 = vcmp.le.f32.partialorder %v2770, 0.7853982
        %vm2772 = vcmp.lt.s32.totalorder %v274, 0
        %v2773 = vand.u32 %v274, 2139095040
        %v2774 = vshrl.u32 %v2773, 23
        %v2775 = vsub.s32 %v2774, 127
        %v2776 = vand.u32 2147483647, %v274
        %v2777 = vand.u32 %v2776, 8388607
        %v2778 = vor.u32 %v2777, 8388608
        %v2779 = vsub.s32 0, %v2778
        %v2780 = vadd.s32 %v2775, 1
        %vm2781 = vcmp.gt.s32.totalorder %v2780, 0
        %v2782 = vsel %vm2781, %v2780, 0
        %v2783 = vshrl.u32 %v2782, 5
        %v2784 = vand.u32 %v2782, 31
        %v2785 = vsub.s32 32, %v2784
        %v2786 = vshrl.u32 683565275, %v2785
        %v2787 = vshll.u32 683565275, %v2784
        %v2788 = vshrl.u32 2475754826, %v2785
        %v2789 = vor.u32 %v2787, %v2788
        %v2790 = vshll.u32 2475754826, %v2784
        %v2791 = vshrl.u32 2131351028, %v2785
        %v2792 = vor.u32 %v2790, %v2791
        %v2793 = vshll.u32 2131351028, %v2784
        %v2794 = vshrl.u32 2102212464, %v2785
        %v2795 = vor.u32 %v2793, %v2794
        %v2796 = vshll.u32 2102212464, %v2784
        %v2797 = vshrl.u32 920167782, %v2785
        %v2798 = vor.u32 %v2796, %v2797
        %v2799 = vshll.u32 920167782, %v2784
        %v2800 = vshrl.u32 1326507024, %v2785
        %v2801 = vor.u32 %v2799, %v2800
        %vm2802 = vcmp.lt.s32.totalorder %v2783, 1
        %vm2803 = vcmp.lt.s32.totalorder %v2783, 2
        %vm2804 = vcmp.lt.s32.totalorder %v2783, 3
        %vm2805 = vcmp.lt.s32.totalorder %v2783, 4
        %v2806 = vsel %vm2802, %v2786, %v2789
        %v2807 = vsel %vm2805, %v2795, 2102212464
        %v2808 = vsel %vm2804, %v2792, %v2807
        %v2809 = vsel %vm2803, %v2806, %v2808
        %v2810 = vsel %vm2802, %v2789, %v2792
        %v2811 = vsel %vm2805, %v2798, 920167782
        %v2812 = vsel %vm2804, %v2795, %v2811
        %v2813 = vsel %vm2803, %v2810, %v2812
        %v2814 = vsel %vm2802, %v2792, %v2795
        %v2815 = vsel %vm2805, %v2801, 1326507024
        %v2816 = vsel %vm2804, %v2798, %v2815
        %v2817 = vsel %vm2803, %v2814, %v2816
        %v2818 = vshll.u32 %v2778, 8
        %v2819 = vand.u32 %v2818, 65535
        %v2820 = vshrl.u32 %v2818, 16
        %v2821 = vand.u32 %v2817, 65535
        %v2822 = vshrl.u32 %v2817, 16
        %v2823 = vmul.u32 %v2819, %v2821
        %v2824 = vmul.u32 %v2819, %v2822
        %v2825 = vmul.u32 %v2820, %v2821
        %v2826 = vmul.u32 %v2820, %v2822
        %v2827 = vshll.u32 %v2824, 16
        %v2828 = vshrl.u32 %v2824, 16
        %v2829 = vshll.u32 %v2825, 16
        %v2830 = vshrl.u32 %v2825, 16
        %vm2831 = vc.u32 %v2823, %v2827
        %v2832 = vsel %vm2831, 1, 0
        %v2833 = vadd.s32 %v2823, %v2827
        %v2834 = vadd.s32 %v2826, %v2832
        %vm2835 = vc.u32 %v2833, %v2829
        %v2836 = vsel %vm2835, 1, 0
        %v2837 = vadd.s32 %v2833, %v2829
        %v2838 = vadd.s32 %v2834, %v2836
        %v2839 = vadd.s32 %v2838, %v2828
        %v2840 = vadd.s32 %v2839, %v2830
        %v2841 = vand.u32 %v2818, 65535
        %v2842 = vshrl.u32 %v2818, 16
        %v2843 = vand.u32 %v2813, 65535
        %v2844 = vshrl.u32 %v2813, 16
        %v2845 = vmul.u32 %v2841, %v2843
        %v2846 = vmul.u32 %v2841, %v2844
        %v2847 = vmul.u32 %v2842, %v2843
        %v2848 = vmul.u32 %v2842, %v2844
        %v2849 = vshll.u32 %v2846, 16
        %v2850 = vshrl.u32 %v2846, 16
        %v2851 = vshll.u32 %v2847, 16
        %v2852 = vshrl.u32 %v2847, 16
        %vm2853 = vc.u32 %v2845, %v2849
        %v2854 = vsel %vm2853, 1, 0
        %v2855 = vadd.s32 %v2845, %v2849
        %v2856 = vadd.s32 %v2848, %v2854
        %vm2857 = vc.u32 %v2855, %v2851
        %v2858 = vsel %vm2857, 1, 0
        %v2859 = vadd.s32 %v2855, %v2851
        %v2860 = vadd.s32 %v2856, %v2858
        %v2861 = vadd.s32 %v2860, %v2850
        %v2862 = vadd.s32 %v2861, %v2852
        %v2863 = vmul.u32 %v2818, %v2809
        %v2864 = vadd.s32 %v2840, %v2859
        %vm2865 = vc.u32 %v2840, %v2859
        %v2866 = vadd.s32 %v2862, 1
        %v2867 = vsel %vm2865, %v2866, %v2862
        %v2868 = vadd.s32 %v2863, %v2867
        %v2869 = vadd.s32 %v2868, 536870912
        %v2870 = vshrl.u32 %v2869, 30
        %v2871 = vshll.u32 %v2870, 30
        %v2872 = vsub.s32 %v2868, %v2871
        %vm2873 = vcmp.lt.s32.totalorder %v2872, 0
        %v2874 = vsub.s32 0, %v2872
        %v2875 = vsel %vm2873, %v2874, %v2872
        %v2876 = vclz %v2875
        %v2877 = vsub.s32 %v2876, 2
        %vm2878 = vcmp.gt.s32.totalorder 0, %v2877
        %v2879 = vsel %vm2878, 0, %v2877
        %v2880 = vsub.s32 32, %v2879
        %v2881 = vshll.u32 %v2872, %v2879
        %v2882 = vshrl.u32 %v2864, %v2880
        %v2883 = vor.u32 %v2881, %v2882
        %v2884 = vsub.s32 4294967266, %v2879
        %v2885 = vadd.s32 %v2884, 127
        %v2886 = vshll.u32 %v2885, 23
        %v2887 = vor.u32 4788187, %v2886
        %v2888 = vand.u32 2147483647, %v2887
        %v2890 = vcvt.s32.f32 %v2883
        %v2891 = vmul.f32 %v2890, %v2888
        %v2892 = vxor.u32 %v2891, 2147483648
        %v2893 = vsel %vm2772, %v2892, %v2891
        %v2894 = vsub.s32 4, %v2870
        %v2895 = vsel %vm2772, %v2894, %v2870
        %v2896 = vsel %vm2771, %v274, %v2893
        %v2897 = vsel %vm2771, 0, %v2895
        %v2898 = vmul.f32 %v2896, %v2896
        %v2899 = vmul.f32 %v2898, -0.001358992
        %v2900 = vadd.f32 %v2899, 0.041655596
        %v2901 = vmul.f32 %v2898, %v2900
        %v2902 = vadd.f32 %v2901, -0.4999988
        %v2903 = vmul.f32 %v2898, %v2902
        %v2904 = vadd.f32 1.0, %v2903
        %v2905 = vmul.f32 %v2896, %v2896
        %v2906 = vmul.f32 %v2905, -0.00019511016
        %v2907 = vadd.f32 %v2906, 0.008332121
        %v2908 = vmul.f32 %v2905, %v2907
        %v2909 = vadd.f32 %v2908, -0.16666654
        %v2910 = vmul.f32 %v2905, %v2909
        %v2911 = vadd.f32 %v2910, 1.0
        %v2912 = vmul.f32 %v2911, %v2896
        %vm2913 = vweird.f32 %v274
        %v2914 = vadd.s32 %v2897, 3
        %v2915 = vand.u32 %v2914, 3
        %vm2916 = vcmp.lt.s32.totalorder %v2915, 2
        %vm2917 = vcmp.eq.s32.totalorder %v2915, 0
        %v2918 = vxor.u32 %v2912, 2147483648
        %v2919 = vsel %vm2917, %v2904, %v2918
        %vm2920 = vcmp.eq.s32.totalorder %v2915, 2
        %v2921 = vxor.u32 %v2904, 2147483648
        %v2922 = vsel %vm2920, %v2921, %v2912
        %v2923 = vsel %vm2916, %v2919, %v2922
        %v2924 = vsel %vm2913, nan, %v2923
        %v2925 = vand.u32 2147483647, %v275
        %vm2926 = vcmp.le.f32.partialorder %v2925, 0.7853982
        %vm2927 = vcmp.lt.s32.totalorder %v275, 0
        %v2928 = vand.u32 %v275, 2139095040
        %v2929 = vshrl.u32 %v2928, 23
        %v2930 = vsub.s32 %v2929, 127
        %v2931 = vand.u32 2147483647, %v275
        %v2932 = vand.u32 %v2931, 8388607
        %v2933 = vor.u32 %v2932, 8388608
        %v2934 = vsub.s32 0, %v2933
        %v2935 = vadd.s32 %v2930, 1
        %vm2936 = vcmp.gt.s32.totalorder %v2935, 0
        %v2937 = vsel %vm2936, %v2935, 0
        %v2938 = vshrl.u32 %v2937, 5
        %v2939 = vand.u32 %v2937, 31
        %v2940 = vsub.s32 32, %v2939
        %v2941 = vshrl.u32 683565275, %v2940
        %v2942 = vshll.u32 683565275, %v2939
        %v2943 = vshrl.u32 2475754826, %v2940
        %v2944 = vor.u32 %v2942, %v2943
        %v2945 = vshll.u32 2475754826, %v2939
        %v2946 = vshrl.u32 2131351028, %v2940
        %v2947 = vor.u32 %v2945, %v2946
        %v2948 = vshll.u32 2131351028, %v2939
        %v2949 = vshrl.u32 2102212464, %v2940
        %v2950 = vor.u32 %v2948, %v2949
        %v2951 = vshll.u32 2102212464, %v2939
        %v2952 = vshrl.u32 920167782, %v2940
        %v2953 = vor.u32 %v2951, %v2952
        %v2954 = vshll.u32 920167782, %v2939
        %v2955 = vshrl.u32 1326507024, %v2940
        %v2956 = vor.u32 %v2954, %v2955
        %vm2957 = vcmp.lt.s32.totalorder %v2938, 1
        %vm2958 = vcmp.lt.s32.totalorder %v2938, 2
        %vm2959 = vcmp.lt.s32.totalorder %v2938, 3
        %vm2960 = vcmp.lt.s32.totalorder %v2938, 4
        %v2961 = vsel %vm2957, %v2941, %v2944
        %v2962 = vsel %vm2960, %v2950, 2102212464
        %v2963 = vsel %vm2959, %v2947, %v2962
        %v2964 = vsel %vm2958, %v2961, %v2963
        %v2965 = vsel %vm2957, %v2944, %v2947
        %v2966 = vsel %vm2960, %v2953, 920167782
        %v2967 = vsel %vm2959, %v2950, %v2966
        %v2968 = vsel %vm2958, %v2965, %v2967
        %v2969 = vsel %vm2957, %v2947, %v2950
        %v2970 = vsel %vm2960, %v2956, 1326507024
        %v2971 = vsel %vm2959, %v2953, %v2970
        %v2972 = vsel %vm2958, %v2969, %v2971
        %v2973 = vshll.u32 %v2933, 8
        %v2974 = vand.u32 %v2973, 65535
        %v2975 = vshrl.u32 %v2973, 16
        %v2976 = vand.u32 %v2972, 65535
        %v2977 = vshrl.u32 %v2972, 16
        %v2978 = vmul.u32 %v2974, %v2976
        %v2979 = vmul.u32 %v2974, %v2977
        %v2980 = vmul.u32 %v2975, %v2976
        %v2981 = vmul.u32 %v2975, %v2977
        %v2982 = vshll.u32 %v2979, 16
        %v2983 = vshrl.u32 %v2979, 16
        %v2984 = vshll.u32 %v2980, 16
        %v2985 = vshrl.u32 %v2980, 16
        %vm2986 = vc.u32 %v2978, %v2982
        %v2987 = vsel %vm2986, 1, 0
        %v2988 = vadd.s32 %v2978, %v2982
        %v2989 = vadd.s32 %v2981, %v2987
        %vm2990 = vc.u32 %v2988, %v2984
        %v2991 = vsel %vm2990, 1, 0
        %v2992 = vadd.s32 %v2988, %v2984
        %v2993 = vadd.s32 %v2989, %v2991
        %v2994 = vadd.s32 %v2993, %v2983
        %v2995 = vadd.s32 %v2994, %v2985
        %v2996 = vand.u32 %v2973, 65535
        %v2997 = vshrl.u32 %v2973, 16
        %v2998 = vand.u32 %v2968, 65535
        %v2999 = vshrl.u32 %v2968, 16
        %v3000 = vmul.u32 %v2996, %v2998
        %v3001 = vmul.u32 %v2996, %v2999
        %v3002 = vmul.u32 %v2997, %v2998
        %v3003 = vmul.u32 %v2997, %v2999
        %v3004 = vshll.u32 %v3001, 16
        %v3005 = vshrl.u32 %v3001, 16
        %v3006 = vshll.u32 %v3002, 16
        %v3007 = vshrl.u32 %v3002, 16
        %vm3008 = vc.u32 %v3000, %v3004
        %v3009 = vsel %vm3008, 1, 0
        %v3010 = vadd.s32 %v3000, %v3004
        %v3011 = vadd.s32 %v3003, %v3009
        %vm3012 = vc.u32 %v3010, %v3006
        %v3013 = vsel %vm3012, 1, 0
        %v3014 = vadd.s32 %v3010, %v3006
        %v3015 = vadd.s32 %v3011, %v3013
        %v3016 = vadd.s32 %v3015, %v3005
        %v3017 = vadd.s32 %v3016, %v3007
        %v3018 = vmul.u32 %v2973, %v2964
        %v3019 = vadd.s32 %v2995, %v3014
        %vm3020 = vc.u32 %v2995, %v3014
        %v3021 = vadd.s32 %v3017, 1
        %v3022 = vsel %vm3020, %v3021, %v3017
        %v3023 = vadd.s32 %v3018, %v3022
        %v3024 = vadd.s32 %v3023, 536870912
        %v3025 = vshrl.u32 %v3024, 30
        %v3026 = vshll.u32 %v3025, 30
        %v3027 = vsub.s32 %v3023, %v3026
        %vm3028 = vcmp.lt.s32.totalorder %v3027, 0
        %v3029 = vsub.s32 0, %v3027
        %v3030 = vsel %vm3028, %v3029, %v3027
        %v3031 = vclz %v3030
        %v3032 = vsub.s32 %v3031, 2
        %vm3033 = vcmp.gt.s32.totalorder 0, %v3032
        %v3034 = vsel %vm3033, 0, %v3032
        %v3035 = vsub.s32 32, %v3034
        %v3036 = vshll.u32 %v3027, %v3034
        %v3037 = vshrl.u32 %v3019, %v3035
        %v3038 = vor.u32 %v3036, %v3037
        %v3039 = vsub.s32 4294967266, %v3034
        %v3040 = vadd.s32 %v3039, 127
        %v3041 = vshll.u32 %v3040, 23
        %v3042 = vor.u32 4788187, %v3041
        %v3043 = vand.u32 2147483647, %v3042
        %v3045 = vcvt.s32.f32 %v3038
        %v3046 = vmul.f32 %v3045, %v3043
        %v3047 = vxor.u32 %v3046, 2147483648
        %v3048 = vsel %vm2927, %v3047, %v3046
        %v3049 = vsub.s32 4, %v3025
        %v3050 = vsel %vm2927, %v3049, %v3025
        %v3051 = vsel %vm2926, %v275, %v3048
        %v3052 = vsel %vm2926, 0, %v3050
        %v3053 = vmul.f32 %v3051, %v3051
        %v3054 = vmul.f32 %v3053, -0.001358992
        %v3055 = vadd.f32 %v3054, 0.041655596
        %v3056 = vmul.f32 %v3053, %v3055
        %v3057 = vadd.f32 %v3056, -0.4999988
        %v3058 = vmul.f32 %v3053, %v3057
        %v3059 = vadd.f32 1.0, %v3058
        %v3060 = vmul.f32 %v3051, %v3051
        %v3061 = vmul.f32 %v3060, -0.00019511016
        %v3062 = vadd.f32 %v3061, 0.008332121
        %v3063 = vmul.f32 %v3060, %v3062
        %v3064 = vadd.f32 %v3063, -0.16666654
        %v3065 = vmul.f32 %v3060, %v3064
        %v3066 = vadd.f32 %v3065, 1.0
        %v3067 = vmul.f32 %v3066, %v3051
        %vm3068 = vweird.f32 %v275
        %v3069 = vadd.s32 %v3052, 3
        %v3070 = vand.u32 %v3069, 3
        %vm3071 = vcmp.lt.s32.totalorder %v3070, 2
        %vm3072 = vcmp.eq.s32.totalorder %v3070, 0
        %v3073 = vxor.u32 %v3067, 2147483648
        %v3074 = vsel %vm3072, %v3059, %v3073
        %vm3075 = vcmp.eq.s32.totalorder %v3070, 2
        %v3076 = vxor.u32 %v3059, 2147483648
        %v3077 = vsel %vm3075, %v3076, %v3067
        %v3078 = vsel %vm3071, %v3074, %v3077
        %v3079 = vsel %vm3068, nan, %v3078
        %v3080 = vand.u32 2147483647, %v276
        %vm3081 = vcmp.le.f32.partialorder %v3080, 0.7853982
        %vm3082 = vcmp.lt.s32.totalorder %v276, 0
        %v3083 = vand.u32 %v276, 2139095040
        %v3084 = vshrl.u32 %v3083, 23
        %v3085 = vsub.s32 %v3084, 127
        %v3086 = vand.u32 2147483647, %v276
        %v3087 = vand.u32 %v3086, 8388607
        %v3088 = vor.u32 %v3087, 8388608
        %v3089 = vsub.s32 0, %v3088
        %v3090 = vadd.s32 %v3085, 1
        %vm3091 = vcmp.gt.s32.totalorder %v3090, 0
        %v3092 = vsel %vm3091, %v3090, 0
        %v3093 = vshrl.u32 %v3092, 5
        %v3094 = vand.u32 %v3092, 31
        %v3095 = vsub.s32 32, %v3094
        %v3096 = vshrl.u32 683565275, %v3095
        %v3097 = vshll.u32 683565275, %v3094
        %v3098 = vshrl.u32 2475754826, %v3095
        %v3099 = vor.u32 %v3097, %v3098
        %v3100 = vshll.u32 2475754826, %v3094
        %v3101 = vshrl.u32 2131351028, %v3095
        %v3102 = vor.u32 %v3100, %v3101
        %v3103 = vshll.u32 2131351028, %v3094
        %v3104 = vshrl.u32 2102212464, %v3095
        %v3105 = vor.u32 %v3103, %v3104
        %v3106 = vshll.u32 2102212464, %v3094
        %v3107 = vshrl.u32 920167782, %v3095
        %v3108 = vor.u32 %v3106, %v3107
        %v3109 = vshll.u32 920167782, %v3094
        %v3110 = vshrl.u32 1326507024, %v3095
        %v3111 = vor.u32 %v3109, %v3110
        %vm3112 = vcmp.lt.s32.totalorder %v3093, 1
        %vm3113 = vcmp.lt.s32.totalorder %v3093, 2
        %vm3114 = vcmp.lt.s32.totalorder %v3093, 3
        %vm3115 = vcmp.lt.s32.totalorder %v3093, 4
        %v3116 = vsel %vm3112, %v3096, %v3099
        %v3117 = vsel %vm3115, %v3105, 2102212464
        %v3118 = vsel %vm3114, %v3102, %v3117
        %v3119 = vsel %vm3113, %v3116, %v3118
        %v3120 = vsel %vm3112, %v3099, %v3102
        %v3121 = vsel %vm3115, %v3108, 920167782
        %v3122 = vsel %vm3114, %v3105, %v3121
        %v3123 = vsel %vm3113, %v3120, %v3122
        %v3124 = vsel %vm3112, %v3102, %v3105
        %v3125 = vsel %vm3115, %v3111, 1326507024
        %v3126 = vsel %vm3114, %v3108, %v3125
        %v3127 = vsel %vm3113, %v3124, %v3126
        %v3128 = vshll.u32 %v3088, 8
        %v3129 = vand.u32 %v3128, 65535
        %v3130 = vshrl.u32 %v3128, 16
        %v3131 = vand.u32 %v3127, 65535
        %v3132 = vshrl.u32 %v3127, 16
        %v3133 = vmul.u32 %v3129, %v3131
        %v3134 = vmul.u32 %v3129, %v3132
        %v3135 = vmul.u32 %v3130, %v3131
        %v3136 = vmul.u32 %v3130, %v3132
        %v3137 = vshll.u32 %v3134, 16
        %v3138 = vshrl.u32 %v3134, 16
        %v3139 = vshll.u32 %v3135, 16
        %v3140 = vshrl.u32 %v3135, 16
        %vm3141 = vc.u32 %v3133, %v3137
        %v3142 = vsel %vm3141, 1, 0
        %v3143 = vadd.s32 %v3133, %v3137
        %v3144 = vadd.s32 %v3136, %v3142
        %vm3145 = vc.u32 %v3143, %v3139
        %v3146 = vsel %vm3145, 1, 0
        %v3147 = vadd.s32 %v3143, %v3139
        %v3148 = vadd.s32 %v3144, %v3146
        %v3149 = vadd.s32 %v3148, %v3138
        %v3150 = vadd.s32 %v3149, %v3140
        %v3151 = vand.u32 %v3128, 65535
        %v3152 = vshrl.u32 %v3128, 16
        %v3153 = vand.u32 %v3123, 65535
        %v3154 = vshrl.u32 %v3123, 16
        %v3155 = vmul.u32 %v3151, %v3153
        %v3156 = vmul.u32 %v3151, %v3154
        %v3157 = vmul.u32 %v3152, %v3153
        %v3158 = vmul.u32 %v3152, %v3154
        %v3159 = vshll.u32 %v3156, 16
        %v3160 = vshrl.u32 %v3156, 16
        %v3161 = vshll.u32 %v3157, 16
        %v3162 = vshrl.u32 %v3157, 16
        %vm3163 = vc.u32 %v3155, %v3159
        %v3164 = vsel %vm3163, 1, 0
        %v3165 = vadd.s32 %v3155, %v3159
        %v3166 = vadd.s32 %v3158, %v3164
        %vm3167 = vc.u32 %v3165, %v3161
        %v3168 = vsel %vm3167, 1, 0
        %v3169 = vadd.s32 %v3165, %v3161
        %v3170 = vadd.s32 %v3166, %v3168
        %v3171 = vadd.s32 %v3170, %v3160
        %v3172 = vadd.s32 %v3171, %v3162
        %v3173 = vmul.u32 %v3128, %v3119
        %v3174 = vadd.s32 %v3150, %v3169
        %vm3175 = vc.u32 %v3150, %v3169
        %v3176 = vadd.s32 %v3172, 1
        %v3177 = vsel %vm3175, %v3176, %v3172
        %v3178 = vadd.s32 %v3173, %v3177
        %v3179 = vadd.s32 %v3178, 536870912
        %v3180 = vshrl.u32 %v3179, 30
        %v3181 = vshll.u32 %v3180, 30
        %v3182 = vsub.s32 %v3178, %v3181
        %vm3183 = vcmp.lt.s32.totalorder %v3182, 0
        %v3184 = vsub.s32 0, %v3182
        %v3185 = vsel %vm3183, %v3184, %v3182
        %v3186 = vclz %v3185
        %v3187 = vsub.s32 %v3186, 2
        %vm3188 = vcmp.gt.s32.totalorder 0, %v3187
        %v3189 = vsel %vm3188, 0, %v3187
        %v3190 = vsub.s32 32, %v3189
        %v3191 = vshll.u32 %v3182, %v3189
        %v3192 = vshrl.u32 %v3174, %v3190
        %v3193 = vor.u32 %v3191, %v3192
        %v3194 = vsub.s32 4294967266, %v3189
        %v3195 = vadd.s32 %v3194, 127
        %v3196 = vshll.u32 %v3195, 23
        %v3197 = vor.u32 4788187, %v3196
        %v3198 = vand.u32 2147483647, %v3197
        %v3200 = vcvt.s32.f32 %v3193
        %v3201 = vmul.f32 %v3200, %v3198
        %v3202 = vxor.u32 %v3201, 2147483648
        %v3203 = vsel %vm3082, %v3202, %v3201
        %v3204 = vsub.s32 4, %v3180
        %v3205 = vsel %vm3082, %v3204, %v3180
        %v3206 = vsel %vm3081, %v276, %v3203
        %v3207 = vsel %vm3081, 0, %v3205
        %v3208 = vmul.f32 %v3206, %v3206
        %v3209 = vmul.f32 %v3208, -0.001358992
        %v3210 = vadd.f32 %v3209, 0.041655596
        %v3211 = vmul.f32 %v3208, %v3210
        %v3212 = vadd.f32 %v3211, -0.4999988
        %v3213 = vmul.f32 %v3208, %v3212
        %v3214 = vadd.f32 1.0, %v3213
        %v3215 = vmul.f32 %v3206, %v3206
        %v3216 = vmul.f32 %v3215, -0.00019511016
        %v3217 = vadd.f32 %v3216, 0.008332121
        %v3218 = vmul.f32 %v3215, %v3217
        %v3219 = vadd.f32 %v3218, -0.16666654
        %v3220 = vmul.f32 %v3215, %v3219
        %v3221 = vadd.f32 %v3220, 1.0
        %v3222 = vmul.f32 %v3221, %v3206
        %vm3223 = vweird.f32 %v276
        %v3224 = vadd.s32 %v3207, 3
        %v3225 = vand.u32 %v3224, 3
        %vm3226 = vcmp.lt.s32.totalorder %v3225, 2
        %vm3227 = vcmp.eq.s32.totalorder %v3225, 0
        %v3228 = vxor.u32 %v3222, 2147483648
        %v3229 = vsel %vm3227, %v3214, %v3228
        %vm3230 = vcmp.eq.s32.totalorder %v3225, 2
        %v3231 = vxor.u32 %v3214, 2147483648
        %v3232 = vsel %vm3230, %v3231, %v3222
        %v3233 = vsel %vm3226, %v3229, %v3232
        %v3234 = vsel %vm3223, nan, %v3233
        %v3235 = vand.u32 2147483647, %v277
        %vm3236 = vcmp.le.f32.partialorder %v3235, 0.7853982
        %vm3237 = vcmp.lt.s32.totalorder %v277, 0
        %v3238 = vand.u32 %v277, 2139095040
        %v3239 = vshrl.u32 %v3238, 23
        %v3240 = vsub.s32 %v3239, 127
        %v3241 = vand.u32 2147483647, %v277
        %v3242 = vand.u32 %v3241, 8388607
        %v3243 = vor.u32 %v3242, 8388608
        %v3244 = vsub.s32 0, %v3243
        %v3245 = vadd.s32 %v3240, 1
        %vm3246 = vcmp.gt.s32.totalorder %v3245, 0
        %v3247 = vsel %vm3246, %v3245, 0
        %v3248 = vshrl.u32 %v3247, 5
        %v3249 = vand.u32 %v3247, 31
        %v3250 = vsub.s32 32, %v3249
        %v3251 = vshrl.u32 683565275, %v3250
        %v3252 = vshll.u32 683565275, %v3249
        %v3253 = vshrl.u32 2475754826, %v3250
        %v3254 = vor.u32 %v3252, %v3253
        %v3255 = vshll.u32 2475754826, %v3249
        %v3256 = vshrl.u32 2131351028, %v3250
        %v3257 = vor.u32 %v3255, %v3256
        %v3258 = vshll.u32 2131351028, %v3249
        %v3259 = vshrl.u32 2102212464, %v3250
        %v3260 = vor.u32 %v3258, %v3259
        %v3261 = vshll.u32 2102212464, %v3249
        %v3262 = vshrl.u32 920167782, %v3250
        %v3263 = vor.u32 %v3261, %v3262
        %v3264 = vshll.u32 920167782, %v3249
        %v3265 = vshrl.u32 1326507024, %v3250
        %v3266 = vor.u32 %v3264, %v3265
        %vm3267 = vcmp.lt.s32.totalorder %v3248, 1
        %vm3268 = vcmp.lt.s32.totalorder %v3248, 2
        %vm3269 = vcmp.lt.s32.totalorder %v3248, 3
        %vm3270 = vcmp.lt.s32.totalorder %v3248, 4
        %v3271 = vsel %vm3267, %v3251, %v3254
        %v3272 = vsel %vm3270, %v3260, 2102212464
        %v3273 = vsel %vm3269, %v3257, %v3272
        %v3274 = vsel %vm3268, %v3271, %v3273
        %v3275 = vsel %vm3267, %v3254, %v3257
        %v3276 = vsel %vm3270, %v3263, 920167782
        %v3277 = vsel %vm3269, %v3260, %v3276
        %v3278 = vsel %vm3268, %v3275, %v3277
        %v3279 = vsel %vm3267, %v3257, %v3260
        %v3280 = vsel %vm3270, %v3266, 1326507024
        %v3281 = vsel %vm3269, %v3263, %v3280
        %v3282 = vsel %vm3268, %v3279, %v3281
        %v3283 = vshll.u32 %v3243, 8
        %v3284 = vand.u32 %v3283, 65535
        %v3285 = vshrl.u32 %v3283, 16
        %v3286 = vand.u32 %v3282, 65535
        %v3287 = vshrl.u32 %v3282, 16
        %v3288 = vmul.u32 %v3284, %v3286
        %v3289 = vmul.u32 %v3284, %v3287
        %v3290 = vmul.u32 %v3285, %v3286
        %v3291 = vmul.u32 %v3285, %v3287
        %v3292 = vshll.u32 %v3289, 16
        %v3293 = vshrl.u32 %v3289, 16
        %v3294 = vshll.u32 %v3290, 16
        %v3295 = vshrl.u32 %v3290, 16
        %vm3296 = vc.u32 %v3288, %v3292
        %v3297 = vsel %vm3296, 1, 0
        %v3298 = vadd.s32 %v3288, %v3292
        %v3299 = vadd.s32 %v3291, %v3297
        %vm3300 = vc.u32 %v3298, %v3294
        %v3301 = vsel %vm3300, 1, 0
        %v3302 = vadd.s32 %v3298, %v3294
        %v3303 = vadd.s32 %v3299, %v3301
        %v3304 = vadd.s32 %v3303, %v3293
        %v3305 = vadd.s32 %v3304, %v3295
        %v3306 = vand.u32 %v3283, 65535
        %v3307 = vshrl.u32 %v3283, 16
        %v3308 = vand.u32 %v3278, 65535
        %v3309 = vshrl.u32 %v3278, 16
        %v3310 = vmul.u32 %v3306, %v3308
        %v3311 = vmul.u32 %v3306, %v3309
        %v3312 = vmul.u32 %v3307, %v3308
        %v3313 = vmul.u32 %v3307, %v3309
        %v3314 = vshll.u32 %v3311, 16
        %v3315 = vshrl.u32 %v3311, 16
        %v3316 = vshll.u32 %v3312, 16
        %v3317 = vshrl.u32 %v3312, 16
        %vm3318 = vc.u32 %v3310, %v3314
        %v3319 = vsel %vm3318, 1, 0
        %v3320 = vadd.s32 %v3310, %v3314
        %v3321 = vadd.s32 %v3313, %v3319
        %vm3322 = vc.u32 %v3320, %v3316
        %v3323 = vsel %vm3322, 1, 0
        %v3324 = vadd.s32 %v3320, %v3316
        %v3325 = vadd.s32 %v3321, %v3323
        %v3326 = vadd.s32 %v3325, %v3315
        %v3327 = vadd.s32 %v3326, %v3317
        %v3328 = vmul.u32 %v3283, %v3274
        %v3329 = vadd.s32 %v3305, %v3324
        %vm3330 = vc.u32 %v3305, %v3324
        %v3331 = vadd.s32 %v3327, 1
        %v3332 = vsel %vm3330, %v3331, %v3327
        %v3333 = vadd.s32 %v3328, %v3332
        %v3334 = vadd.s32 %v3333, 536870912
        %v3335 = vshrl.u32 %v3334, 30
        %v3336 = vshll.u32 %v3335, 30
        %v3337 = vsub.s32 %v3333, %v3336
        %vm3338 = vcmp.lt.s32.totalorder %v3337, 0
        %v3339 = vsub.s32 0, %v3337
        %v3340 = vsel %vm3338, %v3339, %v3337
        %v3341 = vclz %v3340
        %v3342 = vsub.s32 %v3341, 2
        %vm3343 = vcmp.gt.s32.totalorder 0, %v3342
        %v3344 = vsel %vm3343, 0, %v3342
        %v3345 = vsub.s32 32, %v3344
        %v3346 = vshll.u32 %v3337, %v3344
        %v3347 = vshrl.u32 %v3329, %v3345
        %v3348 = vor.u32 %v3346, %v3347
        %v3349 = vsub.s32 4294967266, %v3344
        %v3350 = vadd.s32 %v3349, 127
        %v3351 = vshll.u32 %v3350, 23
        %v3352 = vor.u32 4788187, %v3351
        %v3353 = vand.u32 2147483647, %v3352
        %v3355 = vcvt.s32.f32 %v3348
        %v3356 = vmul.f32 %v3355, %v3353
        %v3357 = vxor.u32 %v3356, 2147483648
        %v3358 = vsel %vm3237, %v3357, %v3356
        %v3359 = vsub.s32 4, %v3335
        %v3360 = vsel %vm3237, %v3359, %v3335
        %v3361 = vsel %vm3236, %v277, %v3358
        %v3362 = vsel %vm3236, 0, %v3360
        %v3363 = vmul.f32 %v3361, %v3361
        %v3364 = vmul.f32 %v3363, -0.001358992
        %v3365 = vadd.f32 %v3364, 0.041655596
        %v3366 = vmul.f32 %v3363, %v3365
        %v3367 = vadd.f32 %v3366, -0.4999988
        %v3368 = vmul.f32 %v3363, %v3367
        %v3369 = vadd.f32 1.0, %v3368
        %v3370 = vmul.f32 %v3361, %v3361
        %v3371 = vmul.f32 %v3370, -0.00019511016
        %v3372 = vadd.f32 %v3371, 0.008332121
        %v3373 = vmul.f32 %v3370, %v3372
        %v3374 = vadd.f32 %v3373, -0.16666654
        %v3375 = vmul.f32 %v3370, %v3374
        %v3376 = vadd.f32 %v3375, 1.0
        %v3377 = vmul.f32 %v3376, %v3361
        %vm3378 = vweird.f32 %v277
        %v3379 = vadd.s32 %v3362, 3
        %v3380 = vand.u32 %v3379, 3
        %vm3381 = vcmp.lt.s32.totalorder %v3380, 2
        %vm3382 = vcmp.eq.s32.totalorder %v3380, 0
        %v3383 = vxor.u32 %v3377, 2147483648
        %v3384 = vsel %vm3382, %v3369, %v3383
        %vm3385 = vcmp.eq.s32.totalorder %v3380, 2
        %v3386 = vxor.u32 %v3369, 2147483648
        %v3387 = vsel %vm3385, %v3386, %v3377
        %v3388 = vsel %vm3381, %v3384, %v3387
        %v3389 = vsel %vm3378, nan, %v3388
        %v3390 = vand.u32 2147483647, %v278
        %vm3391 = vcmp.le.f32.partialorder %v3390, 0.7853982
        %vm3392 = vcmp.lt.s32.totalorder %v278, 0
        %v3393 = vand.u32 %v278, 2139095040
        %v3394 = vshrl.u32 %v3393, 23
        %v3395 = vsub.s32 %v3394, 127
        %v3396 = vand.u32 2147483647, %v278
        %v3397 = vand.u32 %v3396, 8388607
        %v3398 = vor.u32 %v3397, 8388608
        %v3399 = vsub.s32 0, %v3398
        %v3400 = vadd.s32 %v3395, 1
        %vm3401 = vcmp.gt.s32.totalorder %v3400, 0
        %v3402 = vsel %vm3401, %v3400, 0
        %v3403 = vshrl.u32 %v3402, 5
        %v3404 = vand.u32 %v3402, 31
        %v3405 = vsub.s32 32, %v3404
        %v3406 = vshrl.u32 683565275, %v3405
        %v3407 = vshll.u32 683565275, %v3404
        %v3408 = vshrl.u32 2475754826, %v3405
        %v3409 = vor.u32 %v3407, %v3408
        %v3410 = vshll.u32 2475754826, %v3404
        %v3411 = vshrl.u32 2131351028, %v3405
        %v3412 = vor.u32 %v3410, %v3411
        %v3413 = vshll.u32 2131351028, %v3404
        %v3414 = vshrl.u32 2102212464, %v3405
        %v3415 = vor.u32 %v3413, %v3414
        %v3416 = vshll.u32 2102212464, %v3404
        %v3417 = vshrl.u32 920167782, %v3405
        %v3418 = vor.u32 %v3416, %v3417
        %v3419 = vshll.u32 920167782, %v3404
        %v3420 = vshrl.u32 1326507024, %v3405
        %v3421 = vor.u32 %v3419, %v3420
        %vm3422 = vcmp.lt.s32.totalorder %v3403, 1
        %vm3423 = vcmp.lt.s32.totalorder %v3403, 2
        %vm3424 = vcmp.lt.s32.totalorder %v3403, 3
        %vm3425 = vcmp.lt.s32.totalorder %v3403, 4
        %v3426 = vsel %vm3422, %v3406, %v3409
        %v3427 = vsel %vm3425, %v3415, 2102212464
        %v3428 = vsel %vm3424, %v3412, %v3427
        %v3429 = vsel %vm3423, %v3426, %v3428
        %v3430 = vsel %vm3422, %v3409, %v3412
        %v3431 = vsel %vm3425, %v3418, 920167782
        %v3432 = vsel %vm3424, %v3415, %v3431
        %v3433 = vsel %vm3423, %v3430, %v3432
        %v3434 = vsel %vm3422, %v3412, %v3415
        %v3435 = vsel %vm3425, %v3421, 1326507024
        %v3436 = vsel %vm3424, %v3418, %v3435
        %v3437 = vsel %vm3423, %v3434, %v3436
        %v3438 = vshll.u32 %v3398, 8
        %v3439 = vand.u32 %v3438, 65535
        %v3440 = vshrl.u32 %v3438, 16
        %v3441 = vand.u32 %v3437, 65535
        %v3442 = vshrl.u32 %v3437, 16
        %v3443 = vmul.u32 %v3439, %v3441
        %v3444 = vmul.u32 %v3439, %v3442
        %v3445 = vmul.u32 %v3440, %v3441
        %v3446 = vmul.u32 %v3440, %v3442
        %v3447 = vshll.u32 %v3444, 16
        %v3448 = vshrl.u32 %v3444, 16
        %v3449 = vshll.u32 %v3445, 16
        %v3450 = vshrl.u32 %v3445, 16
        %vm3451 = vc.u32 %v3443, %v3447
        %v3452 = vsel %vm3451, 1, 0
        %v3453 = vadd.s32 %v3443, %v3447
        %v3454 = vadd.s32 %v3446, %v3452
        %vm3455 = vc.u32 %v3453, %v3449
        %v3456 = vsel %vm3455, 1, 0
        %v3457 = vadd.s32 %v3453, %v3449
        %v3458 = vadd.s32 %v3454, %v3456
        %v3459 = vadd.s32 %v3458, %v3448
        %v3460 = vadd.s32 %v3459, %v3450
        %v3461 = vand.u32 %v3438, 65535
        %v3462 = vshrl.u32 %v3438, 16
        %v3463 = vand.u32 %v3433, 65535
        %v3464 = vshrl.u32 %v3433, 16
        %v3465 = vmul.u32 %v3461, %v3463
        %v3466 = vmul.u32 %v3461, %v3464
        %v3467 = vmul.u32 %v3462, %v3463
        %v3468 = vmul.u32 %v3462, %v3464
        %v3469 = vshll.u32 %v3466, 16
        %v3470 = vshrl.u32 %v3466, 16
        %v3471 = vshll.u32 %v3467, 16
        %v3472 = vshrl.u32 %v3467, 16
        %vm3473 = vc.u32 %v3465, %v3469
        %v3474 = vsel %vm3473, 1, 0
        %v3475 = vadd.s32 %v3465, %v3469
        %v3476 = vadd.s32 %v3468, %v3474
        %vm3477 = vc.u32 %v3475, %v3471
        %v3478 = vsel %vm3477, 1, 0
        %v3479 = vadd.s32 %v3475, %v3471
        %v3480 = vadd.s32 %v3476, %v3478
        %v3481 = vadd.s32 %v3480, %v3470
        %v3482 = vadd.s32 %v3481, %v3472
        %v3483 = vmul.u32 %v3438, %v3429
        %v3484 = vadd.s32 %v3460, %v3479
        %vm3485 = vc.u32 %v3460, %v3479
        %v3486 = vadd.s32 %v3482, 1
        %v3487 = vsel %vm3485, %v3486, %v3482
        %v3488 = vadd.s32 %v3483, %v3487
        %v3489 = vadd.s32 %v3488, 536870912
        %v3490 = vshrl.u32 %v3489, 30
        %v3491 = vshll.u32 %v3490, 30
        %v3492 = vsub.s32 %v3488, %v3491
        %vm3493 = vcmp.lt.s32.totalorder %v3492, 0
        %v3494 = vsub.s32 0, %v3492
        %v3495 = vsel %vm3493, %v3494, %v3492
        %v3496 = vclz %v3495
        %v3497 = vsub.s32 %v3496, 2
        %vm3498 = vcmp.gt.s32.totalorder 0, %v3497
        %v3499 = vsel %vm3498, 0, %v3497
        %v3500 = vsub.s32 32, %v3499
        %v3501 = vshll.u32 %v3492, %v3499
        %v3502 = vshrl.u32 %v3484, %v3500
        %v3503 = vor.u32 %v3501, %v3502
        %v3504 = vsub.s32 4294967266, %v3499
        %v3505 = vadd.s32 %v3504, 127
        %v3506 = vshll.u32 %v3505, 23
        %v3507 = vor.u32 4788187, %v3506
        %v3508 = vand.u32 2147483647, %v3507
        %v3510 = vcvt.s32.f32 %v3503
        %v3511 = vmul.f32 %v3510, %v3508
        %v3512 = vxor.u32 %v3511, 2147483648
        %v3513 = vsel %vm3392, %v3512, %v3511
        %v3514 = vsub.s32 4, %v3490
        %v3515 = vsel %vm3392, %v3514, %v3490
        %v3516 = vsel %vm3391, %v278, %v3513
        %v3517 = vsel %vm3391, 0, %v3515
        %v3518 = vmul.f32 %v3516, %v3516
        %v3519 = vmul.f32 %v3518, -0.001358992
        %v3520 = vadd.f32 %v3519, 0.041655596
        %v3521 = vmul.f32 %v3518, %v3520
        %v3522 = vadd.f32 %v3521, -0.4999988
        %v3523 = vmul.f32 %v3518, %v3522
        %v3524 = vadd.f32 1.0, %v3523
        %v3525 = vmul.f32 %v3516, %v3516
        %v3526 = vmul.f32 %v3525, -0.00019511016
        %v3527 = vadd.f32 %v3526, 0.008332121
        %v3528 = vmul.f32 %v3525, %v3527
        %v3529 = vadd.f32 %v3528, -0.16666654
        %v3530 = vmul.f32 %v3525, %v3529
        %v3531 = vadd.f32 %v3530, 1.0
        %v3532 = vmul.f32 %v3531, %v3516
        %vm3533 = vweird.f32 %v278
        %v3534 = vadd.s32 %v3517, 3
        %v3535 = vand.u32 %v3534, 3
        %vm3536 = vcmp.lt.s32.totalorder %v3535, 2
        %vm3537 = vcmp.eq.s32.totalorder %v3535, 0
        %v3538 = vxor.u32 %v3532, 2147483648
        %v3539 = vsel %vm3537, %v3524, %v3538
        %vm3540 = vcmp.eq.s32.totalorder %v3535, 2
        %v3541 = vxor.u32 %v3524, 2147483648
        %v3542 = vsel %vm3540, %v3541, %v3532
        %v3543 = vsel %vm3536, %v3539, %v3542
        %v3544 = vsel %vm3533, nan, %v3543
        %v3545 = vand.u32 2147483647, %v279
        %vm3546 = vcmp.le.f32.partialorder %v3545, 0.7853982
        %vm3547 = vcmp.lt.s32.totalorder %v279, 0
        %v3548 = vand.u32 %v279, 2139095040
        %v3549 = vshrl.u32 %v3548, 23
        %v3550 = vsub.s32 %v3549, 127
        %v3551 = vand.u32 2147483647, %v279
        %v3552 = vand.u32 %v3551, 8388607
        %v3553 = vor.u32 %v3552, 8388608
        %v3554 = vsub.s32 0, %v3553
        %v3555 = vadd.s32 %v3550, 1
        %vm3556 = vcmp.gt.s32.totalorder %v3555, 0
        %v3557 = vsel %vm3556, %v3555, 0
        %v3558 = vshrl.u32 %v3557, 5
        %v3559 = vand.u32 %v3557, 31
        %v3560 = vsub.s32 32, %v3559
        %v3561 = vshrl.u32 683565275, %v3560
        %v3562 = vshll.u32 683565275, %v3559
        %v3563 = vshrl.u32 2475754826, %v3560
        %v3564 = vor.u32 %v3562, %v3563
        %v3565 = vshll.u32 2475754826, %v3559
        %v3566 = vshrl.u32 2131351028, %v3560
        %v3567 = vor.u32 %v3565, %v3566
        %v3568 = vshll.u32 2131351028, %v3559
        %v3569 = vshrl.u32 2102212464, %v3560
        %v3570 = vor.u32 %v3568, %v3569
        %v3571 = vshll.u32 2102212464, %v3559
        %v3572 = vshrl.u32 920167782, %v3560
        %v3573 = vor.u32 %v3571, %v3572
        %v3574 = vshll.u32 920167782, %v3559
        %v3575 = vshrl.u32 1326507024, %v3560
        %v3576 = vor.u32 %v3574, %v3575
        %vm3577 = vcmp.lt.s32.totalorder %v3558, 1
        %vm3578 = vcmp.lt.s32.totalorder %v3558, 2
        %vm3579 = vcmp.lt.s32.totalorder %v3558, 3
        %vm3580 = vcmp.lt.s32.totalorder %v3558, 4
        %v3581 = vsel %vm3577, %v3561, %v3564
        %v3582 = vsel %vm3580, %v3570, 2102212464
        %v3583 = vsel %vm3579, %v3567, %v3582
        %v3584 = vsel %vm3578, %v3581, %v3583
        %v3585 = vsel %vm3577, %v3564, %v3567
        %v3586 = vsel %vm3580, %v3573, 920167782
        %v3587 = vsel %vm3579, %v3570, %v3586
        %v3588 = vsel %vm3578, %v3585, %v3587
        %v3589 = vsel %vm3577, %v3567, %v3570
        %v3590 = vsel %vm3580, %v3576, 1326507024
        %v3591 = vsel %vm3579, %v3573, %v3590
        %v3592 = vsel %vm3578, %v3589, %v3591
        %v3593 = vshll.u32 %v3553, 8
        %v3594 = vand.u32 %v3593, 65535
        %v3595 = vshrl.u32 %v3593, 16
        %v3596 = vand.u32 %v3592, 65535
        %v3597 = vshrl.u32 %v3592, 16
        %v3598 = vmul.u32 %v3594, %v3596
        %v3599 = vmul.u32 %v3594, %v3597
        %v3600 = vmul.u32 %v3595, %v3596
        %v3601 = vmul.u32 %v3595, %v3597
        %v3602 = vshll.u32 %v3599, 16
        %v3603 = vshrl.u32 %v3599, 16
        %v3604 = vshll.u32 %v3600, 16
        %v3605 = vshrl.u32 %v3600, 16
        %vm3606 = vc.u32 %v3598, %v3602
        %v3607 = vsel %vm3606, 1, 0
        %v3608 = vadd.s32 %v3598, %v3602
        %v3609 = vadd.s32 %v3601, %v3607
        %vm3610 = vc.u32 %v3608, %v3604
        %v3611 = vsel %vm3610, 1, 0
        %v3612 = vadd.s32 %v3608, %v3604
        %v3613 = vadd.s32 %v3609, %v3611
        %v3614 = vadd.s32 %v3613, %v3603
        %v3615 = vadd.s32 %v3614, %v3605
        %v3616 = vand.u32 %v3593, 65535
        %v3617 = vshrl.u32 %v3593, 16
        %v3618 = vand.u32 %v3588, 65535
        %v3619 = vshrl.u32 %v3588, 16
        %v3620 = vmul.u32 %v3616, %v3618
        %v3621 = vmul.u32 %v3616, %v3619
        %v3622 = vmul.u32 %v3617, %v3618
        %v3623 = vmul.u32 %v3617, %v3619
        %v3624 = vshll.u32 %v3621, 16
        %v3625 = vshrl.u32 %v3621, 16
        %v3626 = vshll.u32 %v3622, 16
        %v3627 = vshrl.u32 %v3622, 16
        %vm3628 = vc.u32 %v3620, %v3624
        %v3629 = vsel %vm3628, 1, 0
        %v3630 = vadd.s32 %v3620, %v3624
        %v3631 = vadd.s32 %v3623, %v3629
        %vm3632 = vc.u32 %v3630, %v3626
        %v3633 = vsel %vm3632, 1, 0
        %v3634 = vadd.s32 %v3630, %v3626
        %v3635 = vadd.s32 %v3631, %v3633
        %v3636 = vadd.s32 %v3635, %v3625
        %v3637 = vadd.s32 %v3636, %v3627
        %v3638 = vmul.u32 %v3593, %v3584
        %v3639 = vadd.s32 %v3615, %v3634
        %vm3640 = vc.u32 %v3615, %v3634
        %v3641 = vadd.s32 %v3637, 1
        %v3642 = vsel %vm3640, %v3641, %v3637
        %v3643 = vadd.s32 %v3638, %v3642
        %v3644 = vadd.s32 %v3643, 536870912
        %v3645 = vshrl.u32 %v3644, 30
        %v3646 = vshll.u32 %v3645, 30
        %v3647 = vsub.s32 %v3643, %v3646
        %vm3648 = vcmp.lt.s32.totalorder %v3647, 0
        %v3649 = vsub.s32 0, %v3647
        %v3650 = vsel %vm3648, %v3649, %v3647
        %v3651 = vclz %v3650
        %v3652 = vsub.s32 %v3651, 2
        %vm3653 = vcmp.gt.s32.totalorder 0, %v3652
        %v3654 = vsel %vm3653, 0, %v3652
        %v3655 = vsub.s32 32, %v3654
        %v3656 = vshll.u32 %v3647, %v3654
        %v3657 = vshrl.u32 %v3639, %v3655
        %v3658 = vor.u32 %v3656, %v3657
        %v3659 = vsub.s32 4294967266, %v3654
        %v3660 = vadd.s32 %v3659, 127
        %v3661 = vshll.u32 %v3660, 23
        %v3662 = vor.u32 4788187, %v3661
        %v3663 = vand.u32 2147483647, %v3662
        %v3665 = vcvt.s32.f32 %v3658
        %v3666 = vmul.f32 %v3665, %v3663
        %v3667 = vxor.u32 %v3666, 2147483648
        %v3668 = vsel %vm3547, %v3667, %v3666
        %v3669 = vsub.s32 4, %v3645
        %v3670 = vsel %vm3547, %v3669, %v3645
        %v3671 = vsel %vm3546, %v279, %v3668
        %v3672 = vsel %vm3546, 0, %v3670
        %v3673 = vmul.f32 %v3671, %v3671
        %v3674 = vmul.f32 %v3673, -0.001358992
        %v3675 = vadd.f32 %v3674, 0.041655596
        %v3676 = vmul.f32 %v3673, %v3675
        %v3677 = vadd.f32 %v3676, -0.4999988
        %v3678 = vmul.f32 %v3673, %v3677
        %v3679 = vadd.f32 1.0, %v3678
        %v3680 = vmul.f32 %v3671, %v3671
        %v3681 = vmul.f32 %v3680, -0.00019511016
        %v3682 = vadd.f32 %v3681, 0.008332121
        %v3683 = vmul.f32 %v3680, %v3682
        %v3684 = vadd.f32 %v3683, -0.16666654
        %v3685 = vmul.f32 %v3680, %v3684
        %v3686 = vadd.f32 %v3685, 1.0
        %v3687 = vmul.f32 %v3686, %v3671
        %vm3688 = vweird.f32 %v279
        %v3689 = vadd.s32 %v3672, 3
        %v3690 = vand.u32 %v3689, 3
        %vm3691 = vcmp.lt.s32.totalorder %v3690, 2
        %vm3692 = vcmp.eq.s32.totalorder %v3690, 0
        %v3693 = vxor.u32 %v3687, 2147483648
        %v3694 = vsel %vm3692, %v3679, %v3693
        %vm3695 = vcmp.eq.s32.totalorder %v3690, 2
        %v3696 = vxor.u32 %v3679, 2147483648
        %v3697 = vsel %vm3695, %v3696, %v3687
        %v3698 = vsel %vm3691, %v3694, %v3697
        %v3699 = vsel %vm3688, nan, %v3698
        %v3700 = vand.u32 2147483647, %v280
        %vm3701 = vcmp.le.f32.partialorder %v3700, 0.7853982
        %vm3702 = vcmp.lt.s32.totalorder %v280, 0
        %v3703 = vand.u32 %v280, 2139095040
        %v3704 = vshrl.u32 %v3703, 23
        %v3705 = vsub.s32 %v3704, 127
        %v3706 = vand.u32 2147483647, %v280
        %v3707 = vand.u32 %v3706, 8388607
        %v3708 = vor.u32 %v3707, 8388608
        %v3709 = vsub.s32 0, %v3708
        %v3710 = vadd.s32 %v3705, 1
        %vm3711 = vcmp.gt.s32.totalorder %v3710, 0
        %v3712 = vsel %vm3711, %v3710, 0
        %v3713 = vshrl.u32 %v3712, 5
        %v3714 = vand.u32 %v3712, 31
        %v3715 = vsub.s32 32, %v3714
        %v3716 = vshrl.u32 683565275, %v3715
        %v3717 = vshll.u32 683565275, %v3714
        %v3718 = vshrl.u32 2475754826, %v3715
        %v3719 = vor.u32 %v3717, %v3718
        %v3720 = vshll.u32 2475754826, %v3714
        %v3721 = vshrl.u32 2131351028, %v3715
        %v3722 = vor.u32 %v3720, %v3721
        %v3723 = vshll.u32 2131351028, %v3714
        %v3724 = vshrl.u32 2102212464, %v3715
        %v3725 = vor.u32 %v3723, %v3724
        %v3726 = vshll.u32 2102212464, %v3714
        %v3727 = vshrl.u32 920167782, %v3715
        %v3728 = vor.u32 %v3726, %v3727
        %v3729 = vshll.u32 920167782, %v3714
        %v3730 = vshrl.u32 1326507024, %v3715
        %v3731 = vor.u32 %v3729, %v3730
        %vm3732 = vcmp.lt.s32.totalorder %v3713, 1
        %vm3733 = vcmp.lt.s32.totalorder %v3713, 2
        %vm3734 = vcmp.lt.s32.totalorder %v3713, 3
        %vm3735 = vcmp.lt.s32.totalorder %v3713, 4
        %v3736 = vsel %vm3732, %v3716, %v3719
        %v3737 = vsel %vm3735, %v3725, 2102212464
        %v3738 = vsel %vm3734, %v3722, %v3737
        %v3739 = vsel %vm3733, %v3736, %v3738
        %v3740 = vsel %vm3732, %v3719, %v3722
        %v3741 = vsel %vm3735, %v3728, 920167782
        %v3742 = vsel %vm3734, %v3725, %v3741
        %v3743 = vsel %vm3733, %v3740, %v3742
        %v3744 = vsel %vm3732, %v3722, %v3725
        %v3745 = vsel %vm3735, %v3731, 1326507024
        %v3746 = vsel %vm3734, %v3728, %v3745
        %v3747 = vsel %vm3733, %v3744, %v3746
        %v3748 = vshll.u32 %v3708, 8
        %v3749 = vand.u32 %v3748, 65535
        %v3750 = vshrl.u32 %v3748, 16
        %v3751 = vand.u32 %v3747, 65535
        %v3752 = vshrl.u32 %v3747, 16
        %v3753 = vmul.u32 %v3749, %v3751
        %v3754 = vmul.u32 %v3749, %v3752
        %v3755 = vmul.u32 %v3750, %v3751
        %v3756 = vmul.u32 %v3750, %v3752
        %v3757 = vshll.u32 %v3754, 16
        %v3758 = vshrl.u32 %v3754, 16
        %v3759 = vshll.u32 %v3755, 16
        %v3760 = vshrl.u32 %v3755, 16
        %vm3761 = vc.u32 %v3753, %v3757
        %v3762 = vsel %vm3761, 1, 0
        %v3763 = vadd.s32 %v3753, %v3757
        %v3764 = vadd.s32 %v3756, %v3762
        %vm3765 = vc.u32 %v3763, %v3759
        %v3766 = vsel %vm3765, 1, 0
        %v3767 = vadd.s32 %v3763, %v3759
        %v3768 = vadd.s32 %v3764, %v3766
        %v3769 = vadd.s32 %v3768, %v3758
        %v3770 = vadd.s32 %v3769, %v3760
        %v3771 = vand.u32 %v3748, 65535
        %v3772 = vshrl.u32 %v3748, 16
        %v3773 = vand.u32 %v3743, 65535
        %v3774 = vshrl.u32 %v3743, 16
        %v3775 = vmul.u32 %v3771, %v3773
        %v3776 = vmul.u32 %v3771, %v3774
        %v3777 = vmul.u32 %v3772, %v3773
        %v3778 = vmul.u32 %v3772, %v3774
        %v3779 = vshll.u32 %v3776, 16
        %v3780 = vshrl.u32 %v3776, 16
        %v3781 = vshll.u32 %v3777, 16
        %v3782 = vshrl.u32 %v3777, 16
        %vm3783 = vc.u32 %v3775, %v3779
        %v3784 = vsel %vm3783, 1, 0
        %v3785 = vadd.s32 %v3775, %v3779
        %v3786 = vadd.s32 %v3778, %v3784
        %vm3787 = vc.u32 %v3785, %v3781
        %v3788 = vsel %vm3787, 1, 0
        %v3789 = vadd.s32 %v3785, %v3781
        %v3790 = vadd.s32 %v3786, %v3788
        %v3791 = vadd.s32 %v3790, %v3780
        %v3792 = vadd.s32 %v3791, %v3782
        %v3793 = vmul.u32 %v3748, %v3739
        %v3794 = vadd.s32 %v3770, %v3789
        %vm3795 = vc.u32 %v3770, %v3789
        %v3796 = vadd.s32 %v3792, 1
        %v3797 = vsel %vm3795, %v3796, %v3792
        %v3798 = vadd.s32 %v3793, %v3797
        %v3799 = vadd.s32 %v3798, 536870912
        %v3800 = vshrl.u32 %v3799, 30
        %v3801 = vshll.u32 %v3800, 30
        %v3802 = vsub.s32 %v3798, %v3801
        %vm3803 = vcmp.lt.s32.totalorder %v3802, 0
        %v3804 = vsub.s32 0, %v3802
        %v3805 = vsel %vm3803, %v3804, %v3802
        %v3806 = vclz %v3805
        %v3807 = vsub.s32 %v3806, 2
        %vm3808 = vcmp.gt.s32.totalorder 0, %v3807
        %v3809 = vsel %vm3808, 0, %v3807
        %v3810 = vsub.s32 32, %v3809
        %v3811 = vshll.u32 %v3802, %v3809
        %v3812 = vshrl.u32 %v3794, %v3810
        %v3813 = vor.u32 %v3811, %v3812
        %v3814 = vsub.s32 4294967266, %v3809
        %v3815 = vadd.s32 %v3814, 127
        %v3816 = vshll.u32 %v3815, 23
        %v3817 = vor.u32 4788187, %v3816
        %v3818 = vand.u32 2147483647, %v3817
        %v3820 = vcvt.s32.f32 %v3813
        %v3821 = vmul.f32 %v3820, %v3818
        %v3822 = vxor.u32 %v3821, 2147483648
        %v3823 = vsel %vm3702, %v3822, %v3821
        %v3824 = vsub.s32 4, %v3800
        %v3825 = vsel %vm3702, %v3824, %v3800
        %v3826 = vsel %vm3701, %v280, %v3823
        %v3827 = vsel %vm3701, 0, %v3825
        %v3828 = vmul.f32 %v3826, %v3826
        %v3829 = vmul.f32 %v3828, -0.001358992
        %v3830 = vadd.f32 %v3829, 0.041655596
        %v3831 = vmul.f32 %v3828, %v3830
        %v3832 = vadd.f32 %v3831, -0.4999988
        %v3833 = vmul.f32 %v3828, %v3832
        %v3834 = vadd.f32 1.0, %v3833
        %v3835 = vmul.f32 %v3826, %v3826
        %v3836 = vmul.f32 %v3835, -0.00019511016
        %v3837 = vadd.f32 %v3836, 0.008332121
        %v3838 = vmul.f32 %v3835, %v3837
        %v3839 = vadd.f32 %v3838, -0.16666654
        %v3840 = vmul.f32 %v3835, %v3839
        %v3841 = vadd.f32 %v3840, 1.0
        %v3842 = vmul.f32 %v3841, %v3826
        %vm3843 = vweird.f32 %v280
        %v3844 = vadd.s32 %v3827, 3
        %v3845 = vand.u32 %v3844, 3
        %vm3846 = vcmp.lt.s32.totalorder %v3845, 2
        %vm3847 = vcmp.eq.s32.totalorder %v3845, 0
        %v3848 = vxor.u32 %v3842, 2147483648
        %v3849 = vsel %vm3847, %v3834, %v3848
        %vm3850 = vcmp.eq.s32.totalorder %v3845, 2
        %v3851 = vxor.u32 %v3834, 2147483648
        %v3852 = vsel %vm3850, %v3851, %v3842
        %v3853 = vsel %vm3846, %v3849, %v3852
        %v3854 = vsel %vm3843, nan, %v3853
        %v3855 = vand.u32 2147483647, %v281
        %vm3856 = vcmp.le.f32.partialorder %v3855, 0.7853982
        %vm3857 = vcmp.lt.s32.totalorder %v281, 0
        %v3858 = vand.u32 %v281, 2139095040
        %v3859 = vshrl.u32 %v3858, 23
        %v3860 = vsub.s32 %v3859, 127
        %v3861 = vand.u32 2147483647, %v281
        %v3862 = vand.u32 %v3861, 8388607
        %v3863 = vor.u32 %v3862, 8388608
        %v3864 = vsub.s32 0, %v3863
        %v3865 = vadd.s32 %v3860, 1
        %vm3866 = vcmp.gt.s32.totalorder %v3865, 0
        %v3867 = vsel %vm3866, %v3865, 0
        %v3868 = vshrl.u32 %v3867, 5
        %v3869 = vand.u32 %v3867, 31
        %v3870 = vsub.s32 32, %v3869
        %v3871 = vshrl.u32 683565275, %v3870
        %v3872 = vshll.u32 683565275, %v3869
        %v3873 = vshrl.u32 2475754826, %v3870
        %v3874 = vor.u32 %v3872, %v3873
        %v3875 = vshll.u32 2475754826, %v3869
        %v3876 = vshrl.u32 2131351028, %v3870
        %v3877 = vor.u32 %v3875, %v3876
        %v3878 = vshll.u32 2131351028, %v3869
        %v3879 = vshrl.u32 2102212464, %v3870
        %v3880 = vor.u32 %v3878, %v3879
        %v3881 = vshll.u32 2102212464, %v3869
        %v3882 = vshrl.u32 920167782, %v3870
        %v3883 = vor.u32 %v3881, %v3882
        %v3884 = vshll.u32 920167782, %v3869
        %v3885 = vshrl.u32 1326507024, %v3870
        %v3886 = vor.u32 %v3884, %v3885
        %vm3887 = vcmp.lt.s32.totalorder %v3868, 1
        %vm3888 = vcmp.lt.s32.totalorder %v3868, 2
        %vm3889 = vcmp.lt.s32.totalorder %v3868, 3
        %vm3890 = vcmp.lt.s32.totalorder %v3868, 4
        %v3891 = vsel %vm3887, %v3871, %v3874
        %v3892 = vsel %vm3890, %v3880, 2102212464
        %v3893 = vsel %vm3889, %v3877, %v3892
        %v3894 = vsel %vm3888, %v3891, %v3893
        %v3895 = vsel %vm3887, %v3874, %v3877
        %v3896 = vsel %vm3890, %v3883, 920167782
        %v3897 = vsel %vm3889, %v3880, %v3896
        %v3898 = vsel %vm3888, %v3895, %v3897
        %v3899 = vsel %vm3887, %v3877, %v3880
        %v3900 = vsel %vm3890, %v3886, 1326507024
        %v3901 = vsel %vm3889, %v3883, %v3900
        %v3902 = vsel %vm3888, %v3899, %v3901
        %v3903 = vshll.u32 %v3863, 8
        %v3904 = vand.u32 %v3903, 65535
        %v3905 = vshrl.u32 %v3903, 16
        %v3906 = vand.u32 %v3902, 65535
        %v3907 = vshrl.u32 %v3902, 16
        %v3908 = vmul.u32 %v3904, %v3906
        %v3909 = vmul.u32 %v3904, %v3907
        %v3910 = vmul.u32 %v3905, %v3906
        %v3911 = vmul.u32 %v3905, %v3907
        %v3912 = vshll.u32 %v3909, 16
        %v3913 = vshrl.u32 %v3909, 16
        %v3914 = vshll.u32 %v3910, 16
        %v3915 = vshrl.u32 %v3910, 16
        %vm3916 = vc.u32 %v3908, %v3912
        %v3917 = vsel %vm3916, 1, 0
        %v3918 = vadd.s32 %v3908, %v3912
        %v3919 = vadd.s32 %v3911, %v3917
        %vm3920 = vc.u32 %v3918, %v3914
        %v3921 = vsel %vm3920, 1, 0
        %v3922 = vadd.s32 %v3918, %v3914
        %v3923 = vadd.s32 %v3919, %v3921
        %v3924 = vadd.s32 %v3923, %v3913
        %v3925 = vadd.s32 %v3924, %v3915
        %v3926 = vand.u32 %v3903, 65535
        %v3927 = vshrl.u32 %v3903, 16
        %v3928 = vand.u32 %v3898, 65535
        %v3929 = vshrl.u32 %v3898, 16
        %v3930 = vmul.u32 %v3926, %v3928
        %v3931 = vmul.u32 %v3926, %v3929
        %v3932 = vmul.u32 %v3927, %v3928
        %v3933 = vmul.u32 %v3927, %v3929
        %v3934 = vshll.u32 %v3931, 16
        %v3935 = vshrl.u32 %v3931, 16
        %v3936 = vshll.u32 %v3932, 16
        %v3937 = vshrl.u32 %v3932, 16
        %vm3938 = vc.u32 %v3930, %v3934
        %v3939 = vsel %vm3938, 1, 0
        %v3940 = vadd.s32 %v3930, %v3934
        %v3941 = vadd.s32 %v3933, %v3939
        %vm3942 = vc.u32 %v3940, %v3936
        %v3943 = vsel %vm3942, 1, 0
        %v3944 = vadd.s32 %v3940, %v3936
        %v3945 = vadd.s32 %v3941, %v3943
        %v3946 = vadd.s32 %v3945, %v3935
        %v3947 = vadd.s32 %v3946, %v3937
        %v3948 = vmul.u32 %v3903, %v3894
        %v3949 = vadd.s32 %v3925, %v3944
        %vm3950 = vc.u32 %v3925, %v3944
        %v3951 = vadd.s32 %v3947, 1
        %v3952 = vsel %vm3950, %v3951, %v3947
        %v3953 = vadd.s32 %v3948, %v3952
        %v3954 = vadd.s32 %v3953, 536870912
        %v3955 = vshrl.u32 %v3954, 30
        %v3956 = vshll.u32 %v3955, 30
        %v3957 = vsub.s32 %v3953, %v3956
        %vm3958 = vcmp.lt.s32.totalorder %v3957, 0
        %v3959 = vsub.s32 0, %v3957
        %v3960 = vsel %vm3958, %v3959, %v3957
        %v3961 = vclz %v3960
        %v3962 = vsub.s32 %v3961, 2
        %vm3963 = vcmp.gt.s32.totalorder 0, %v3962
        %v3964 = vsel %vm3963, 0, %v3962
        %v3965 = vsub.s32 32, %v3964
        %v3966 = vshll.u32 %v3957, %v3964
        %v3967 = vshrl.u32 %v3949, %v3965
        %v3968 = vor.u32 %v3966, %v3967
        %v3969 = vsub.s32 4294967266, %v3964
        %v3970 = vadd.s32 %v3969, 127
        %v3971 = vshll.u32 %v3970, 23
        %v3972 = vor.u32 4788187, %v3971
        %v3973 = vand.u32 2147483647, %v3972
        %v3975 = vcvt.s32.f32 %v3968
        %v3976 = vmul.f32 %v3975, %v3973
        %v3977 = vxor.u32 %v3976, 2147483648
        %v3978 = vsel %vm3857, %v3977, %v3976
        %v3979 = vsub.s32 4, %v3955
        %v3980 = vsel %vm3857, %v3979, %v3955
        %v3981 = vsel %vm3856, %v281, %v3978
        %v3982 = vsel %vm3856, 0, %v3980
        %v3983 = vmul.f32 %v3981, %v3981
        %v3984 = vmul.f32 %v3983, -0.001358992
        %v3985 = vadd.f32 %v3984, 0.041655596
        %v3986 = vmul.f32 %v3983, %v3985
        %v3987 = vadd.f32 %v3986, -0.4999988
        %v3988 = vmul.f32 %v3983, %v3987
        %v3989 = vadd.f32 1.0, %v3988
        %v3990 = vmul.f32 %v3981, %v3981
        %v3991 = vmul.f32 %v3990, -0.00019511016
        %v3992 = vadd.f32 %v3991, 0.008332121
        %v3993 = vmul.f32 %v3990, %v3992
        %v3994 = vadd.f32 %v3993, -0.16666654
        %v3995 = vmul.f32 %v3990, %v3994
        %v3996 = vadd.f32 %v3995, 1.0
        %v3997 = vmul.f32 %v3996, %v3981
        %vm3998 = vweird.f32 %v281
        %v3999 = vadd.s32 %v3982, 3
        %v4000 = vand.u32 %v3999, 3
        %vm4001 = vcmp.lt.s32.totalorder %v4000, 2
        %vm4002 = vcmp.eq.s32.totalorder %v4000, 0
        %v4003 = vxor.u32 %v3997, 2147483648
        %v4004 = vsel %vm4002, %v3989, %v4003
        %vm4005 = vcmp.eq.s32.totalorder %v4000, 2
        %v4006 = vxor.u32 %v3989, 2147483648
        %v4007 = vsel %vm4005, %v4006, %v3997
        %v4008 = vsel %vm4001, %v4004, %v4007
        %v4009 = vsel %vm3998, nan, %v4008
        %v4010 = vand.u32 2147483647, %v282
        %vm4011 = vcmp.le.f32.partialorder %v4010, 0.7853982
        %vm4012 = vcmp.lt.s32.totalorder %v282, 0
        %v4013 = vand.u32 %v282, 2139095040
        %v4014 = vshrl.u32 %v4013, 23
        %v4015 = vsub.s32 %v4014, 127
        %v4016 = vand.u32 2147483647, %v282
        %v4017 = vand.u32 %v4016, 8388607
        %v4018 = vor.u32 %v4017, 8388608
        %v4019 = vsub.s32 0, %v4018
        %v4020 = vadd.s32 %v4015, 1
        %vm4021 = vcmp.gt.s32.totalorder %v4020, 0
        %v4022 = vsel %vm4021, %v4020, 0
        %v4023 = vshrl.u32 %v4022, 5
        %v4024 = vand.u32 %v4022, 31
        %v4025 = vsub.s32 32, %v4024
        %v4026 = vshrl.u32 683565275, %v4025
        %v4027 = vshll.u32 683565275, %v4024
        %v4028 = vshrl.u32 2475754826, %v4025
        %v4029 = vor.u32 %v4027, %v4028
        %v4030 = vshll.u32 2475754826, %v4024
        %v4031 = vshrl.u32 2131351028, %v4025
        %v4032 = vor.u32 %v4030, %v4031
        %v4033 = vshll.u32 2131351028, %v4024
        %v4034 = vshrl.u32 2102212464, %v4025
        %v4035 = vor.u32 %v4033, %v4034
        %v4036 = vshll.u32 2102212464, %v4024
        %v4037 = vshrl.u32 920167782, %v4025
        %v4038 = vor.u32 %v4036, %v4037
        %v4039 = vshll.u32 920167782, %v4024
        %v4040 = vshrl.u32 1326507024, %v4025
        %v4041 = vor.u32 %v4039, %v4040
        %vm4042 = vcmp.lt.s32.totalorder %v4023, 1
        %vm4043 = vcmp.lt.s32.totalorder %v4023, 2
        %vm4044 = vcmp.lt.s32.totalorder %v4023, 3
        %vm4045 = vcmp.lt.s32.totalorder %v4023, 4
        %v4046 = vsel %vm4042, %v4026, %v4029
        %v4047 = vsel %vm4045, %v4035, 2102212464
        %v4048 = vsel %vm4044, %v4032, %v4047
        %v4049 = vsel %vm4043, %v4046, %v4048
        %v4050 = vsel %vm4042, %v4029, %v4032
        %v4051 = vsel %vm4045, %v4038, 920167782
        %v4052 = vsel %vm4044, %v4035, %v4051
        %v4053 = vsel %vm4043, %v4050, %v4052
        %v4054 = vsel %vm4042, %v4032, %v4035
        %v4055 = vsel %vm4045, %v4041, 1326507024
        %v4056 = vsel %vm4044, %v4038, %v4055
        %v4057 = vsel %vm4043, %v4054, %v4056
        %v4058 = vshll.u32 %v4018, 8
        %v4059 = vand.u32 %v4058, 65535
        %v4060 = vshrl.u32 %v4058, 16
        %v4061 = vand.u32 %v4057, 65535
        %v4062 = vshrl.u32 %v4057, 16
        %v4063 = vmul.u32 %v4059, %v4061
        %v4064 = vmul.u32 %v4059, %v4062
        %v4065 = vmul.u32 %v4060, %v4061
        %v4066 = vmul.u32 %v4060, %v4062
        %v4067 = vshll.u32 %v4064, 16
        %v4068 = vshrl.u32 %v4064, 16
        %v4069 = vshll.u32 %v4065, 16
        %v4070 = vshrl.u32 %v4065, 16
        %vm4071 = vc.u32 %v4063, %v4067
        %v4072 = vsel %vm4071, 1, 0
        %v4073 = vadd.s32 %v4063, %v4067
        %v4074 = vadd.s32 %v4066, %v4072
        %vm4075 = vc.u32 %v4073, %v4069
        %v4076 = vsel %vm4075, 1, 0
        %v4077 = vadd.s32 %v4073, %v4069
        %v4078 = vadd.s32 %v4074, %v4076
        %v4079 = vadd.s32 %v4078, %v4068
        %v4080 = vadd.s32 %v4079, %v4070
        %v4081 = vand.u32 %v4058, 65535
        %v4082 = vshrl.u32 %v4058, 16
        %v4083 = vand.u32 %v4053, 65535
        %v4084 = vshrl.u32 %v4053, 16
        %v4085 = vmul.u32 %v4081, %v4083
        %v4086 = vmul.u32 %v4081, %v4084
        %v4087 = vmul.u32 %v4082, %v4083
        %v4088 = vmul.u32 %v4082, %v4084
        %v4089 = vshll.u32 %v4086, 16
        %v4090 = vshrl.u32 %v4086, 16
        %v4091 = vshll.u32 %v4087, 16
        %v4092 = vshrl.u32 %v4087, 16
        %vm4093 = vc.u32 %v4085, %v4089
        %v4094 = vsel %vm4093, 1, 0
        %v4095 = vadd.s32 %v4085, %v4089
        %v4096 = vadd.s32 %v4088, %v4094
        %vm4097 = vc.u32 %v4095, %v4091
        %v4098 = vsel %vm4097, 1, 0
        %v4099 = vadd.s32 %v4095, %v4091
        %v4100 = vadd.s32 %v4096, %v4098
        %v4101 = vadd.s32 %v4100, %v4090
        %v4102 = vadd.s32 %v4101, %v4092
        %v4103 = vmul.u32 %v4058, %v4049
        %v4104 = vadd.s32 %v4080, %v4099
        %vm4105 = vc.u32 %v4080, %v4099
        %v4106 = vadd.s32 %v4102, 1
        %v4107 = vsel %vm4105, %v4106, %v4102
        %v4108 = vadd.s32 %v4103, %v4107
        %v4109 = vadd.s32 %v4108, 536870912
        %v4110 = vshrl.u32 %v4109, 30
        %v4111 = vshll.u32 %v4110, 30
        %v4112 = vsub.s32 %v4108, %v4111
        %vm4113 = vcmp.lt.s32.totalorder %v4112, 0
        %v4114 = vsub.s32 0, %v4112
        %v4115 = vsel %vm4113, %v4114, %v4112
        %v4116 = vclz %v4115
        %v4117 = vsub.s32 %v4116, 2
        %vm4118 = vcmp.gt.s32.totalorder 0, %v4117
        %v4119 = vsel %vm4118, 0, %v4117
        %v4120 = vsub.s32 32, %v4119
        %v4121 = vshll.u32 %v4112, %v4119
        %v4122 = vshrl.u32 %v4104, %v4120
        %v4123 = vor.u32 %v4121, %v4122
        %v4124 = vsub.s32 4294967266, %v4119
        %v4125 = vadd.s32 %v4124, 127
        %v4126 = vshll.u32 %v4125, 23
        %v4127 = vor.u32 4788187, %v4126
        %v4128 = vand.u32 2147483647, %v4127
        %v4130 = vcvt.s32.f32 %v4123
        %v4131 = vmul.f32 %v4130, %v4128
        %v4132 = vxor.u32 %v4131, 2147483648
        %v4133 = vsel %vm4012, %v4132, %v4131
        %v4134 = vsub.s32 4, %v4110
        %v4135 = vsel %vm4012, %v4134, %v4110
        %v4136 = vsel %vm4011, %v282, %v4133
        %v4137 = vsel %vm4011, 0, %v4135
        %v4138 = vmul.f32 %v4136, %v4136
        %v4139 = vmul.f32 %v4138, -0.001358992
        %v4140 = vadd.f32 %v4139, 0.041655596
        %v4141 = vmul.f32 %v4138, %v4140
        %v4142 = vadd.f32 %v4141, -0.4999988
        %v4143 = vmul.f32 %v4138, %v4142
        %v4144 = vadd.f32 1.0, %v4143
        %v4145 = vmul.f32 %v4136, %v4136
        %v4146 = vmul.f32 %v4145, -0.00019511016
        %v4147 = vadd.f32 %v4146, 0.008332121
        %v4148 = vmul.f32 %v4145, %v4147
        %v4149 = vadd.f32 %v4148, -0.16666654
        %v4150 = vmul.f32 %v4145, %v4149
        %v4151 = vadd.f32 %v4150, 1.0
        %v4152 = vmul.f32 %v4151, %v4136
        %vm4153 = vweird.f32 %v282
        %v4154 = vadd.s32 %v4137, 3
        %v4155 = vand.u32 %v4154, 3
        %vm4156 = vcmp.lt.s32.totalorder %v4155, 2
        %vm4157 = vcmp.eq.s32.totalorder %v4155, 0
        %v4158 = vxor.u32 %v4152, 2147483648
        %v4159 = vsel %vm4157, %v4144, %v4158
        %vm4160 = vcmp.eq.s32.totalorder %v4155, 2
        %v4161 = vxor.u32 %v4144, 2147483648
        %v4162 = vsel %vm4160, %v4161, %v4152
        %v4163 = vsel %vm4156, %v4159, %v4162
        %v4164 = vsel %vm4153, nan, %v4163
        %v4165 = vand.u32 2147483647, %v283
        %vm4166 = vcmp.le.f32.partialorder %v4165, 0.7853982
        %vm4167 = vcmp.lt.s32.totalorder %v283, 0
        %v4168 = vand.u32 %v283, 2139095040
        %v4169 = vshrl.u32 %v4168, 23
        %v4170 = vsub.s32 %v4169, 127
        %v4171 = vand.u32 2147483647, %v283
        %v4172 = vand.u32 %v4171, 8388607
        %v4173 = vor.u32 %v4172, 8388608
        %v4174 = vsub.s32 0, %v4173
        %v4175 = vadd.s32 %v4170, 1
        %vm4176 = vcmp.gt.s32.totalorder %v4175, 0
        %v4177 = vsel %vm4176, %v4175, 0
        %v4178 = vshrl.u32 %v4177, 5
        %v4179 = vand.u32 %v4177, 31
        %v4180 = vsub.s32 32, %v4179
        %v4181 = vshrl.u32 683565275, %v4180
        %v4182 = vshll.u32 683565275, %v4179
        %v4183 = vshrl.u32 2475754826, %v4180
        %v4184 = vor.u32 %v4182, %v4183
        %v4185 = vshll.u32 2475754826, %v4179
        %v4186 = vshrl.u32 2131351028, %v4180
        %v4187 = vor.u32 %v4185, %v4186
        %v4188 = vshll.u32 2131351028, %v4179
        %v4189 = vshrl.u32 2102212464, %v4180
        %v4190 = vor.u32 %v4188, %v4189
        %v4191 = vshll.u32 2102212464, %v4179
        %v4192 = vshrl.u32 920167782, %v4180
        %v4193 = vor.u32 %v4191, %v4192
        %v4194 = vshll.u32 920167782, %v4179
        %v4195 = vshrl.u32 1326507024, %v4180
        %v4196 = vor.u32 %v4194, %v4195
        %vm4197 = vcmp.lt.s32.totalorder %v4178, 1
        %vm4198 = vcmp.lt.s32.totalorder %v4178, 2
        %vm4199 = vcmp.lt.s32.totalorder %v4178, 3
        %vm4200 = vcmp.lt.s32.totalorder %v4178, 4
        %v4201 = vsel %vm4197, %v4181, %v4184
        %v4202 = vsel %vm4200, %v4190, 2102212464
        %v4203 = vsel %vm4199, %v4187, %v4202
        %v4204 = vsel %vm4198, %v4201, %v4203
        %v4205 = vsel %vm4197, %v4184, %v4187
        %v4206 = vsel %vm4200, %v4193, 920167782
        %v4207 = vsel %vm4199, %v4190, %v4206
        %v4208 = vsel %vm4198, %v4205, %v4207
        %v4209 = vsel %vm4197, %v4187, %v4190
        %v4210 = vsel %vm4200, %v4196, 1326507024
        %v4211 = vsel %vm4199, %v4193, %v4210
        %v4212 = vsel %vm4198, %v4209, %v4211
        %v4213 = vshll.u32 %v4173, 8
        %v4214 = vand.u32 %v4213, 65535
        %v4215 = vshrl.u32 %v4213, 16
        %v4216 = vand.u32 %v4212, 65535
        %v4217 = vshrl.u32 %v4212, 16
        %v4218 = vmul.u32 %v4214, %v4216
        %v4219 = vmul.u32 %v4214, %v4217
        %v4220 = vmul.u32 %v4215, %v4216
        %v4221 = vmul.u32 %v4215, %v4217
        %v4222 = vshll.u32 %v4219, 16
        %v4223 = vshrl.u32 %v4219, 16
        %v4224 = vshll.u32 %v4220, 16
        %v4225 = vshrl.u32 %v4220, 16
        %vm4226 = vc.u32 %v4218, %v4222
        %v4227 = vsel %vm4226, 1, 0
        %v4228 = vadd.s32 %v4218, %v4222
        %v4229 = vadd.s32 %v4221, %v4227
        %vm4230 = vc.u32 %v4228, %v4224
        %v4231 = vsel %vm4230, 1, 0
        %v4232 = vadd.s32 %v4228, %v4224
        %v4233 = vadd.s32 %v4229, %v4231
        %v4234 = vadd.s32 %v4233, %v4223
        %v4235 = vadd.s32 %v4234, %v4225
        %v4236 = vand.u32 %v4213, 65535
        %v4237 = vshrl.u32 %v4213, 16
        %v4238 = vand.u32 %v4208, 65535
        %v4239 = vshrl.u32 %v4208, 16
        %v4240 = vmul.u32 %v4236, %v4238
        %v4241 = vmul.u32 %v4236, %v4239
        %v4242 = vmul.u32 %v4237, %v4238
        %v4243 = vmul.u32 %v4237, %v4239
        %v4244 = vshll.u32 %v4241, 16
        %v4245 = vshrl.u32 %v4241, 16
        %v4246 = vshll.u32 %v4242, 16
        %v4247 = vshrl.u32 %v4242, 16
        %vm4248 = vc.u32 %v4240, %v4244
        %v4249 = vsel %vm4248, 1, 0
        %v4250 = vadd.s32 %v4240, %v4244
        %v4251 = vadd.s32 %v4243, %v4249
        %vm4252 = vc.u32 %v4250, %v4246
        %v4253 = vsel %vm4252, 1, 0
        %v4254 = vadd.s32 %v4250, %v4246
        %v4255 = vadd.s32 %v4251, %v4253
        %v4256 = vadd.s32 %v4255, %v4245
        %v4257 = vadd.s32 %v4256, %v4247
        %v4258 = vmul.u32 %v4213, %v4204
        %v4259 = vadd.s32 %v4235, %v4254
        %vm4260 = vc.u32 %v4235, %v4254
        %v4261 = vadd.s32 %v4257, 1
        %v4262 = vsel %vm4260, %v4261, %v4257
        %v4263 = vadd.s32 %v4258, %v4262
        %v4264 = vadd.s32 %v4263, 536870912
        %v4265 = vshrl.u32 %v4264, 30
        %v4266 = vshll.u32 %v4265, 30
        %v4267 = vsub.s32 %v4263, %v4266
        %vm4268 = vcmp.lt.s32.totalorder %v4267, 0
        %v4269 = vsub.s32 0, %v4267
        %v4270 = vsel %vm4268, %v4269, %v4267
        %v4271 = vclz %v4270
        %v4272 = vsub.s32 %v4271, 2
        %vm4273 = vcmp.gt.s32.totalorder 0, %v4272
        %v4274 = vsel %vm4273, 0, %v4272
        %v4275 = vsub.s32 32, %v4274
        %v4276 = vshll.u32 %v4267, %v4274
        %v4277 = vshrl.u32 %v4259, %v4275
        %v4278 = vor.u32 %v4276, %v4277
        %v4279 = vsub.s32 4294967266, %v4274
        %v4280 = vadd.s32 %v4279, 127
        %v4281 = vshll.u32 %v4280, 23
        %v4282 = vor.u32 4788187, %v4281
        %v4283 = vand.u32 2147483647, %v4282
        %v4285 = vcvt.s32.f32 %v4278
        %v4286 = vmul.f32 %v4285, %v4283
        %v4287 = vxor.u32 %v4286, 2147483648
        %v4288 = vsel %vm4167, %v4287, %v4286
        %v4289 = vsub.s32 4, %v4265
        %v4290 = vsel %vm4167, %v4289, %v4265
        %v4291 = vsel %vm4166, %v283, %v4288
        %v4292 = vsel %vm4166, 0, %v4290
        %v4293 = vmul.f32 %v4291, %v4291
        %v4294 = vmul.f32 %v4293, -0.001358992
        %v4295 = vadd.f32 %v4294, 0.041655596
        %v4296 = vmul.f32 %v4293, %v4295
        %v4297 = vadd.f32 %v4296, -0.4999988
        %v4298 = vmul.f32 %v4293, %v4297
        %v4299 = vadd.f32 1.0, %v4298
        %v4300 = vmul.f32 %v4291, %v4291
        %v4301 = vmul.f32 %v4300, -0.00019511016
        %v4302 = vadd.f32 %v4301, 0.008332121
        %v4303 = vmul.f32 %v4300, %v4302
        %v4304 = vadd.f32 %v4303, -0.16666654
        %v4305 = vmul.f32 %v4300, %v4304
        %v4306 = vadd.f32 %v4305, 1.0
        %v4307 = vmul.f32 %v4306, %v4291
        %vm4308 = vweird.f32 %v283
        %v4309 = vadd.s32 %v4292, 3
        %v4310 = vand.u32 %v4309, 3
        %vm4311 = vcmp.lt.s32.totalorder %v4310, 2
        %vm4312 = vcmp.eq.s32.totalorder %v4310, 0
        %v4313 = vxor.u32 %v4307, 2147483648
        %v4314 = vsel %vm4312, %v4299, %v4313
        %vm4315 = vcmp.eq.s32.totalorder %v4310, 2
        %v4316 = vxor.u32 %v4299, 2147483648
        %v4317 = vsel %vm4315, %v4316, %v4307
        %v4318 = vsel %vm4311, %v4314, %v4317
        %v4319 = vsel %vm4308, nan, %v4318
        %v4320 = vand.u32 2147483647, %v284
        %vm4321 = vcmp.le.f32.partialorder %v4320, 0.7853982
        %vm4322 = vcmp.lt.s32.totalorder %v284, 0
        %v4323 = vand.u32 %v284, 2139095040
        %v4324 = vshrl.u32 %v4323, 23
        %v4325 = vsub.s32 %v4324, 127
        %v4326 = vand.u32 2147483647, %v284
        %v4327 = vand.u32 %v4326, 8388607
        %v4328 = vor.u32 %v4327, 8388608
        %v4329 = vsub.s32 0, %v4328
        %v4330 = vadd.s32 %v4325, 1
        %vm4331 = vcmp.gt.s32.totalorder %v4330, 0
        %v4332 = vsel %vm4331, %v4330, 0
        %v4333 = vshrl.u32 %v4332, 5
        %v4334 = vand.u32 %v4332, 31
        %v4335 = vsub.s32 32, %v4334
        %v4336 = vshrl.u32 683565275, %v4335
        %v4337 = vshll.u32 683565275, %v4334
        %v4338 = vshrl.u32 2475754826, %v4335
        %v4339 = vor.u32 %v4337, %v4338
        %v4340 = vshll.u32 2475754826, %v4334
        %v4341 = vshrl.u32 2131351028, %v4335
        %v4342 = vor.u32 %v4340, %v4341
        %v4343 = vshll.u32 2131351028, %v4334
        %v4344 = vshrl.u32 2102212464, %v4335
        %v4345 = vor.u32 %v4343, %v4344
        %v4346 = vshll.u32 2102212464, %v4334
        %v4347 = vshrl.u32 920167782, %v4335
        %v4348 = vor.u32 %v4346, %v4347
        %v4349 = vshll.u32 920167782, %v4334
        %v4350 = vshrl.u32 1326507024, %v4335
        %v4351 = vor.u32 %v4349, %v4350
        %vm4352 = vcmp.lt.s32.totalorder %v4333, 1
        %vm4353 = vcmp.lt.s32.totalorder %v4333, 2
        %vm4354 = vcmp.lt.s32.totalorder %v4333, 3
        %vm4355 = vcmp.lt.s32.totalorder %v4333, 4
        %v4356 = vsel %vm4352, %v4336, %v4339
        %v4357 = vsel %vm4355, %v4345, 2102212464
        %v4358 = vsel %vm4354, %v4342, %v4357
        %v4359 = vsel %vm4353, %v4356, %v4358
        %v4360 = vsel %vm4352, %v4339, %v4342
        %v4361 = vsel %vm4355, %v4348, 920167782
        %v4362 = vsel %vm4354, %v4345, %v4361
        %v4363 = vsel %vm4353, %v4360, %v4362
        %v4364 = vsel %vm4352, %v4342, %v4345
        %v4365 = vsel %vm4355, %v4351, 1326507024
        %v4366 = vsel %vm4354, %v4348, %v4365
        %v4367 = vsel %vm4353, %v4364, %v4366
        %v4368 = vshll.u32 %v4328, 8
        %v4369 = vand.u32 %v4368, 65535
        %v4370 = vshrl.u32 %v4368, 16
        %v4371 = vand.u32 %v4367, 65535
        %v4372 = vshrl.u32 %v4367, 16
        %v4373 = vmul.u32 %v4369, %v4371
        %v4374 = vmul.u32 %v4369, %v4372
        %v4375 = vmul.u32 %v4370, %v4371
        %v4376 = vmul.u32 %v4370, %v4372
        %v4377 = vshll.u32 %v4374, 16
        %v4378 = vshrl.u32 %v4374, 16
        %v4379 = vshll.u32 %v4375, 16
        %v4380 = vshrl.u32 %v4375, 16
        %vm4381 = vc.u32 %v4373, %v4377
        %v4382 = vsel %vm4381, 1, 0
        %v4383 = vadd.s32 %v4373, %v4377
        %v4384 = vadd.s32 %v4376, %v4382
        %vm4385 = vc.u32 %v4383, %v4379
        %v4386 = vsel %vm4385, 1, 0
        %v4387 = vadd.s32 %v4383, %v4379
        %v4388 = vadd.s32 %v4384, %v4386
        %v4389 = vadd.s32 %v4388, %v4378
        %v4390 = vadd.s32 %v4389, %v4380
        %v4391 = vand.u32 %v4368, 65535
        %v4392 = vshrl.u32 %v4368, 16
        %v4393 = vand.u32 %v4363, 65535
        %v4394 = vshrl.u32 %v4363, 16
        %v4395 = vmul.u32 %v4391, %v4393
        %v4396 = vmul.u32 %v4391, %v4394
        %v4397 = vmul.u32 %v4392, %v4393
        %v4398 = vmul.u32 %v4392, %v4394
        %v4399 = vshll.u32 %v4396, 16
        %v4400 = vshrl.u32 %v4396, 16
        %v4401 = vshll.u32 %v4397, 16
        %v4402 = vshrl.u32 %v4397, 16
        %vm4403 = vc.u32 %v4395, %v4399
        %v4404 = vsel %vm4403, 1, 0
        %v4405 = vadd.s32 %v4395, %v4399
        %v4406 = vadd.s32 %v4398, %v4404
        %vm4407 = vc.u32 %v4405, %v4401
        %v4408 = vsel %vm4407, 1, 0
        %v4409 = vadd.s32 %v4405, %v4401
        %v4410 = vadd.s32 %v4406, %v4408
        %v4411 = vadd.s32 %v4410, %v4400
        %v4412 = vadd.s32 %v4411, %v4402
        %v4413 = vmul.u32 %v4368, %v4359
        %v4414 = vadd.s32 %v4390, %v4409
        %vm4415 = vc.u32 %v4390, %v4409
        %v4416 = vadd.s32 %v4412, 1
        %v4417 = vsel %vm4415, %v4416, %v4412
        %v4418 = vadd.s32 %v4413, %v4417
        %v4419 = vadd.s32 %v4418, 536870912
        %v4420 = vshrl.u32 %v4419, 30
        %v4421 = vshll.u32 %v4420, 30
        %v4422 = vsub.s32 %v4418, %v4421
        %vm4423 = vcmp.lt.s32.totalorder %v4422, 0
        %v4424 = vsub.s32 0, %v4422
        %v4425 = vsel %vm4423, %v4424, %v4422
        %v4426 = vclz %v4425
        %v4427 = vsub.s32 %v4426, 2
        %vm4428 = vcmp.gt.s32.totalorder 0, %v4427
        %v4429 = vsel %vm4428, 0, %v4427
        %v4430 = vsub.s32 32, %v4429
        %v4431 = vshll.u32 %v4422, %v4429
        %v4432 = vshrl.u32 %v4414, %v4430
        %v4433 = vor.u32 %v4431, %v4432
        %v4434 = vsub.s32 4294967266, %v4429
        %v4435 = vadd.s32 %v4434, 127
        %v4436 = vshll.u32 %v4435, 23
        %v4437 = vor.u32 4788187, %v4436
        %v4438 = vand.u32 2147483647, %v4437
        %v4440 = vcvt.s32.f32 %v4433
        %v4441 = vmul.f32 %v4440, %v4438
        %v4442 = vxor.u32 %v4441, 2147483648
        %v4443 = vsel %vm4322, %v4442, %v4441
        %v4444 = vsub.s32 4, %v4420
        %v4445 = vsel %vm4322, %v4444, %v4420
        %v4446 = vsel %vm4321, %v284, %v4443
        %v4447 = vsel %vm4321, 0, %v4445
        %v4448 = vmul.f32 %v4446, %v4446
        %v4449 = vmul.f32 %v4448, -0.001358992
        %v4450 = vadd.f32 %v4449, 0.041655596
        %v4451 = vmul.f32 %v4448, %v4450
        %v4452 = vadd.f32 %v4451, -0.4999988
        %v4453 = vmul.f32 %v4448, %v4452
        %v4454 = vadd.f32 1.0, %v4453
        %v4455 = vmul.f32 %v4446, %v4446
        %v4456 = vmul.f32 %v4455, -0.00019511016
        %v4457 = vadd.f32 %v4456, 0.008332121
        %v4458 = vmul.f32 %v4455, %v4457
        %v4459 = vadd.f32 %v4458, -0.16666654
        %v4460 = vmul.f32 %v4455, %v4459
        %v4461 = vadd.f32 %v4460, 1.0
        %v4462 = vmul.f32 %v4461, %v4446
        %vm4463 = vweird.f32 %v284
        %v4464 = vadd.s32 %v4447, 3
        %v4465 = vand.u32 %v4464, 3
        %vm4466 = vcmp.lt.s32.totalorder %v4465, 2
        %vm4467 = vcmp.eq.s32.totalorder %v4465, 0
        %v4468 = vxor.u32 %v4462, 2147483648
        %v4469 = vsel %vm4467, %v4454, %v4468
        %vm4470 = vcmp.eq.s32.totalorder %v4465, 2
        %v4471 = vxor.u32 %v4454, 2147483648
        %v4472 = vsel %vm4470, %v4471, %v4462
        %v4473 = vsel %vm4466, %v4469, %v4472
        %v4474 = vsel %vm4463, nan, %v4473
        %v4475 = vand.u32 2147483647, %v285
        %vm4476 = vcmp.le.f32.partialorder %v4475, 0.7853982
        %vm4477 = vcmp.lt.s32.totalorder %v285, 0
        %v4478 = vand.u32 %v285, 2139095040
        %v4479 = vshrl.u32 %v4478, 23
        %v4480 = vsub.s32 %v4479, 127
        %v4481 = vand.u32 2147483647, %v285
        %v4482 = vand.u32 %v4481, 8388607
        %v4483 = vor.u32 %v4482, 8388608
        %v4484 = vsub.s32 0, %v4483
        %v4485 = vadd.s32 %v4480, 1
        %vm4486 = vcmp.gt.s32.totalorder %v4485, 0
        %v4487 = vsel %vm4486, %v4485, 0
        %v4488 = vshrl.u32 %v4487, 5
        %v4489 = vand.u32 %v4487, 31
        %v4490 = vsub.s32 32, %v4489
        %v4491 = vshrl.u32 683565275, %v4490
        %v4492 = vshll.u32 683565275, %v4489
        %v4493 = vshrl.u32 2475754826, %v4490
        %v4494 = vor.u32 %v4492, %v4493
        %v4495 = vshll.u32 2475754826, %v4489
        %v4496 = vshrl.u32 2131351028, %v4490
        %v4497 = vor.u32 %v4495, %v4496
        %v4498 = vshll.u32 2131351028, %v4489
        %v4499 = vshrl.u32 2102212464, %v4490
        %v4500 = vor.u32 %v4498, %v4499
        %v4501 = vshll.u32 2102212464, %v4489
        %v4502 = vshrl.u32 920167782, %v4490
        %v4503 = vor.u32 %v4501, %v4502
        %v4504 = vshll.u32 920167782, %v4489
        %v4505 = vshrl.u32 1326507024, %v4490
        %v4506 = vor.u32 %v4504, %v4505
        %vm4507 = vcmp.lt.s32.totalorder %v4488, 1
        %vm4508 = vcmp.lt.s32.totalorder %v4488, 2
        %vm4509 = vcmp.lt.s32.totalorder %v4488, 3
        %vm4510 = vcmp.lt.s32.totalorder %v4488, 4
        %v4511 = vsel %vm4507, %v4491, %v4494
        %v4512 = vsel %vm4510, %v4500, 2102212464
        %v4513 = vsel %vm4509, %v4497, %v4512
        %v4514 = vsel %vm4508, %v4511, %v4513
        %v4515 = vsel %vm4507, %v4494, %v4497
        %v4516 = vsel %vm4510, %v4503, 920167782
        %v4517 = vsel %vm4509, %v4500, %v4516
        %v4518 = vsel %vm4508, %v4515, %v4517
        %v4519 = vsel %vm4507, %v4497, %v4500
        %v4520 = vsel %vm4510, %v4506, 1326507024
        %v4521 = vsel %vm4509, %v4503, %v4520
        %v4522 = vsel %vm4508, %v4519, %v4521
        %v4523 = vshll.u32 %v4483, 8
        %v4524 = vand.u32 %v4523, 65535
        %v4525 = vshrl.u32 %v4523, 16
        %v4526 = vand.u32 %v4522, 65535
        %v4527 = vshrl.u32 %v4522, 16
        %v4528 = vmul.u32 %v4524, %v4526
        %v4529 = vmul.u32 %v4524, %v4527
        %v4530 = vmul.u32 %v4525, %v4526
        %v4531 = vmul.u32 %v4525, %v4527
        %v4532 = vshll.u32 %v4529, 16
        %v4533 = vshrl.u32 %v4529, 16
        %v4534 = vshll.u32 %v4530, 16
        %v4535 = vshrl.u32 %v4530, 16
        %vm4536 = vc.u32 %v4528, %v4532
        %v4537 = vsel %vm4536, 1, 0
        %v4538 = vadd.s32 %v4528, %v4532
        %v4539 = vadd.s32 %v4531, %v4537
        %vm4540 = vc.u32 %v4538, %v4534
        %v4541 = vsel %vm4540, 1, 0
        %v4542 = vadd.s32 %v4538, %v4534
        %v4543 = vadd.s32 %v4539, %v4541
        %v4544 = vadd.s32 %v4543, %v4533
        %v4545 = vadd.s32 %v4544, %v4535
        %v4546 = vand.u32 %v4523, 65535
        %v4547 = vshrl.u32 %v4523, 16
        %v4548 = vand.u32 %v4518, 65535
        %v4549 = vshrl.u32 %v4518, 16
        %v4550 = vmul.u32 %v4546, %v4548
        %v4551 = vmul.u32 %v4546, %v4549
        %v4552 = vmul.u32 %v4547, %v4548
        %v4553 = vmul.u32 %v4547, %v4549
        %v4554 = vshll.u32 %v4551, 16
        %v4555 = vshrl.u32 %v4551, 16
        %v4556 = vshll.u32 %v4552, 16
        %v4557 = vshrl.u32 %v4552, 16
        %vm4558 = vc.u32 %v4550, %v4554
        %v4559 = vsel %vm4558, 1, 0
        %v4560 = vadd.s32 %v4550, %v4554
        %v4561 = vadd.s32 %v4553, %v4559
        %vm4562 = vc.u32 %v4560, %v4556
        %v4563 = vsel %vm4562, 1, 0
        %v4564 = vadd.s32 %v4560, %v4556
        %v4565 = vadd.s32 %v4561, %v4563
        %v4566 = vadd.s32 %v4565, %v4555
        %v4567 = vadd.s32 %v4566, %v4557
        %v4568 = vmul.u32 %v4523, %v4514
        %v4569 = vadd.s32 %v4545, %v4564
        %vm4570 = vc.u32 %v4545, %v4564
        %v4571 = vadd.s32 %v4567, 1
        %v4572 = vsel %vm4570, %v4571, %v4567
        %v4573 = vadd.s32 %v4568, %v4572
        %v4574 = vadd.s32 %v4573, 536870912
        %v4575 = vshrl.u32 %v4574, 30
        %v4576 = vshll.u32 %v4575, 30
        %v4577 = vsub.s32 %v4573, %v4576
        %vm4578 = vcmp.lt.s32.totalorder %v4577, 0
        %v4579 = vsub.s32 0, %v4577
        %v4580 = vsel %vm4578, %v4579, %v4577
        %v4581 = vclz %v4580
        %v4582 = vsub.s32 %v4581, 2
        %vm4583 = vcmp.gt.s32.totalorder 0, %v4582
        %v4584 = vsel %vm4583, 0, %v4582
        %v4585 = vsub.s32 32, %v4584
        %v4586 = vshll.u32 %v4577, %v4584
        %v4587 = vshrl.u32 %v4569, %v4585
        %v4588 = vor.u32 %v4586, %v4587
        %v4589 = vsub.s32 4294967266, %v4584
        %v4590 = vadd.s32 %v4589, 127
        %v4591 = vshll.u32 %v4590, 23
        %v4592 = vor.u32 4788187, %v4591
        %v4593 = vand.u32 2147483647, %v4592
        %v4595 = vcvt.s32.f32 %v4588
        %v4596 = vmul.f32 %v4595, %v4593
        %v4597 = vxor.u32 %v4596, 2147483648
        %v4598 = vsel %vm4477, %v4597, %v4596
        %v4599 = vsub.s32 4, %v4575
        %v4600 = vsel %vm4477, %v4599, %v4575
        %v4601 = vsel %vm4476, %v285, %v4598
        %v4602 = vsel %vm4476, 0, %v4600
        %v4603 = vmul.f32 %v4601, %v4601
        %v4604 = vmul.f32 %v4603, -0.001358992
        %v4605 = vadd.f32 %v4604, 0.041655596
        %v4606 = vmul.f32 %v4603, %v4605
        %v4607 = vadd.f32 %v4606, -0.4999988
        %v4608 = vmul.f32 %v4603, %v4607
        %v4609 = vadd.f32 1.0, %v4608
        %v4610 = vmul.f32 %v4601, %v4601
        %v4611 = vmul.f32 %v4610, -0.00019511016
        %v4612 = vadd.f32 %v4611, 0.008332121
        %v4613 = vmul.f32 %v4610, %v4612
        %v4614 = vadd.f32 %v4613, -0.16666654
        %v4615 = vmul.f32 %v4610, %v4614
        %v4616 = vadd.f32 %v4615, 1.0
        %v4617 = vmul.f32 %v4616, %v4601
        %vm4618 = vweird.f32 %v285
        %v4619 = vadd.s32 %v4602, 3
        %v4620 = vand.u32 %v4619, 3
        %vm4621 = vcmp.lt.s32.totalorder %v4620, 2
        %vm4622 = vcmp.eq.s32.totalorder %v4620, 0
        %v4623 = vxor.u32 %v4617, 2147483648
        %v4624 = vsel %vm4622, %v4609, %v4623
        %vm4625 = vcmp.eq.s32.totalorder %v4620, 2
        %v4626 = vxor.u32 %v4609, 2147483648
        %v4627 = vsel %vm4625, %v4626, %v4617
        %v4628 = vsel %vm4621, %v4624, %v4627
        %v4629 = vsel %vm4618, nan, %v4628
        %v4630 = vand.u32 2147483647, %v286
        %vm4631 = vcmp.le.f32.partialorder %v4630, 0.7853982
        %vm4632 = vcmp.lt.s32.totalorder %v286, 0
        %v4633 = vand.u32 %v286, 2139095040
        %v4634 = vshrl.u32 %v4633, 23
        %v4635 = vsub.s32 %v4634, 127
        %v4636 = vand.u32 2147483647, %v286
        %v4637 = vand.u32 %v4636, 8388607
        %v4638 = vor.u32 %v4637, 8388608
        %v4639 = vsub.s32 0, %v4638
        %v4640 = vadd.s32 %v4635, 1
        %vm4641 = vcmp.gt.s32.totalorder %v4640, 0
        %v4642 = vsel %vm4641, %v4640, 0
        %v4643 = vshrl.u32 %v4642, 5
        %v4644 = vand.u32 %v4642, 31
        %v4645 = vsub.s32 32, %v4644
        %v4646 = vshrl.u32 683565275, %v4645
        %v4647 = vshll.u32 683565275, %v4644
        %v4648 = vshrl.u32 2475754826, %v4645
        %v4649 = vor.u32 %v4647, %v4648
        %v4650 = vshll.u32 2475754826, %v4644
        %v4651 = vshrl.u32 2131351028, %v4645
        %v4652 = vor.u32 %v4650, %v4651
        %v4653 = vshll.u32 2131351028, %v4644
        %v4654 = vshrl.u32 2102212464, %v4645
        %v4655 = vor.u32 %v4653, %v4654
        %v4656 = vshll.u32 2102212464, %v4644
        %v4657 = vshrl.u32 920167782, %v4645
        %v4658 = vor.u32 %v4656, %v4657
        %v4659 = vshll.u32 920167782, %v4644
        %v4660 = vshrl.u32 1326507024, %v4645
        %v4661 = vor.u32 %v4659, %v4660
        %vm4662 = vcmp.lt.s32.totalorder %v4643, 1
        %vm4663 = vcmp.lt.s32.totalorder %v4643, 2
        %vm4664 = vcmp.lt.s32.totalorder %v4643, 3
        %vm4665 = vcmp.lt.s32.totalorder %v4643, 4
        %v4666 = vsel %vm4662, %v4646, %v4649
        %v4667 = vsel %vm4665, %v4655, 2102212464
        %v4668 = vsel %vm4664, %v4652, %v4667
        %v4669 = vsel %vm4663, %v4666, %v4668
        %v4670 = vsel %vm4662, %v4649, %v4652
        %v4671 = vsel %vm4665, %v4658, 920167782
        %v4672 = vsel %vm4664, %v4655, %v4671
        %v4673 = vsel %vm4663, %v4670, %v4672
        %v4674 = vsel %vm4662, %v4652, %v4655
        %v4675 = vsel %vm4665, %v4661, 1326507024
        %v4676 = vsel %vm4664, %v4658, %v4675
        %v4677 = vsel %vm4663, %v4674, %v4676
        %v4678 = vshll.u32 %v4638, 8
        %v4679 = vand.u32 %v4678, 65535
        %v4680 = vshrl.u32 %v4678, 16
        %v4681 = vand.u32 %v4677, 65535
        %v4682 = vshrl.u32 %v4677, 16
        %v4683 = vmul.u32 %v4679, %v4681
        %v4684 = vmul.u32 %v4679, %v4682
        %v4685 = vmul.u32 %v4680, %v4681
        %v4686 = vmul.u32 %v4680, %v4682
        %v4687 = vshll.u32 %v4684, 16
        %v4688 = vshrl.u32 %v4684, 16
        %v4689 = vshll.u32 %v4685, 16
        %v4690 = vshrl.u32 %v4685, 16
        %vm4691 = vc.u32 %v4683, %v4687
        %v4692 = vsel %vm4691, 1, 0
        %v4693 = vadd.s32 %v4683, %v4687
        %v4694 = vadd.s32 %v4686, %v4692
        %vm4695 = vc.u32 %v4693, %v4689
        %v4696 = vsel %vm4695, 1, 0
        %v4697 = vadd.s32 %v4693, %v4689
        %v4698 = vadd.s32 %v4694, %v4696
        %v4699 = vadd.s32 %v4698, %v4688
        %v4700 = vadd.s32 %v4699, %v4690
        %v4701 = vand.u32 %v4678, 65535
        %v4702 = vshrl.u32 %v4678, 16
        %v4703 = vand.u32 %v4673, 65535
        %v4704 = vshrl.u32 %v4673, 16
        %v4705 = vmul.u32 %v4701, %v4703
        %v4706 = vmul.u32 %v4701, %v4704
        %v4707 = vmul.u32 %v4702, %v4703
        %v4708 = vmul.u32 %v4702, %v4704
        %v4709 = vshll.u32 %v4706, 16
        %v4710 = vshrl.u32 %v4706, 16
        %v4711 = vshll.u32 %v4707, 16
        %v4712 = vshrl.u32 %v4707, 16
        %vm4713 = vc.u32 %v4705, %v4709
        %v4714 = vsel %vm4713, 1, 0
        %v4715 = vadd.s32 %v4705, %v4709
        %v4716 = vadd.s32 %v4708, %v4714
        %vm4717 = vc.u32 %v4715, %v4711
        %v4718 = vsel %vm4717, 1, 0
        %v4719 = vadd.s32 %v4715, %v4711
        %v4720 = vadd.s32 %v4716, %v4718
        %v4721 = vadd.s32 %v4720, %v4710
        %v4722 = vadd.s32 %v4721, %v4712
        %v4723 = vmul.u32 %v4678, %v4669
        %v4724 = vadd.s32 %v4700, %v4719
        %vm4725 = vc.u32 %v4700, %v4719
        %v4726 = vadd.s32 %v4722, 1
        %v4727 = vsel %vm4725, %v4726, %v4722
        %v4728 = vadd.s32 %v4723, %v4727
        %v4729 = vadd.s32 %v4728, 536870912
        %v4730 = vshrl.u32 %v4729, 30
        %v4731 = vshll.u32 %v4730, 30
        %v4732 = vsub.s32 %v4728, %v4731
        %vm4733 = vcmp.lt.s32.totalorder %v4732, 0
        %v4734 = vsub.s32 0, %v4732
        %v4735 = vsel %vm4733, %v4734, %v4732
        %v4736 = vclz %v4735
        %v4737 = vsub.s32 %v4736, 2
        %vm4738 = vcmp.gt.s32.totalorder 0, %v4737
        %v4739 = vsel %vm4738, 0, %v4737
        %v4740 = vsub.s32 32, %v4739
        %v4741 = vshll.u32 %v4732, %v4739
        %v4742 = vshrl.u32 %v4724, %v4740
        %v4743 = vor.u32 %v4741, %v4742
        %v4744 = vsub.s32 4294967266, %v4739
        %v4745 = vadd.s32 %v4744, 127
        %v4746 = vshll.u32 %v4745, 23
        %v4747 = vor.u32 4788187, %v4746
        %v4748 = vand.u32 2147483647, %v4747
        %v4750 = vcvt.s32.f32 %v4743
        %v4751 = vmul.f32 %v4750, %v4748
        %v4752 = vxor.u32 %v4751, 2147483648
        %v4753 = vsel %vm4632, %v4752, %v4751
        %v4754 = vsub.s32 4, %v4730
        %v4755 = vsel %vm4632, %v4754, %v4730
        %v4756 = vsel %vm4631, %v286, %v4753
        %v4757 = vsel %vm4631, 0, %v4755
        %v4758 = vmul.f32 %v4756, %v4756
        %v4759 = vmul.f32 %v4758, -0.001358992
        %v4760 = vadd.f32 %v4759, 0.041655596
        %v4761 = vmul.f32 %v4758, %v4760
        %v4762 = vadd.f32 %v4761, -0.4999988
        %v4763 = vmul.f32 %v4758, %v4762
        %v4764 = vadd.f32 1.0, %v4763
        %v4765 = vmul.f32 %v4756, %v4756
        %v4766 = vmul.f32 %v4765, -0.00019511016
        %v4767 = vadd.f32 %v4766, 0.008332121
        %v4768 = vmul.f32 %v4765, %v4767
        %v4769 = vadd.f32 %v4768, -0.16666654
        %v4770 = vmul.f32 %v4765, %v4769
        %v4771 = vadd.f32 %v4770, 1.0
        %v4772 = vmul.f32 %v4771, %v4756
        %vm4773 = vweird.f32 %v286
        %v4774 = vadd.s32 %v4757, 3
        %v4775 = vand.u32 %v4774, 3
        %vm4776 = vcmp.lt.s32.totalorder %v4775, 2
        %vm4777 = vcmp.eq.s32.totalorder %v4775, 0
        %v4778 = vxor.u32 %v4772, 2147483648
        %v4779 = vsel %vm4777, %v4764, %v4778
        %vm4780 = vcmp.eq.s32.totalorder %v4775, 2
        %v4781 = vxor.u32 %v4764, 2147483648
        %v4782 = vsel %vm4780, %v4781, %v4772
        %v4783 = vsel %vm4776, %v4779, %v4782
        %v4784 = vsel %vm4773, nan, %v4783
        %v4785 = vand.u32 2147483647, %v287
        %vm4786 = vcmp.le.f32.partialorder %v4785, 0.7853982
        %vm4787 = vcmp.lt.s32.totalorder %v287, 0
        %v4788 = vand.u32 %v287, 2139095040
        %v4789 = vshrl.u32 %v4788, 23
        %v4790 = vsub.s32 %v4789, 127
        %v4791 = vand.u32 2147483647, %v287
        %v4792 = vand.u32 %v4791, 8388607
        %v4793 = vor.u32 %v4792, 8388608
        %v4794 = vsub.s32 0, %v4793
        %v4795 = vadd.s32 %v4790, 1
        %vm4796 = vcmp.gt.s32.totalorder %v4795, 0
        %v4797 = vsel %vm4796, %v4795, 0
        %v4798 = vshrl.u32 %v4797, 5
        %v4799 = vand.u32 %v4797, 31
        %v4800 = vsub.s32 32, %v4799
        %v4801 = vshrl.u32 683565275, %v4800
        %v4802 = vshll.u32 683565275, %v4799
        %v4803 = vshrl.u32 2475754826, %v4800
        %v4804 = vor.u32 %v4802, %v4803
        %v4805 = vshll.u32 2475754826, %v4799
        %v4806 = vshrl.u32 2131351028, %v4800
        %v4807 = vor.u32 %v4805, %v4806
        %v4808 = vshll.u32 2131351028, %v4799
        %v4809 = vshrl.u32 2102212464, %v4800
        %v4810 = vor.u32 %v4808, %v4809
        %v4811 = vshll.u32 2102212464, %v4799
        %v4812 = vshrl.u32 920167782, %v4800
        %v4813 = vor.u32 %v4811, %v4812
        %v4814 = vshll.u32 920167782, %v4799
        %v4815 = vshrl.u32 1326507024, %v4800
        %v4816 = vor.u32 %v4814, %v4815
        %vm4817 = vcmp.lt.s32.totalorder %v4798, 1
        %vm4818 = vcmp.lt.s32.totalorder %v4798, 2
        %vm4819 = vcmp.lt.s32.totalorder %v4798, 3
        %vm4820 = vcmp.lt.s32.totalorder %v4798, 4
        %v4821 = vsel %vm4817, %v4801, %v4804
        %v4822 = vsel %vm4820, %v4810, 2102212464
        %v4823 = vsel %vm4819, %v4807, %v4822
        %v4824 = vsel %vm4818, %v4821, %v4823
        %v4825 = vsel %vm4817, %v4804, %v4807
        %v4826 = vsel %vm4820, %v4813, 920167782
        %v4827 = vsel %vm4819, %v4810, %v4826
        %v4828 = vsel %vm4818, %v4825, %v4827
        %v4829 = vsel %vm4817, %v4807, %v4810
        %v4830 = vsel %vm4820, %v4816, 1326507024
        %v4831 = vsel %vm4819, %v4813, %v4830
        %v4832 = vsel %vm4818, %v4829, %v4831
        %v4833 = vshll.u32 %v4793, 8
        %v4834 = vand.u32 %v4833, 65535
        %v4835 = vshrl.u32 %v4833, 16
        %v4836 = vand.u32 %v4832, 65535
        %v4837 = vshrl.u32 %v4832, 16
        %v4838 = vmul.u32 %v4834, %v4836
        %v4839 = vmul.u32 %v4834, %v4837
        %v4840 = vmul.u32 %v4835, %v4836
        %v4841 = vmul.u32 %v4835, %v4837
        %v4842 = vshll.u32 %v4839, 16
        %v4843 = vshrl.u32 %v4839, 16
        %v4844 = vshll.u32 %v4840, 16
        %v4845 = vshrl.u32 %v4840, 16
        %vm4846 = vc.u32 %v4838, %v4842
        %v4847 = vsel %vm4846, 1, 0
        %v4848 = vadd.s32 %v4838, %v4842
        %v4849 = vadd.s32 %v4841, %v4847
        %vm4850 = vc.u32 %v4848, %v4844
        %v4851 = vsel %vm4850, 1, 0
        %v4852 = vadd.s32 %v4848, %v4844
        %v4853 = vadd.s32 %v4849, %v4851
        %v4854 = vadd.s32 %v4853, %v4843
        %v4855 = vadd.s32 %v4854, %v4845
        %v4856 = vand.u32 %v4833, 65535
        %v4857 = vshrl.u32 %v4833, 16
        %v4858 = vand.u32 %v4828, 65535
        %v4859 = vshrl.u32 %v4828, 16
        %v4860 = vmul.u32 %v4856, %v4858
        %v4861 = vmul.u32 %v4856, %v4859
        %v4862 = vmul.u32 %v4857, %v4858
        %v4863 = vmul.u32 %v4857, %v4859
        %v4864 = vshll.u32 %v4861, 16
        %v4865 = vshrl.u32 %v4861, 16
        %v4866 = vshll.u32 %v4862, 16
        %v4867 = vshrl.u32 %v4862, 16
        %vm4868 = vc.u32 %v4860, %v4864
        %v4869 = vsel %vm4868, 1, 0
        %v4870 = vadd.s32 %v4860, %v4864
        %v4871 = vadd.s32 %v4863, %v4869
        %vm4872 = vc.u32 %v4870, %v4866
        %v4873 = vsel %vm4872, 1, 0
        %v4874 = vadd.s32 %v4870, %v4866
        %v4875 = vadd.s32 %v4871, %v4873
        %v4876 = vadd.s32 %v4875, %v4865
        %v4877 = vadd.s32 %v4876, %v4867
        %v4878 = vmul.u32 %v4833, %v4824
        %v4879 = vadd.s32 %v4855, %v4874
        %vm4880 = vc.u32 %v4855, %v4874
        %v4881 = vadd.s32 %v4877, 1
        %v4882 = vsel %vm4880, %v4881, %v4877
        %v4883 = vadd.s32 %v4878, %v4882
        %v4884 = vadd.s32 %v4883, 536870912
        %v4885 = vshrl.u32 %v4884, 30
        %v4886 = vshll.u32 %v4885, 30
        %v4887 = vsub.s32 %v4883, %v4886
        %vm4888 = vcmp.lt.s32.totalorder %v4887, 0
        %v4889 = vsub.s32 0, %v4887
        %v4890 = vsel %vm4888, %v4889, %v4887
        %v4891 = vclz %v4890
        %v4892 = vsub.s32 %v4891, 2
        %vm4893 = vcmp.gt.s32.totalorder 0, %v4892
        %v4894 = vsel %vm4893, 0, %v4892
        %v4895 = vsub.s32 32, %v4894
        %v4896 = vshll.u32 %v4887, %v4894
        %v4897 = vshrl.u32 %v4879, %v4895
        %v4898 = vor.u32 %v4896, %v4897
        %v4899 = vsub.s32 4294967266, %v4894
        %v4900 = vadd.s32 %v4899, 127
        %v4901 = vshll.u32 %v4900, 23
        %v4902 = vor.u32 4788187, %v4901
        %v4903 = vand.u32 2147483647, %v4902
        %v4905 = vcvt.s32.f32 %v4898
        %v4906 = vmul.f32 %v4905, %v4903
        %v4907 = vxor.u32 %v4906, 2147483648
        %v4908 = vsel %vm4787, %v4907, %v4906
        %v4909 = vsub.s32 4, %v4885
        %v4910 = vsel %vm4787, %v4909, %v4885
        %v4911 = vsel %vm4786, %v287, %v4908
        %v4912 = vsel %vm4786, 0, %v4910
        %v4913 = vmul.f32 %v4911, %v4911
        %v4914 = vmul.f32 %v4913, -0.001358992
        %v4915 = vadd.f32 %v4914, 0.041655596
        %v4916 = vmul.f32 %v4913, %v4915
        %v4917 = vadd.f32 %v4916, -0.4999988
        %v4918 = vmul.f32 %v4913, %v4917
        %v4919 = vadd.f32 1.0, %v4918
        %v4920 = vmul.f32 %v4911, %v4911
        %v4921 = vmul.f32 %v4920, -0.00019511016
        %v4922 = vadd.f32 %v4921, 0.008332121
        %v4923 = vmul.f32 %v4920, %v4922
        %v4924 = vadd.f32 %v4923, -0.16666654
        %v4925 = vmul.f32 %v4920, %v4924
        %v4926 = vadd.f32 %v4925, 1.0
        %v4927 = vmul.f32 %v4926, %v4911
        %vm4928 = vweird.f32 %v287
        %v4929 = vadd.s32 %v4912, 3
        %v4930 = vand.u32 %v4929, 3
        %vm4931 = vcmp.lt.s32.totalorder %v4930, 2
        %vm4932 = vcmp.eq.s32.totalorder %v4930, 0
        %v4933 = vxor.u32 %v4927, 2147483648
        %v4934 = vsel %vm4932, %v4919, %v4933
        %vm4935 = vcmp.eq.s32.totalorder %v4930, 2
        %v4936 = vxor.u32 %v4919, 2147483648
        %v4937 = vsel %vm4935, %v4936, %v4927
        %v4938 = vsel %vm4931, %v4934, %v4937
        %v4939 = vsel %vm4928, nan, %v4938
        %v4940 = vand.u32 2147483647, %v288
        %vm4941 = vcmp.le.f32.partialorder %v4940, 0.7853982
        %vm4942 = vcmp.lt.s32.totalorder %v288, 0
        %v4943 = vand.u32 %v288, 2139095040
        %v4944 = vshrl.u32 %v4943, 23
        %v4945 = vsub.s32 %v4944, 127
        %v4946 = vand.u32 2147483647, %v288
        %v4947 = vand.u32 %v4946, 8388607
        %v4948 = vor.u32 %v4947, 8388608
        %v4949 = vsub.s32 0, %v4948
        %v4950 = vadd.s32 %v4945, 1
        %vm4951 = vcmp.gt.s32.totalorder %v4950, 0
        %v4952 = vsel %vm4951, %v4950, 0
        %v4953 = vshrl.u32 %v4952, 5
        %v4954 = vand.u32 %v4952, 31
        %v4955 = vsub.s32 32, %v4954
        %v4956 = vshrl.u32 683565275, %v4955
        %v4957 = vshll.u32 683565275, %v4954
        %v4958 = vshrl.u32 2475754826, %v4955
        %v4959 = vor.u32 %v4957, %v4958
        %v4960 = vshll.u32 2475754826, %v4954
        %v4961 = vshrl.u32 2131351028, %v4955
        %v4962 = vor.u32 %v4960, %v4961
        %v4963 = vshll.u32 2131351028, %v4954
        %v4964 = vshrl.u32 2102212464, %v4955
        %v4965 = vor.u32 %v4963, %v4964
        %v4966 = vshll.u32 2102212464, %v4954
        %v4967 = vshrl.u32 920167782, %v4955
        %v4968 = vor.u32 %v4966, %v4967
        %v4969 = vshll.u32 920167782, %v4954
        %v4970 = vshrl.u32 1326507024, %v4955
        %v4971 = vor.u32 %v4969, %v4970
        %vm4972 = vcmp.lt.s32.totalorder %v4953, 1
        %vm4973 = vcmp.lt.s32.totalorder %v4953, 2
        %vm4974 = vcmp.lt.s32.totalorder %v4953, 3
        %vm4975 = vcmp.lt.s32.totalorder %v4953, 4
        %v4976 = vsel %vm4972, %v4956, %v4959
        %v4977 = vsel %vm4975, %v4965, 2102212464
        %v4978 = vsel %vm4974, %v4962, %v4977
        %v4979 = vsel %vm4973, %v4976, %v4978
        %v4980 = vsel %vm4972, %v4959, %v4962
        %v4981 = vsel %vm4975, %v4968, 920167782
        %v4982 = vsel %vm4974, %v4965, %v4981
        %v4983 = vsel %vm4973, %v4980, %v4982
        %v4984 = vsel %vm4972, %v4962, %v4965
        %v4985 = vsel %vm4975, %v4971, 1326507024
        %v4986 = vsel %vm4974, %v4968, %v4985
        %v4987 = vsel %vm4973, %v4984, %v4986
        %v4988 = vshll.u32 %v4948, 8
        %v4989 = vand.u32 %v4988, 65535
        %v4990 = vshrl.u32 %v4988, 16
        %v4991 = vand.u32 %v4987, 65535
        %v4992 = vshrl.u32 %v4987, 16
        %v4993 = vmul.u32 %v4989, %v4991
        %v4994 = vmul.u32 %v4989, %v4992
        %v4995 = vmul.u32 %v4990, %v4991
        %v4996 = vmul.u32 %v4990, %v4992
        %v4997 = vshll.u32 %v4994, 16
        %v4998 = vshrl.u32 %v4994, 16
        %v4999 = vshll.u32 %v4995, 16
        %v5000 = vshrl.u32 %v4995, 16
        %vm5001 = vc.u32 %v4993, %v4997
        %v5002 = vsel %vm5001, 1, 0
        %v5003 = vadd.s32 %v4993, %v4997
        %v5004 = vadd.s32 %v4996, %v5002
        %vm5005 = vc.u32 %v5003, %v4999
        %v5006 = vsel %vm5005, 1, 0
        %v5007 = vadd.s32 %v5003, %v4999
        %v5008 = vadd.s32 %v5004, %v5006
        %v5009 = vadd.s32 %v5008, %v4998
        %v5010 = vadd.s32 %v5009, %v5000
        %v5011 = vand.u32 %v4988, 65535
        %v5012 = vshrl.u32 %v4988, 16
        %v5013 = vand.u32 %v4983, 65535
        %v5014 = vshrl.u32 %v4983, 16
        %v5015 = vmul.u32 %v5011, %v5013
        %v5016 = vmul.u32 %v5011, %v5014
        %v5017 = vmul.u32 %v5012, %v5013
        %v5018 = vmul.u32 %v5012, %v5014
        %v5019 = vshll.u32 %v5016, 16
        %v5020 = vshrl.u32 %v5016, 16
        %v5021 = vshll.u32 %v5017, 16
        %v5022 = vshrl.u32 %v5017, 16
        %vm5023 = vc.u32 %v5015, %v5019
        %v5024 = vsel %vm5023, 1, 0
        %v5025 = vadd.s32 %v5015, %v5019
        %v5026 = vadd.s32 %v5018, %v5024
        %vm5027 = vc.u32 %v5025, %v5021
        %v5028 = vsel %vm5027, 1, 0
        %v5029 = vadd.s32 %v5025, %v5021
        %v5030 = vadd.s32 %v5026, %v5028
        %v5031 = vadd.s32 %v5030, %v5020
        %v5032 = vadd.s32 %v5031, %v5022
        %v5033 = vmul.u32 %v4988, %v4979
        %v5034 = vadd.s32 %v5010, %v5029
        %vm5035 = vc.u32 %v5010, %v5029
        %v5036 = vadd.s32 %v5032, 1
        %v5037 = vsel %vm5035, %v5036, %v5032
        %v5038 = vadd.s32 %v5033, %v5037
        %v5039 = vadd.s32 %v5038, 536870912
        %v5040 = vshrl.u32 %v5039, 30
        %v5041 = vshll.u32 %v5040, 30
        %v5042 = vsub.s32 %v5038, %v5041
        %vm5043 = vcmp.lt.s32.totalorder %v5042, 0
        %v5044 = vsub.s32 0, %v5042
        %v5045 = vsel %vm5043, %v5044, %v5042
        %v5046 = vclz %v5045
        %v5047 = vsub.s32 %v5046, 2
        %vm5048 = vcmp.gt.s32.totalorder 0, %v5047
        %v5049 = vsel %vm5048, 0, %v5047
        %v5050 = vsub.s32 32, %v5049
        %v5051 = vshll.u32 %v5042, %v5049
        %v5052 = vshrl.u32 %v5034, %v5050
        %v5053 = vor.u32 %v5051, %v5052
        %v5054 = vsub.s32 4294967266, %v5049
        %v5055 = vadd.s32 %v5054, 127
        %v5056 = vshll.u32 %v5055, 23
        %v5057 = vor.u32 4788187, %v5056
        %v5058 = vand.u32 2147483647, %v5057
        %v5060 = vcvt.s32.f32 %v5053
        %v5061 = vmul.f32 %v5060, %v5058
        %v5062 = vxor.u32 %v5061, 2147483648
        %v5063 = vsel %vm4942, %v5062, %v5061
        %v5064 = vsub.s32 4, %v5040
        %v5065 = vsel %vm4942, %v5064, %v5040
        %v5066 = vsel %vm4941, %v288, %v5063
        %v5067 = vsel %vm4941, 0, %v5065
        %v5068 = vmul.f32 %v5066, %v5066
        %v5069 = vmul.f32 %v5068, -0.001358992
        %v5070 = vadd.f32 %v5069, 0.041655596
        %v5071 = vmul.f32 %v5068, %v5070
        %v5072 = vadd.f32 %v5071, -0.4999988
        %v5073 = vmul.f32 %v5068, %v5072
        %v5074 = vadd.f32 1.0, %v5073
        %v5075 = vmul.f32 %v5066, %v5066
        %v5076 = vmul.f32 %v5075, -0.00019511016
        %v5077 = vadd.f32 %v5076, 0.008332121
        %v5078 = vmul.f32 %v5075, %v5077
        %v5079 = vadd.f32 %v5078, -0.16666654
        %v5080 = vmul.f32 %v5075, %v5079
        %v5081 = vadd.f32 %v5080, 1.0
        %v5082 = vmul.f32 %v5081, %v5066
        %vm5083 = vweird.f32 %v288
        %v5084 = vadd.s32 %v5067, 3
        %v5085 = vand.u32 %v5084, 3
        %vm5086 = vcmp.lt.s32.totalorder %v5085, 2
        %vm5087 = vcmp.eq.s32.totalorder %v5085, 0
        %v5088 = vxor.u32 %v5082, 2147483648
        %v5089 = vsel %vm5087, %v5074, %v5088
        %vm5090 = vcmp.eq.s32.totalorder %v5085, 2
        %v5091 = vxor.u32 %v5074, 2147483648
        %v5092 = vsel %vm5090, %v5091, %v5082
        %v5093 = vsel %vm5086, %v5089, %v5092
        %v5094 = vsel %vm5083, nan, %v5093
        %v5095 = vand.u32 2147483647, %v289
        %vm5096 = vcmp.le.f32.partialorder %v5095, 0.7853982
        %vm5097 = vcmp.lt.s32.totalorder %v289, 0
        %v5098 = vand.u32 %v289, 2139095040
        %v5099 = vshrl.u32 %v5098, 23
        %v5100 = vsub.s32 %v5099, 127
        %v5101 = vand.u32 2147483647, %v289
        %v5102 = vand.u32 %v5101, 8388607
        %v5103 = vor.u32 %v5102, 8388608
        %v5104 = vsub.s32 0, %v5103
        %v5105 = vadd.s32 %v5100, 1
        %vm5106 = vcmp.gt.s32.totalorder %v5105, 0
        %v5107 = vsel %vm5106, %v5105, 0
        %v5108 = vshrl.u32 %v5107, 5
        %v5109 = vand.u32 %v5107, 31
        %v5110 = vsub.s32 32, %v5109
        %v5111 = vshrl.u32 683565275, %v5110
        %v5112 = vshll.u32 683565275, %v5109
        %v5113 = vshrl.u32 2475754826, %v5110
        %v5114 = vor.u32 %v5112, %v5113
        %v5115 = vshll.u32 2475754826, %v5109
        %v5116 = vshrl.u32 2131351028, %v5110
        %v5117 = vor.u32 %v5115, %v5116
        %v5118 = vshll.u32 2131351028, %v5109
        %v5119 = vshrl.u32 2102212464, %v5110
        %v5120 = vor.u32 %v5118, %v5119
        %v5121 = vshll.u32 2102212464, %v5109
        %v5122 = vshrl.u32 920167782, %v5110
        %v5123 = vor.u32 %v5121, %v5122
        %v5124 = vshll.u32 920167782, %v5109
        %v5125 = vshrl.u32 1326507024, %v5110
        %v5126 = vor.u32 %v5124, %v5125
        %vm5127 = vcmp.lt.s32.totalorder %v5108, 1
        %vm5128 = vcmp.lt.s32.totalorder %v5108, 2
        %vm5129 = vcmp.lt.s32.totalorder %v5108, 3
        %vm5130 = vcmp.lt.s32.totalorder %v5108, 4
        %v5131 = vsel %vm5127, %v5111, %v5114
        %v5132 = vsel %vm5130, %v5120, 2102212464
        %v5133 = vsel %vm5129, %v5117, %v5132
        %v5134 = vsel %vm5128, %v5131, %v5133
        %v5135 = vsel %vm5127, %v5114, %v5117
        %v5136 = vsel %vm5130, %v5123, 920167782
        %v5137 = vsel %vm5129, %v5120, %v5136
        %v5138 = vsel %vm5128, %v5135, %v5137
        %v5139 = vsel %vm5127, %v5117, %v5120
        %v5140 = vsel %vm5130, %v5126, 1326507024
        %v5141 = vsel %vm5129, %v5123, %v5140
        %v5142 = vsel %vm5128, %v5139, %v5141
        %v5143 = vshll.u32 %v5103, 8
        %v5144 = vand.u32 %v5143, 65535
        %v5145 = vshrl.u32 %v5143, 16
        %v5146 = vand.u32 %v5142, 65535
        %v5147 = vshrl.u32 %v5142, 16
        %v5148 = vmul.u32 %v5144, %v5146
        %v5149 = vmul.u32 %v5144, %v5147
        %v5150 = vmul.u32 %v5145, %v5146
        %v5151 = vmul.u32 %v5145, %v5147
        %v5152 = vshll.u32 %v5149, 16
        %v5153 = vshrl.u32 %v5149, 16
        %v5154 = vshll.u32 %v5150, 16
        %v5155 = vshrl.u32 %v5150, 16
        %vm5156 = vc.u32 %v5148, %v5152
        %v5157 = vsel %vm5156, 1, 0
        %v5158 = vadd.s32 %v5148, %v5152
        %v5159 = vadd.s32 %v5151, %v5157
        %vm5160 = vc.u32 %v5158, %v5154
        %v5161 = vsel %vm5160, 1, 0
        %v5162 = vadd.s32 %v5158, %v5154
        %v5163 = vadd.s32 %v5159, %v5161
        %v5164 = vadd.s32 %v5163, %v5153
        %v5165 = vadd.s32 %v5164, %v5155
        %v5166 = vand.u32 %v5143, 65535
        %v5167 = vshrl.u32 %v5143, 16
        %v5168 = vand.u32 %v5138, 65535
        %v5169 = vshrl.u32 %v5138, 16
        %v5170 = vmul.u32 %v5166, %v5168
        %v5171 = vmul.u32 %v5166, %v5169
        %v5172 = vmul.u32 %v5167, %v5168
        %v5173 = vmul.u32 %v5167, %v5169
        %v5174 = vshll.u32 %v5171, 16
        %v5175 = vshrl.u32 %v5171, 16
        %v5176 = vshll.u32 %v5172, 16
        %v5177 = vshrl.u32 %v5172, 16
        %vm5178 = vc.u32 %v5170, %v5174
        %v5179 = vsel %vm5178, 1, 0
        %v5180 = vadd.s32 %v5170, %v5174
        %v5181 = vadd.s32 %v5173, %v5179
        %vm5182 = vc.u32 %v5180, %v5176
        %v5183 = vsel %vm5182, 1, 0
        %v5184 = vadd.s32 %v5180, %v5176
        %v5185 = vadd.s32 %v5181, %v5183
        %v5186 = vadd.s32 %v5185, %v5175
        %v5187 = vadd.s32 %v5186, %v5177
        %v5188 = vmul.u32 %v5143, %v5134
        %v5189 = vadd.s32 %v5165, %v5184
        %vm5190 = vc.u32 %v5165, %v5184
        %v5191 = vadd.s32 %v5187, 1
        %v5192 = vsel %vm5190, %v5191, %v5187
        %v5193 = vadd.s32 %v5188, %v5192
        %v5194 = vadd.s32 %v5193, 536870912
        %v5195 = vshrl.u32 %v5194, 30
        %v5196 = vshll.u32 %v5195, 30
        %v5197 = vsub.s32 %v5193, %v5196
        %vm5198 = vcmp.lt.s32.totalorder %v5197, 0
        %v5199 = vsub.s32 0, %v5197
        %v5200 = vsel %vm5198, %v5199, %v5197
        %v5201 = vclz %v5200
        %v5202 = vsub.s32 %v5201, 2
        %vm5203 = vcmp.gt.s32.totalorder 0, %v5202
        %v5204 = vsel %vm5203, 0, %v5202
        %v5205 = vsub.s32 32, %v5204
        %v5206 = vshll.u32 %v5197, %v5204
        %v5207 = vshrl.u32 %v5189, %v5205
        %v5208 = vor.u32 %v5206, %v5207
        %v5209 = vsub.s32 4294967266, %v5204
        %v5210 = vadd.s32 %v5209, 127
        %v5211 = vshll.u32 %v5210, 23
        %v5212 = vor.u32 4788187, %v5211
        %v5213 = vand.u32 2147483647, %v5212
        %v5215 = vcvt.s32.f32 %v5208
        %v5216 = vmul.f32 %v5215, %v5213
        %v5217 = vxor.u32 %v5216, 2147483648
        %v5218 = vsel %vm5097, %v5217, %v5216
        %v5219 = vsub.s32 4, %v5195
        %v5220 = vsel %vm5097, %v5219, %v5195
        %v5221 = vsel %vm5096, %v289, %v5218
        %v5222 = vsel %vm5096, 0, %v5220
        %v5223 = vmul.f32 %v5221, %v5221
        %v5224 = vmul.f32 %v5223, -0.001358992
        %v5225 = vadd.f32 %v5224, 0.041655596
        %v5226 = vmul.f32 %v5223, %v5225
        %v5227 = vadd.f32 %v5226, -0.4999988
        %v5228 = vmul.f32 %v5223, %v5227
        %v5229 = vadd.f32 1.0, %v5228
        %v5230 = vmul.f32 %v5221, %v5221
        %v5231 = vmul.f32 %v5230, -0.00019511016
        %v5232 = vadd.f32 %v5231, 0.008332121
        %v5233 = vmul.f32 %v5230, %v5232
        %v5234 = vadd.f32 %v5233, -0.16666654
        %v5235 = vmul.f32 %v5230, %v5234
        %v5236 = vadd.f32 %v5235, 1.0
        %v5237 = vmul.f32 %v5236, %v5221
        %vm5238 = vweird.f32 %v289
        %v5239 = vadd.s32 %v5222, 3
        %v5240 = vand.u32 %v5239, 3
        %vm5241 = vcmp.lt.s32.totalorder %v5240, 2
        %vm5242 = vcmp.eq.s32.totalorder %v5240, 0
        %v5243 = vxor.u32 %v5237, 2147483648
        %v5244 = vsel %vm5242, %v5229, %v5243
        %vm5245 = vcmp.eq.s32.totalorder %v5240, 2
        %v5246 = vxor.u32 %v5229, 2147483648
        %v5247 = vsel %vm5245, %v5246, %v5237
        %v5248 = vsel %vm5241, %v5244, %v5247
        %v5249 = vsel %vm5238, nan, %v5248
        %5250 = vst [vmem:[%s133] sm:$0xff] %v444
        %5251 = vst [vmem:[%s133 + $0x8] sm:$0xff] %v599
        %5252 = vst [vmem:[%s133 + $0x10] sm:$0xff] %v754
        %5253 = vst [vmem:[%s133 + $0x18] sm:$0xff] %v909
        %5254 = vst [vmem:[%s133 + $0x20] sm:$0xff] %v1064
        %5255 = vst [vmem:[%s133 + $0x28] sm:$0xff] %v1219
        %5256 = vst [vmem:[%s133 + $0x30] sm:$0xff] %v1374
        %5257 = vst [vmem:[%s133 + $0x38] sm:$0xff] %v1529
        %5258 = vst [vmem:[%s133 + $0x40] sm:$0xff] %v1684
        %5259 = vst [vmem:[%s133 + $0x48] sm:$0xff] %v1839
        %5260 = vst [vmem:[%s133 + $0x50] sm:$0xff] %v1994
        %5261 = vst [vmem:[%s133 + $0x58] sm:$0xff] %v2149
        %5262 = vst [vmem:[%s133 + $0x60] sm:$0xff] %v2304
        %5263 = vst [vmem:[%s133 + $0x68] sm:$0xff] %v2459
        %5264 = vst [vmem:[%s133 + $0x70] sm:$0xff] %v2614
        %5265 = vst [vmem:[%s133 + $0x78] sm:$0xff] %v2769
        %5266 = vst [vmem:[%s133 + $0x80] sm:$0xf] %v2924
        %5267 = vst [vmem:[%s133 + $0x88] sm:$0xf] %v3079
        %5268 = vst [vmem:[%s133 + $0x90] sm:$0xf] %v3234
        %5269 = vst [vmem:[%s133 + $0x98] sm:$0xf] %v3389
        %5270 = vst [vmem:[%s133 + $0xa0] sm:$0xf] %v3544
        %5271 = vst [vmem:[%s133 + $0xa8] sm:$0xf] %v3699
        %5272 = vst [vmem:[%s133 + $0xb0] sm:$0xf] %v3854
        %5273 = vst [vmem:[%s133 + $0xb8] sm:$0xf] %v4009
        %5274 = vst [vmem:[%s133 + $0xc0] sm:$0xf] %v4164
        %5275 = vst [vmem:[%s133 + $0xc8] sm:$0xf] %v4319
        %5276 = vst [vmem:[%s133 + $0xd0] sm:$0xf] %v4474
        %5277 = vst [vmem:[%s133 + $0xd8] sm:$0xf] %v4629
        %5278 = vst [vmem:[%s133 + $0xe0] sm:$0xf] %v4784
        %5279 = vst [vmem:[%s133 + $0xe8] sm:$0xf] %v4939
        %5280 = vst [vmem:[%s133 + $0xf0] sm:$0xf] %v5094
        %5281 = vst [vmem:[%s133 + $0xf8] sm:$0xf] %v5249
        %s5282 = sand.u32 %s52, 1
        %s5283 = scalar_lea.sflag [#allocation4], %s5282
        %s5284 = sand.u32 %s52, 1
        %s5285 = smul.addr %s5284, 256
        %s5286 = scalar_lea.vmem [#allocation5], %s5285
        // Predicated region
        $region29: #{tpu_custom_call.1} parent=23 // pred_check
          %p5287 = pneg %p62
        $region30: #{tpu_custom_call.1} parent=23 // pred_check_branch
          %5289 = sbr.rel (%p5287) target = $region32
        $region31: #{tpu_custom_call.1} parent=23 // pred_region
          %s5290 = smul.u32 16, %s18
          %5292 = vsyncadd %s5283, 0
          %s5293 = smul.addr %s5290, 8
          %s5294 = scalar_lea.hbm %s1, %s5293
          %s5295 = sshll.u32 %s5286, 4
          %s5296 = int_to_ptr.vmem [resolvable:$true] %s5295
          %s5297 = sshll.u32 %s5294, 4
          %s5298 = int_to_ptr.hbm [resolvable:$true] %s5297
          %5303 = dma.vmem_to_hbm [thread:$0]  %s5296, 4096, %s5298, %s5283, 2048, 4096, 128
        $region32: #{tpu_custom_call.1} parent=23 // pred_fallthru
          _
      $region24: #{tpu_custom_call.1} parent=5 // pred_fallthru
        _
      %p5304 = scmp.le.s32.totalorder 2, %s13
      // Predicated region
      $region33: #{tpu_custom_call.1} parent=5 // pred_check
        %p5305 = pneg %p5304
      $region34: #{tpu_custom_call.1} parent=5 // pred_check_branch
        %5307 = sbr.rel (%p5305) target = $region36
      $region35: #{tpu_custom_call.1} parent=5 // pred_region
        %s5308 = ssub.s32 %s13, 2
        // Predicated region
        $region37: #{tpu_custom_call.1} parent=35 // pred_check
          %p5309 = pneg %p68
        $region38: #{tpu_custom_call.1} parent=35 // pred_check_branch
          %5311 = sbr.rel (%p5309) target = $region40
        $region39: #{tpu_custom_call.1} parent=35 // pred_region
          %s5312 = sand.u32 %s53, 1
          %s5313 = scalar_lea.sflag [#allocation4], %s5312
          %s5314 = sand.u32 %s53, 1
          %s5315 = smul.addr %s5314, 256
          %s5316 = scalar_lea.vmem [#allocation5], %s5315
          %5318 = dma.done %s5313, 4096
        $region40: #{tpu_custom_call.1} parent=35 // pred_fallthru
          _
      $region36: #{tpu_custom_call.1} parent=5 // pred_fallthru
        _
    $region6: #{tpu_custom_call.1} parent=1 // loop_footer
      %s17 = sadd.s32 1, %s13
    $region7: #{tpu_custom_call.1} parent=1 // loop_footer_branch
      %12 = sbr.rel target = $region3
    $region8: #{tpu_custom_call.1} parent=1 // loop_exit
      _
    %5319 = vsyncpa [#allocation3], 1
    %s5320 = scalar_lea.sflag [#allocation3], 1
    %5321 = vsyncpa %s5320, 1
    %5322 = vsyncpa [#allocation4], 1
    %s5323 = scalar_lea.sflag [#allocation4], 1
    %5324 = vsyncpa %s5323, 1

</llo_original>
